<compile_context>
chip_gen: v7x
topology: tpu7x:2x2x1
jax: 0.10.0
libtpu: 0.0.40
codegen_flags: <defaults>
</compile_context>

<pallas_src>
import jax
import jax.numpy as jnp
from jax.experimental import pallas as pl
from jax.experimental.pallas import tpu as pltpu

H1, H2, H3 = 1024, 512, 256
OUT_PAD = 128     # final Linear has out_features=1; pad to a full lane width
TK_MAX = 2048     # layer-1 K tile: bounds resident w1 VMEM for any feature dim


def _leaky_relu(x, slope=0.2):
    return jnp.where(x > 0, x, slope * x)


def discriminator_kernel(x_ref, w1_ref, b1_ref, w2_ref, b2_ref,
                         w3_ref, b3_ref, w4_ref, b4_ref, o_ref, acc_ref):
    k = pl.program_id(1)

    @pl.when(k == 0)
    def _():
        acc_ref[...] = jnp.zeros_like(acc_ref)

    # Layer 1 (K-tiled): cast the f32 x tile to bf16 in-kernel (VPU filler,
    # hidden under the MXU work) and accumulate in the f32 VMEM scratch.
    acc_ref[...] += jnp.dot(x_ref[...].astype(jnp.bfloat16), w1_ref[...],
                            preferred_element_type=jnp.float32)

    @pl.when(k == pl.num_programs(1) - 1)
    def _():
        h = _leaky_relu(acc_ref[...] + b1_ref[...])
        # Dropout(0.3) -> identity (eval mode)

        h = jnp.dot(h.astype(jnp.bfloat16), w2_ref[...],
                    preferred_element_type=jnp.float32)
        h = _leaky_relu(h + b2_ref[...])

        h = jnp.dot(h.astype(jnp.bfloat16), w3_ref[...],
                    preferred_element_type=jnp.float32)
        h = _leaky_relu(h + b3_ref[...])

        # Layer 4 padded to 128 output lanes -> lane-dense store; the wrapper
        # slices column 0.
        h = jnp.dot(h.astype(jnp.bfloat16), w4_ref[...],
                    preferred_element_type=jnp.float32)
        o_ref[...] = jax.nn.sigmoid(h + b4_ref[...]).astype(o_ref.dtype)


def discriminator_forward(x_nchw, params):
    """x_nchw: (B, C, H, W) float32. Returns (B, 1) float32."""
    b = x_nchw.shape[0]
    x2d = x_nchw.reshape(b, -1)            # nn.Flatten; stays f32, cast in-kernel
    d = x2d.shape[1]
    w1, b1, w2, b2, w3, b3, w4p, b4p = params

    # ---- batch tile: keep M >= 128 on the MXU at realistic batch sizes and
    # guarantee >= 2 blocks when b > 128 so both v7x TensorCores get work.
    if b > 256:
        tb = 256
    elif b > 128:
        tb = 128
    else:
        tb = max(16, ((b + 15) // 16) * 16)    # bf16 packs 16 rows per vreg
    n_tiles = pl.cdiv(b, tb)
    b_pad = n_tiles * tb

    # ---- layer-1 K tiling (single K step when D <= TK_MAX).
    d_lane = ((d + 127) // 128) * 128
    tk = min(d_lane, TK_MAX)
    d_pad = pl.cdiv(d_lane, tk) * tk
    n_k = d_pad // tk

    if b_pad != b or d_pad != d:
        x2d = jnp.pad(x2d, ((0, b_pad - b), (0, d_pad - d)))
    if d_pad != d:
        w1 = jnp.pad(w1, ((0, d_pad - d), (0, 0)))

    def _resident(shape):
        # Constant block index -> stays resident in VMEM; single buffer
        # (no prefetch buffer needed for a block that never changes).
        return pl.BlockSpec(shape, lambda i, k: (0, 0),
                            pipeline_mode=pl.Buffered(1))

    # w1: resident (single buffer) when there is only one K step; otherwise
    # streamed over K with the default double buffer so the DMA overlaps MXU.
    w1_spec = pl.BlockSpec(
        (tk, H1), lambda i, k: (k, 0),
        pipeline_mode=pl.Buffered(1) if n_k == 1 else pl.Buffered(2))

    in_specs = [
        pl.BlockSpec((tb, tk), lambda i, k: (i, k)),   # x: streamed (batch, K)
        w1_spec,
        _resident((1, H1)),
        _resident((H1, H2)), _resident((1, H2)),
        _resident((H2, H3)), _resident((1, H3)),
        _resident((H3, OUT_PAD)), _resident((1, OUT_PAD)),
    ]
    out_spec = pl.BlockSpec((tb, OUT_PAD), lambda i, k: (i, 0))

    # ---- generation-aware VMEM budget (128 MiB v5e/v6e, 64 MiB/TC v7x).
    try:
        vmem_cap = int(pltpu.get_tpu_info().vmem_capacity_bytes)
    except Exception:
        vmem_cap = 64 * 1024 * 1024
    resident_bytes = sum(int(p.size) * p.dtype.itemsize
                         for p in (b1, w2, b2, w3, b3, w4p, b4p))
    w1_bytes = tk * H1 * 2 * (1 if n_k == 1 else 2)
    stream_bytes = (2 * tb * tk * 4          # f32 x tile, double-buffered
                    + 2 * tb * OUT_PAD * 2   # bf16 output tile
                    + tb * H1 * 4)           # f32 accumulator scratch
    vmem_limit = int(min(vmem_cap - 8 * 1024 * 1024,
                         resident_bytes + w1_bytes + stream_bytes
                         + 12 * 1024 * 1024))

    out = pl.pallas_call(
        discriminator_kernel,
        out_shape=jax.ShapeDtypeStruct((b_pad, OUT_PAD), jnp.bfloat16),
        grid=(n_tiles, n_k),
        in_specs=in_specs,
        out_specs=out_spec,
        scratch_shapes=[pltpu.VMEM((tb, H1), jnp.float32)],
        compiler_params=pltpu.CompilerParams(
            dimension_semantics=("parallel", "arbitrary"),
            vmem_limit_bytes=vmem_limit),
    )(x2d, w1, b1, w2, b2, w3, b3, w4p, b4p)

    return out[:b, 0:1].astype(jnp.float32)


def init_params(key, image_size):
    """Deterministic synthetic init mirroring the PyTorch Linear shapes.

    Weights are stored already-transposed as (in, out) in bf16 (x @ W ==
    torch's x @ W.T); biases stay f32 and are added to the f32 accumulator.
    """
    ks = jax.random.split(key, 8)

    def lin(kw, kb, fan_in, fan_out):
        s = 1.0 / jnp.sqrt(jnp.float32(fan_in))
        w = jax.random.uniform(kw, (fan_in, fan_out), jnp.float32, -s, s)
        bias = jax.random.uniform(kb, (1, fan_out), jnp.float32, -s, s)
        return w.astype(jnp.bfloat16), bias

    w1, b1 = lin(ks[0], ks[1], image_size, H1)
    w2, b2 = lin(ks[2], ks[3], H1, H2)
    w3, b3 = lin(ks[4], ks[5], H2, H3)
    w4, b4 = lin(ks[6], ks[7], H3, 1)

    # Pad the final (256, 1) weight / (1, 1) bias out to 128 lanes with zeros;
    # the wrapper slices column 0, so padding never affects the result.
    w4p = jnp.zeros((H3, OUT_PAD), jnp.bfloat16).at[:, 0:1].set(w4)
    b4p = jnp.zeros((1, OUT_PAD), jnp.float32).at[:, 0:1].set(b4)
    return (w1, b1, w2, b2, w3, b3, w4p, b4p), (w4, b4)


def reference_forward(x_nchw, params, w4, b4):
    """Pure-JAX reference with the same bf16-input / f32-accumulate recipe."""
    w1, b1, w2, b2, w3, b3, _, _ = params
    x = x_nchw.reshape(x_nchw.shape[0], -1).astype(jnp.bfloat16)
    h = _leaky_relu(jnp.dot(x, w1, preferred_element_type=jnp.float32) + b1)
    h = _leaky_relu(jnp.dot(h.astype(jnp.bfloat16), w2,
                            preferred_element_type=jnp.float32) + b2)
    h = _leaky_relu(jnp.dot(h.astype(jnp.bfloat16), w3,
                            preferred_element_type=jnp.float32) + b3)
    h = jnp.dot(h.astype(jnp.bfloat16), w4, preferred_element_type=jnp.float32)
    return jax.nn.sigmoid(h + b4)


if __name__ == "__main__":
    key = jax.random.PRNGKey(0)
    k_x, k_p = jax.random.split(key)

    # Small NCHW input: batch=2, channels=4, 16x16 spatial -> image_size=1024
    B, C, Hh, Ww = 2, 4, 16, 16
    x = jax.random.normal(k_x, (B, C, Hh, Ww), jnp.float32)

    params, (w4, b4) = init_params(k_p, C * Hh * Ww)

    y = discriminator_forward(x, params)
    y = jax.block_until_ready(y)

    y_ref = reference_forward(x, params, w4, b4)
    assert y.shape == (B, 1)
    assert jnp.allclose(y, y_ref, atol=1e-2, rtol=1e-2), (y, y_ref)

    print("KERNEL_OK")
</pallas_src>

<mosaic_0001>
module attributes {stable_mosaic.version = 11 : i64} {
  func.func @discriminator_kernel(%arg0: i32, %arg1: i32, %arg2: memref<16x1024xf32, #tpu.memory_space<vmem>>, %arg3: memref<1024x1024xbf16, #tpu.memory_space<vmem>>, %arg4: memref<1x1024xf32, #tpu.memory_space<vmem>>, %arg5: memref<1024x512xbf16, #tpu.memory_space<vmem>>, %arg6: memref<1x512xf32, #tpu.memory_space<vmem>>, %arg7: memref<512x256xbf16, #tpu.memory_space<vmem>>, %arg8: memref<1x256xf32, #tpu.memory_space<vmem>>, %arg9: memref<256x128xbf16, #tpu.memory_space<vmem>>, %arg10: memref<1x128xf32, #tpu.memory_space<vmem>>, %arg11: memref<16x128xbf16, #tpu.memory_space<vmem>>, %arg12: memref<16x1024xf32, #tpu.memory_space<vmem>>) attributes {dimension_semantics = [#tpu.dimension_semantics<parallel>, #tpu.dimension_semantics<arbitrary>], iteration_bounds = array<i64: 1, 1>, scalar_prefetch = 0 : i64, scratch_operands = 1 : i64, tpu.core_type = #tpu.core_type<tc>, window_params = [{transform_indices = @transform_0, window_bounds = array<i64: 16, 1024>}, {pipeline_mode = #tpu.pipeline_mode<synchronous>, transform_indices = @transform_1, window_bounds = array<i64: 1024, 1024>}, {pipeline_mode = #tpu.pipeline_mode<synchronous>, transform_indices = @transform_2, window_bounds = array<i64: 1, 1024>}, {pipeline_mode = #tpu.pipeline_mode<synchronous>, transform_indices = @transform_3, window_bounds = array<i64: 1024, 512>}, {pipeline_mode = #tpu.pipeline_mode<synchronous>, transform_indices = @transform_4, window_bounds = array<i64: 1, 512>}, {pipeline_mode = #tpu.pipeline_mode<synchronous>, transform_indices = @transform_5, window_bounds = array<i64: 512, 256>}, {pipeline_mode = #tpu.pipeline_mode<synchronous>, transform_indices = @transform_6, window_bounds = array<i64: 1, 256>}, {pipeline_mode = #tpu.pipeline_mode<synchronous>, transform_indices = @transform_7, window_bounds = array<i64: 256, 128>}, {pipeline_mode = #tpu.pipeline_mode<synchronous>, transform_indices = @transform_8, window_bounds = array<i64: 1, 128>}, {transform_indices = @transform_9, window_bounds = array<i64: 16, 128>}]} {
    %c0_i32 = arith.constant 0 : i32
    %0 = arith.cmpi eq, %arg1, %c0_i32 : i32
    %1 = arith.extui %0 : i1 to i32
    %c0_i32_0 = arith.constant 0 : i32
    %2 = arith.cmpi ne, %1, %c0_i32_0 : i32
    scf.if %2 {
      %cst_10 = arith.constant 0.000000e+00 : f32
      %13 = vector.broadcast %cst_10 : f32 to vector<16x1024xf32>
      %c0_11 = arith.constant 0 : index
      %c0_12 = arith.constant 0 : index
      %14 = vector.load %arg12[%c0_11, %c0_12] : memref<16x1024xf32, #tpu.memory_space<vmem>>, vector<16x1024xf32>
      tpu.vector_store %arg12[%c0_11, %c0_12], %13 {strides = array<i32>} : memref<16x1024xf32, #tpu.memory_space<vmem>>, vector<16x1024xf32>,
    } else {
    }
    %c0 = arith.constant 0 : index
    %c0_1 = arith.constant 0 : index
    %3 = vector.load %arg12[%c0, %c0_1] : memref<16x1024xf32, #tpu.memory_space<vmem>>, vector<16x1024xf32>
    %c0_2 = arith.constant 0 : index
    %c0_3 = arith.constant 0 : index
    %4 = vector.load %arg2[%c0_2, %c0_3] : memref<16x1024xf32, #tpu.memory_space<vmem>>, vector<16x1024xf32>
    %5 = arith.truncf %4 : vector<16x1024xf32> to vector<16x1024xbf16>
    %c0_4 = arith.constant 0 : index
    %c0_5 = arith.constant 0 : index
    %6 = vector.load %arg3[%c0_4, %c0_5] : memref<1024x1024xbf16, #tpu.memory_space<vmem>>, vector<1024x1024xbf16>
    %cst = arith.constant dense<0.000000e+00> : vector<16x1024xf32>
    %7 = tpu.matmul %5, %6, %cst {dimension_numbers = #tpu.dot_dimension_numbers<[1], [0], [0], [1], [0, 0, 1, 1], [], []>} : vector<16x1024xbf16>, vector<1024x1024xbf16>, vector<16x1024xf32> -> vector<16x1024xf32>
    %8 = arith.addf %3, %7 : vector<16x1024xf32>
    %c0_6 = arith.constant 0 : index
    %c0_7 = arith.constant 0 : index
    %9 = vector.load %arg12[%c0_6, %c0_7] : memref<16x1024xf32, #tpu.memory_space<vmem>>, vector<16x1024xf32>
    tpu.vector_store %arg12[%c0_6, %c0_7], %8 {strides = array<i32>} : memref<16x1024xf32, #tpu.memory_space<vmem>>, vector<16x1024xf32>,
    %c0_i32_8 = arith.constant 0 : i32
    %10 = arith.cmpi eq, %arg1, %c0_i32_8 : i32
    %11 = arith.extui %10 : i1 to i32
    %c0_i32_9 = arith.constant 0 : i32
    %12 = arith.cmpi ne, %11, %c0_i32_9 : i32
    scf.if %12 {
      %c0_10 = arith.constant 0 : index
      %c0_11 = arith.constant 0 : index
      %13 = vector.load %arg12[%c0_10, %c0_11] : memref<16x1024xf32, #tpu.memory_space<vmem>>, vector<16x1024xf32>
      %c0_12 = arith.constant 0 : index
      %c0_13 = arith.constant 0 : index
      %14 = vector.load %arg4[%c0_12, %c0_13] : memref<1x1024xf32, #tpu.memory_space<vmem>>, vector<1x1024xf32>
      %15 = vector.broadcast %14 : vector<1x1024xf32> to vector<16x1024xf32>
      %16 = arith.addf %13, %15 : vector<16x1024xf32>
      %cst_14 = arith.constant 0.000000e+00 : f32
      %17 = vector.broadcast %cst_14 : f32 to vector<16x1024xf32>
      %18 = arith.cmpf ogt, %16, %17 : vector<16x1024xf32>
      %cst_15 = arith.constant 2.000000e-01 : f32
      %19 = vector.broadcast %cst_15 : f32 to vector<16x1024xf32>
      %20 = arith.mulf %19, %16 : vector<16x1024xf32>
      %21 = arith.select %18, %16, %20 : vector<16x1024xi1>, vector<16x1024xf32>
      %22 = arith.truncf %21 : vector<16x1024xf32> to vector<16x1024xbf16>
      %c0_16 = arith.constant 0 : index
      %c0_17 = arith.constant 0 : index
      %23 = vector.load %arg5[%c0_16, %c0_17] : memref<1024x512xbf16, #tpu.memory_space<vmem>>, vector<1024x512xbf16>
      %cst_18 = arith.constant dense<0.000000e+00> : vector<16x512xf32>
      %24 = tpu.matmul %22, %23, %cst_18 {dimension_numbers = #tpu.dot_dimension_numbers<[1], [0], [0], [1], [0, 0, 1, 1], [], []>} : vector<16x1024xbf16>, vector<1024x512xbf16>, vector<16x512xf32> -> vector<16x512xf32>
      %c0_19 = arith.constant 0 : index
      %c0_20 = arith.constant 0 : index
      %25 = vector.load %arg6[%c0_19, %c0_20] : memref<1x512xf32, #tpu.memory_space<vmem>>, vector<1x512xf32>
      %26 = vector.broadcast %25 : vector<1x512xf32> to vector<16x512xf32>
      %27 = arith.addf %24, %26 : vector<16x512xf32>
      %cst_21 = arith.constant 0.000000e+00 : f32
      %28 = vector.broadcast %cst_21 : f32 to vector<16x512xf32>
      %29 = arith.cmpf ogt, %27, %28 : vector<16x512xf32>
      %cst_22 = arith.constant 2.000000e-01 : f32
      %30 = vector.broadcast %cst_22 : f32 to vector<16x512xf32>
      %31 = arith.mulf %30, %27 : vector<16x512xf32>
      %32 = arith.select %29, %27, %31 : vector<16x512xi1>, vector<16x512xf32>
      %33 = arith.truncf %32 : vector<16x512xf32> to vector<16x512xbf16>
      %c0_23 = arith.constant 0 : index
      %c0_24 = arith.constant 0 : index
      %34 = vector.load %arg7[%c0_23, %c0_24] : memref<512x256xbf16, #tpu.memory_space<vmem>>, vector<512x256xbf16>
      %cst_25 = arith.constant dense<0.000000e+00> : vector<16x256xf32>
      %35 = tpu.matmul %33, %34, %cst_25 {dimension_numbers = #tpu.dot_dimension_numbers<[1], [0], [0], [1], [0, 0, 1, 1], [], []>} : vector<16x512xbf16>, vector<512x256xbf16>, vector<16x256xf32> -> vector<16x256xf32>
      %c0_26 = arith.constant 0 : index
      %c0_27 = arith.constant 0 : index
      %36 = vector.load %arg8[%c0_26, %c0_27] : memref<1x256xf32, #tpu.memory_space<vmem>>, vector<1x256xf32>
      %37 = vector.broadcast %36 : vector<1x256xf32> to vector<16x256xf32>
      %38 = arith.addf %35, %37 : vector<16x256xf32>
      %cst_28 = arith.constant 0.000000e+00 : f32
      %39 = vector.broadcast %cst_28 : f32 to vector<16x256xf32>
      %40 = arith.cmpf ogt, %38, %39 : vector<16x256xf32>
      %cst_29 = arith.constant 2.000000e-01 : f32
      %41 = vector.broadcast %cst_29 : f32 to vector<16x256xf32>
      %42 = arith.mulf %41, %38 : vector<16x256xf32>
      %43 = arith.select %40, %38, %42 : vector<16x256xi1>, vector<16x256xf32>
      %44 = arith.truncf %43 : vector<16x256xf32> to vector<16x256xbf16>
      %c0_30 = arith.constant 0 : index
      %c0_31 = arith.constant 0 : index
      %45 = vector.load %arg9[%c0_30, %c0_31] : memref<256x128xbf16, #tpu.memory_space<vmem>>, vector<256x128xbf16>
      %cst_32 = arith.constant dense<0.000000e+00> : vector<16x128xf32>
      %46 = tpu.matmul %44, %45, %cst_32 {dimension_numbers = #tpu.dot_dimension_numbers<[1], [0], [0], [1], [0, 0, 1, 1], [], []>} : vector<16x256xbf16>, vector<256x128xbf16>, vector<16x128xf32> -> vector<16x128xf32>
      %c0_33 = arith.constant 0 : index
      %c0_34 = arith.constant 0 : index
      %47 = vector.load %arg10[%c0_33, %c0_34] : memref<1x128xf32, #tpu.memory_space<vmem>>, vector<1x128xf32>
      %48 = vector.broadcast %47 : vector<1x128xf32> to vector<16x128xf32>
      %49 = arith.addf %46, %48 : vector<16x128xf32>
      %50 = arith.negf %49 : vector<16x128xf32>
      %51 = math.exp %50 : vector<16x128xf32>
      %cst_35 = arith.constant 1.000000e+00 : f32
      %52 = vector.broadcast %cst_35 : f32 to vector<16x128xf32>
      %53 = arith.addf %52, %51 : vector<16x128xf32>
      %54 = arith.divf %52, %53 : vector<16x128xf32>
      %55 = arith.truncf %54 : vector<16x128xf32> to vector<16x128xbf16>
      %c0_36 = arith.constant 0 : index
      %c0_37 = arith.constant 0 : index
      %56 = vector.load %arg11[%c0_36, %c0_37] : memref<16x128xbf16, #tpu.memory_space<vmem>>, vector<16x128xbf16>
      tpu.vector_store %arg11[%c0_36, %c0_37], %55 {strides = array<i32>} : memref<16x128xbf16, #tpu.memory_space<vmem>>, vector<16x128xbf16>,
    } else {
    }
    return
  }
  func.func @transform_0(%arg0: i32, %arg1: i32) -> (i32, i32) {
    %c0_i32 = arith.constant 0 : i32
    return %arg0, %arg1 : i32, i32
  }
  func.func @transform_1(%arg0: i32, %arg1: i32) -> (i32, i32) {
    %c0_i32 = arith.constant 0 : i32
    %c0_i32_0 = arith.constant 0 : i32
    return %arg1, %c0_i32 : i32, i32
  }
  func.func @transform_2(%arg0: i32, %arg1: i32) -> (i32, i32) {
    %c0_i32 = arith.constant 0 : i32
    %c0_i32_0 = arith.constant 0 : i32
    %c0_i32_1 = arith.constant 0 : i32
    return %c0_i32, %c0_i32_0 : i32, i32
  }
  func.func @transform_3(%arg0: i32, %arg1: i32) -> (i32, i32) {
    %c0_i32 = arith.constant 0 : i32
    %c0_i32_0 = arith.constant 0 : i32
    %c0_i32_1 = arith.constant 0 : i32
    return %c0_i32, %c0_i32_0 : i32, i32
  }
  func.func @transform_4(%arg0: i32, %arg1: i32) -> (i32, i32) {
    %c0_i32 = arith.constant 0 : i32
    %c0_i32_0 = arith.constant 0 : i32
    %c0_i32_1 = arith.constant 0 : i32
    return %c0_i32, %c0_i32_0 : i32, i32
  }
  func.func @transform_5(%arg0: i32, %arg1: i32) -> (i32, i32) {
    %c0_i32 = arith.constant 0 : i32
    %c0_i32_0 = arith.constant 0 : i32
    %c0_i32_1 = arith.constant 0 : i32
    return %c0_i32, %c0_i32_0 : i32, i32
  }
  func.func @transform_6(%arg0: i32, %arg1: i32) -> (i32, i32) {
    %c0_i32 = arith.constant 0 : i32
    %c0_i32_0 = arith.constant 0 : i32
    %c0_i32_1 = arith.constant 0 : i32
    return %c0_i32, %c0_i32_0 : i32, i32
  }
  func.func @transform_7(%arg0: i32, %arg1: i32) -> (i32, i32) {
    %c0_i32 = arith.constant 0 : i32
    %c0_i32_0 = arith.constant 0 : i32
    %c0_i32_1 = arith.constant 0 : i32
    return %c0_i32, %c0_i32_0 : i32, i32
  }
  func.func @transform_8(%arg0: i32, %arg1: i32) -> (i32, i32) {
    %c0_i32 = arith.constant 0 : i32
    %c0_i32_0 = arith.constant 0 : i32
    %c0_i32_1 = arith.constant 0 : i32
    return %c0_i32, %c0_i32_0 : i32, i32
  }
  func.func @transform_9(%arg0: i32, %arg1: i32) -> (i32, i32) {
    %c0_i32 = arith.constant 0 : i32
    %c0_i32_0 = arith.constant 0 : i32
    return %arg0, %c0_i32 : i32, i32
  }
}

</mosaic_0001>

<llo_original>
// kernel: tpu_custom_call.1
$region0: #{tpu_custom_call.1}
  #allocation0 [shape = 'u32[]', space=smem, size = 0x4, offset = 0x4, fixed_abs, tag = 'smem constant byte address 0x4 - core index']
  #allocation1 [shape = 'u32[144,128]{1,0:T(1,128)}', space=vmem, size = 0x12000, scoped, tag = 'internal scratch']
  #allocation2 [shape = 'f32[16,1024]{1,0:T(8,128)}', space=vmem, size = 0x10000, scoped, tag = 'scratch operand']
  %s0 = inlined_call_operand.hbm [shape: f32[16,1024], index: 0, kind: input, shape index: {}]
  %s1 = inlined_call_operand.hbm [shape: bf16[1024,1024], index: 1, kind: input, shape index: {}]
  %s2 = inlined_call_operand.hbm [shape: f32[1,1024], index: 2, kind: input, shape index: {}]
  %s3 = inlined_call_operand.hbm [shape: bf16[1024,512], index: 3, kind: input, shape index: {}]
  %s4 = inlined_call_operand.hbm [shape: f32[1,512], index: 4, kind: input, shape index: {}]
  %s5 = inlined_call_operand.hbm [shape: bf16[512,256], index: 5, kind: input, shape index: {}]
  %s6 = inlined_call_operand.hbm [shape: f32[1,256], index: 6, kind: input, shape index: {}]
  %s7 = inlined_call_operand.hbm [shape: bf16[256,128], index: 7, kind: input, shape index: {}]
  %s8 = inlined_call_operand.hbm [shape: f32[1,128], index: 8, kind: input, shape index: {}]
  %s9 = inlined_call_operand.hbm [shape: bf16[16,128], index: 9, kind: output, shape index: {}]
  %s10 = sld [smem:[#allocation0]]
  $region90: #{tpu_custom_call.1} parent=0
    _
  %s12 = ssub.s32 1, %s10
  %s13 = scalar_select 0, %s12, %s10
  $region1: #{tpu_custom_call.1} parent=0
    #allocation3 [shape = 'u8[65536]{0}', space=vmem, size = 0x10000, scoped, tag = 'input window, operand 0, single buffered']
    #allocation4 [shape = 's32[1]{0}', space=sflag, size = 0x4, scoped, tag = 'scoped memory for tpu_custom_call.1']
    #allocation5 [shape = 's32[1]{0}', space=sflag, size = 0x4, scoped, tag = 'scoped memory for tpu_custom_call.1']
    #allocation6 [shape = 'u8[2097152]{0}', space=vmem, size = 0x200000, scoped, tag = 'input window, operand 1, single buffered']
    #allocation7 [shape = 's32[1]{0}', space=sflag, size = 0x4, scoped, tag = 'scoped memory for tpu_custom_call.1']
    #allocation8 [shape = 'u8[4096]{0}', space=vmem, size = 0x1000, scoped, tag = 'input window, operand 2, single buffered']
    #allocation9 [shape = 'u8[1048576]{0}', space=vmem, size = 0x100000, scoped, tag = 'input window, operand 3, single buffered']
    #allocation10 [shape = 's32[1]{0}', space=sflag, size = 0x4, scoped, tag = 'scoped memory for tpu_custom_call.1']
    #allocation11 [shape = 'u8[2048]{0}', space=vmem, size = 0x800, scoped, tag = 'input window, operand 4, single buffered']
    #allocation12 [shape = 'u8[262144]{0}', space=vmem, size = 0x40000, scoped, tag = 'input window, operand 5, single buffered']
    #allocation13 [shape = 's32[1]{0}', space=sflag, size = 0x4, scoped, tag = 'scoped memory for tpu_custom_call.1']
    #allocation14 [shape = 'u8[1024]{0}', space=vmem, size = 0x400, scoped, tag = 'input window, operand 6, single buffered']
    #allocation15 [shape = 'u8[65536]{0}', space=vmem, size = 0x10000, scoped, tag = 'input window, operand 7, single buffered']
    #allocation16 [shape = 's32[1]{0}', space=sflag, size = 0x4, scoped, tag = 'scoped memory for tpu_custom_call.1']
    #allocation17 [shape = 'u8[512]{0}', space=vmem, size = 0x400, scoped, tag = 'input window, operand 8, single buffered']
    #allocation18 [shape = 'u8[4096]{0}', space=vmem, size = 0x1000, scoped, tag = 'output window, operand 0, single buffered']
    %14 = vsyncpa [#allocation4], 0
    %15 = vsyncpa [#allocation7], 0
    %16 = vsyncpa [#allocation10], 0
    %17 = vsyncpa [#allocation13], 0
    %18 = vsyncpa [#allocation16], 0
    %19 = vsyncpa [#allocation5], 0
    // Predicated region
    $region2: #{tpu_custom_call.1} parent=1 // pred_check
      _
    $region3: #{tpu_custom_call.1} parent=1 // pred_check_branch
      %21 = sbr.rel (0) target = $region5
    $region4: #{tpu_custom_call.1} parent=1 // pred_region
      %s23 = ssub.s32 2048, 2048
      %24 = vsyncadd [#allocation4], %s23
      %s25 = sshll.u32 [#allocation3], 4
      %s26 = int_to_ptr.vmem [resolvable:$true] %s25
      %31 = dma.hbm_to_vmem [thread:$0]  %s0, 2048, %s26, [#allocation4], 1024, 1024, 64
    $region5: #{tpu_custom_call.1} parent=1 // pred_fallthru
      _
    // Predicated region
    $region6: #{tpu_custom_call.1} parent=1 // pred_check
      _
    $region7: #{tpu_custom_call.1} parent=1 // pred_check_branch
      %33 = sbr.rel (0) target = $region9
    $region8: #{tpu_custom_call.1} parent=1 // pred_region
      %s35 = ssub.s32 65536, 65536
      %36 = vsyncadd [#allocation7], %s35
      %s37 = sshll.u32 [#allocation6], 4
      %s38 = int_to_ptr.vmem [resolvable:$true] %s37
      %43 = dma.hbm_to_vmem [thread:$0]  %s1, 65536, %s38, [#allocation7], 512, 512, 32
    $region9: #{tpu_custom_call.1} parent=1 // pred_fallthru
      _
    // Predicated region
    $region10: #{tpu_custom_call.1} parent=1 // pred_check
      _
    $region11: #{tpu_custom_call.1} parent=1 // pred_check_branch
      %45 = sbr.rel (0) target = $region13
    $region12: #{tpu_custom_call.1} parent=1 // pred_region
      %s47 = ssub.s32 128, 128
      %48 = vsyncadd [#allocation7], %s47
      %s50 = sshll.u32 [#allocation8], 4
      %s51 = int_to_ptr.vmem [resolvable:$true] %s50
      %53 = dma.hbm_to_vmem [thread:$0]  %s2, 128, %s51, [#allocation7]
    $region13: #{tpu_custom_call.1} parent=1 // pred_fallthru
      _
    // Predicated region
    $region14: #{tpu_custom_call.1} parent=1 // pred_check
      _
    $region15: #{tpu_custom_call.1} parent=1 // pred_check_branch
      %55 = sbr.rel (0) target = $region17
    $region16: #{tpu_custom_call.1} parent=1 // pred_region
      %s57 = ssub.s32 32768, 32768
      %58 = vsyncadd [#allocation10], %s57
      %s59 = sshll.u32 [#allocation9], 4
      %s60 = int_to_ptr.vmem [resolvable:$true] %s59
      %65 = dma.hbm_to_vmem [thread:$0]  %s3, 32768, %s60, [#allocation10], 256, 256, 16
    $region17: #{tpu_custom_call.1} parent=1 // pred_fallthru
      _
    // Predicated region
    $region18: #{tpu_custom_call.1} parent=1 // pred_check
      _
    $region19: #{tpu_custom_call.1} parent=1 // pred_check_branch
      %67 = sbr.rel (0) target = $region21
    $region20: #{tpu_custom_call.1} parent=1 // pred_region
      %s69 = ssub.s32 64, 64
      %70 = vsyncadd [#allocation10], %s69
      %s72 = sshll.u32 [#allocation11], 4
      %s73 = int_to_ptr.vmem [resolvable:$true] %s72
      %75 = dma.hbm_to_vmem [thread:$0]  %s4, 64, %s73, [#allocation10]
    $region21: #{tpu_custom_call.1} parent=1 // pred_fallthru
      _
    // Predicated region
    $region22: #{tpu_custom_call.1} parent=1 // pred_check
      _
    $region23: #{tpu_custom_call.1} parent=1 // pred_check_branch
      %77 = sbr.rel (0) target = $region25
    $region24: #{tpu_custom_call.1} parent=1 // pred_region
      %s79 = ssub.s32 8192, 8192
      %80 = vsyncadd [#allocation13], %s79
      %s81 = sshll.u32 [#allocation12], 4
      %s82 = int_to_ptr.vmem [resolvable:$true] %s81
      %87 = dma.hbm_to_vmem [thread:$0]  %s5, 8192, %s82, [#allocation13], 128, 128, 8
    $region25: #{tpu_custom_call.1} parent=1 // pred_fallthru
      _
    // Predicated region
    $region26: #{tpu_custom_call.1} parent=1 // pred_check
      _
    $region27: #{tpu_custom_call.1} parent=1 // pred_check_branch
      %89 = sbr.rel (0) target = $region29
    $region28: #{tpu_custom_call.1} parent=1 // pred_region
      %s91 = ssub.s32 32, 32
      %92 = vsyncadd [#allocation13], %s91
      %s94 = sshll.u32 [#allocation14], 4
      %s95 = int_to_ptr.vmem [resolvable:$true] %s94
      %97 = dma.hbm_to_vmem [thread:$0]  %s6, 32, %s95, [#allocation13]
    $region29: #{tpu_custom_call.1} parent=1 // pred_fallthru
      _
    // Predicated region
    $region30: #{tpu_custom_call.1} parent=1 // pred_check
      _
    $region31: #{tpu_custom_call.1} parent=1 // pred_check_branch
      %99 = sbr.rel (0) target = $region33
    $region32: #{tpu_custom_call.1} parent=1 // pred_region
      %s101 = ssub.s32 2048, 2048
      %102 = vsyncadd [#allocation16], %s101
      %s103 = sshll.u32 [#allocation15], 4
      %s104 = int_to_ptr.vmem [resolvable:$true] %s103
      %109 = dma.hbm_to_vmem [thread:$0]  %s7, 2048, %s104, [#allocation16], 64, 64, 4
    $region33: #{tpu_custom_call.1} parent=1 // pred_fallthru
      _
    // Predicated region
    $region34: #{tpu_custom_call.1} parent=1 // pred_check
      _
    $region35: #{tpu_custom_call.1} parent=1 // pred_check_branch
      %111 = sbr.rel (0) target = $region37
    $region36: #{tpu_custom_call.1} parent=1 // pred_region
      %s113 = ssub.s32 16, 16
      %114 = vsyncadd [#allocation16], %s113
      %s116 = sshll.u32 [#allocation17], 4
      %s117 = int_to_ptr.vmem [resolvable:$true] %s116
      %119 = dma.hbm_to_vmem [thread:$0]  %s8, 16, %s117, [#allocation16]
    $region37: #{tpu_custom_call.1} parent=1 // pred_fallthru
      _
    // Predicated region
    $region38: #{tpu_custom_call.1} parent=1 // pred_check
      _
    $region39: #{tpu_custom_call.1} parent=1 // pred_check_branch
      %121 = sbr.rel (0) target = $region41
    $region40: #{tpu_custom_call.1} parent=1 // pred_region
      %122 = dma.done [#allocation4], 2048
    $region41: #{tpu_custom_call.1} parent=1 // pred_fallthru
      _
    // Predicated region
    $region42: #{tpu_custom_call.1} parent=1 // pred_check
      _
    $region43: #{tpu_custom_call.1} parent=1 // pred_check_branch
      %124 = sbr.rel (0) target = $region45
    $region44: #{tpu_custom_call.1} parent=1 // pred_region
      %125 = dma.done [#allocation7], 65536
    $region45: #{tpu_custom_call.1} parent=1 // pred_fallthru
      _
    // Predicated region
    $region46: #{tpu_custom_call.1} parent=1 // pred_check
      _
    $region47: #{tpu_custom_call.1} parent=1 // pred_check_branch
      %127 = sbr.rel (0) target = $region49
    $region48: #{tpu_custom_call.1} parent=1 // pred_region
      %128 = dma.done [#allocation7], 128
    $region49: #{tpu_custom_call.1} parent=1 // pred_fallthru
      _
    // Predicated region
    $region50: #{tpu_custom_call.1} parent=1 // pred_check
      _
    $region51: #{tpu_custom_call.1} parent=1 // pred_check_branch
      %130 = sbr.rel (0) target = $region53
    $region52: #{tpu_custom_call.1} parent=1 // pred_region
      %131 = dma.done [#allocation10], 32768
    $region53: #{tpu_custom_call.1} parent=1 // pred_fallthru
      _
    // Predicated region
    $region54: #{tpu_custom_call.1} parent=1 // pred_check
      _
    $region55: #{tpu_custom_call.1} parent=1 // pred_check_branch
      %133 = sbr.rel (0) target = $region57
    $region56: #{tpu_custom_call.1} parent=1 // pred_region
      %134 = dma.done [#allocation10], 64
    $region57: #{tpu_custom_call.1} parent=1 // pred_fallthru
      _
    // Predicated region
    $region58: #{tpu_custom_call.1} parent=1 // pred_check
      _
    $region59: #{tpu_custom_call.1} parent=1 // pred_check_branch
      %136 = sbr.rel (0) target = $region61
    $region60: #{tpu_custom_call.1} parent=1 // pred_region
      %137 = dma.done [#allocation13], 8192
    $region61: #{tpu_custom_call.1} parent=1 // pred_fallthru
      _
    // Predicated region
    $region62: #{tpu_custom_call.1} parent=1 // pred_check
      _
    $region63: #{tpu_custom_call.1} parent=1 // pred_check_branch
      %139 = sbr.rel (0) target = $region65
    $region64: #{tpu_custom_call.1} parent=1 // pred_region
      %140 = dma.done [#allocation13], 32
    $region65: #{tpu_custom_call.1} parent=1 // pred_fallthru
      _
    // Predicated region
    $region66: #{tpu_custom_call.1} parent=1 // pred_check
      _
    $region67: #{tpu_custom_call.1} parent=1 // pred_check_branch
      %142 = sbr.rel (0) target = $region69
    $region68: #{tpu_custom_call.1} parent=1 // pred_region
      %143 = dma.done [#allocation16], 2048
    $region69: #{tpu_custom_call.1} parent=1 // pred_fallthru
      _
    // Predicated region
    $region70: #{tpu_custom_call.1} parent=1 // pred_check
      _
    $region71: #{tpu_custom_call.1} parent=1 // pred_check_branch
      %145 = sbr.rel (0) target = $region73
    $region72: #{tpu_custom_call.1} parent=1 // pred_region
      %146 = dma.done [#allocation16], 16
    $region73: #{tpu_custom_call.1} parent=1 // pred_fallthru
      _
    %p148 = scmp.eq.s32.totalorder 0, 0
    // Predicated region
    $region74: #{tpu_custom_call.1} parent=1 // pred_check
      %p149 = pneg %p148
    $region75: #{tpu_custom_call.1} parent=1 // pred_check_branch
      %151 = sbr.rel (%p149) target = $region77
    $region76: #{tpu_custom_call.1} parent=1 // pred_region
      %152 = vst [vmem:[#allocation2] sm:$0xff] 0.0
      %153 = vst [vmem:[#allocation2 + $0x8] sm:$0xff] 0.0
      %154 = vst [vmem:[#allocation2 + $0x10] sm:$0xff] 0.0
      %155 = vst [vmem:[#allocation2 + $0x18] sm:$0xff] 0.0
      %156 = vst [vmem:[#allocation2 + $0x20] sm:$0xff] 0.0
      %157 = vst [vmem:[#allocation2 + $0x28] sm:$0xff] 0.0
      %158 = vst [vmem:[#allocation2 + $0x30] sm:$0xff] 0.0
      %159 = vst [vmem:[#allocation2 + $0x38] sm:$0xff] 0.0
      %160 = vst [vmem:[#allocation2 + $0x40] sm:$0xff] 0.0
      %161 = vst [vmem:[#allocation2 + $0x48] sm:$0xff] 0.0
      %162 = vst [vmem:[#allocation2 + $0x50] sm:$0xff] 0.0
      %163 = vst [vmem:[#allocation2 + $0x58] sm:$0xff] 0.0
      %164 = vst [vmem:[#allocation2 + $0x60] sm:$0xff] 0.0
      %165 = vst [vmem:[#allocation2 + $0x68] sm:$0xff] 0.0
      %166 = vst [vmem:[#allocation2 + $0x70] sm:$0xff] 0.0
      %167 = vst [vmem:[#allocation2 + $0x78] sm:$0xff] 0.0
    $region77: #{tpu_custom_call.1} parent=1 // pred_fallthru
      _
    %v168 = vld [vmem:[#allocation2] sm:$0xff]
    %v169 = vld [vmem:[#allocation2 + $0x8] sm:$0xff]
    %v170 = vld [vmem:[#allocation2 + $0x10] sm:$0xff]
    %v171 = vld [vmem:[#allocation2 + $0x18] sm:$0xff]
    %v172 = vld [vmem:[#allocation2 + $0x20] sm:$0xff]
    %v173 = vld [vmem:[#allocation2 + $0x28] sm:$0xff]
    %v174 = vld [vmem:[#allocation2 + $0x30] sm:$0xff]
    %v175 = vld [vmem:[#allocation2 + $0x38] sm:$0xff]
    %v176 = vld [vmem:[#allocation2 + $0x40] sm:$0xff]
    %v177 = vld [vmem:[#allocation2 + $0x48] sm:$0xff]
    %v178 = vld [vmem:[#allocation2 + $0x50] sm:$0xff]
    %v179 = vld [vmem:[#allocation2 + $0x58] sm:$0xff]
    %v180 = vld [vmem:[#allocation2 + $0x60] sm:$0xff]
    %v181 = vld [vmem:[#allocation2 + $0x68] sm:$0xff]
    %v182 = vld [vmem:[#allocation2 + $0x70] sm:$0xff]
    %v183 = vld [vmem:[#allocation2 + $0x78] sm:$0xff]
    %v184 = vld [vmem:[#allocation3] sm:$0xff]
    %v185 = vld [vmem:[#allocation3 + $0x8] sm:$0xff]
    %v186 = vld [vmem:[#allocation3 + $0x10] sm:$0xff]
    %v187 = vld [vmem:[#allocation3 + $0x18] sm:$0xff]
    %v188 = vld [vmem:[#allocation3 + $0x20] sm:$0xff]
    %v189 = vld [vmem:[#allocation3 + $0x28] sm:$0xff]
    %v190 = vld [vmem:[#allocation3 + $0x30] sm:$0xff]
    %v191 = vld [vmem:[#allocation3 + $0x38] sm:$0xff]
    %v192 = vld [vmem:[#allocation3 + $0x40] sm:$0xff]
    %v193 = vld [vmem:[#allocation3 + $0x48] sm:$0xff]
    %v194 = vld [vmem:[#allocation3 + $0x50] sm:$0xff]
    %v195 = vld [vmem:[#allocation3 + $0x58] sm:$0xff]
    %v196 = vld [vmem:[#allocation3 + $0x60] sm:$0xff]
    %v197 = vld [vmem:[#allocation3 + $0x68] sm:$0xff]
    %v198 = vld [vmem:[#allocation3 + $0x70] sm:$0xff]
    %v199 = vld [vmem:[#allocation3 + $0x78] sm:$0xff]
    %v200 = vpack.c.bf16 %v192, %v184
    %v201 = vpack.c.bf16 %v193, %v185
    %v202 = vpack.c.bf16 %v194, %v186
    %v203 = vpack.c.bf16 %v195, %v187
    %v204 = vpack.c.bf16 %v196, %v188
    %v205 = vpack.c.bf16 %v197, %v189
    %v206 = vpack.c.bf16 %v198, %v190
    %v207 = vpack.c.bf16 %v199, %v191
    %v208 = vld [vmem:[#allocation6] sm:$0xff]
    %v209 = vld [vmem:[#allocation6 + $0x8] sm:$0xff]
    %v210 = vld [vmem:[#allocation6 + $0x10] sm:$0xff]
    %v211 = vld [vmem:[#allocation6 + $0x18] sm:$0xff]
    %v212 = vld [vmem:[#allocation6 + $0x20] sm:$0xff]
    %v213 = vld [vmem:[#allocation6 + $0x28] sm:$0xff]
    %v214 = vld [vmem:[#allocation6 + $0x30] sm:$0xff]
    %v215 = vld [vmem:[#allocation6 + $0x38] sm:$0xff]
    %v216 = vld [vmem:[#allocation6 + $0x40] sm:$0xff]
    %v217 = vld [vmem:[#allocation6 + $0x48] sm:$0xff]
    %v218 = vld [vmem:[#allocation6 + $0x50] sm:$0xff]
    %v219 = vld [vmem:[#allocation6 + $0x58] sm:$0xff]
    %v220 = vld [vmem:[#allocation6 + $0x60] sm:$0xff]
    %v221 = vld [vmem:[#allocation6 + $0x68] sm:$0xff]
    %v222 = vld [vmem:[#allocation6 + $0x70] sm:$0xff]
    %v223 = vld [vmem:[#allocation6 + $0x78] sm:$0xff]
    %v224 = vld [vmem:[#allocation6 + $0x80] sm:$0xff]
    %v225 = vld [vmem:[#allocation6 + $0x88] sm:$0xff]
    %v226 = vld [vmem:[#allocation6 + $0x90] sm:$0xff]
    %v227 = vld [vmem:[#allocation6 + $0x98] sm:$0xff]
    %v228 = vld [vmem:[#allocation6 + $0xa0] sm:$0xff]
    %v229 = vld [vmem:[#allocation6 + $0xa8] sm:$0xff]
    %v230 = vld [vmem:[#allocation6 + $0xb0] sm:$0xff]
    %v231 = vld [vmem:[#allocation6 + $0xb8] sm:$0xff]
    %v232 = vld [vmem:[#allocation6 + $0xc0] sm:$0xff]
    %v233 = vld [vmem:[#allocation6 + $0xc8] sm:$0xff]
    %v234 = vld [vmem:[#allocation6 + $0xd0] sm:$0xff]
    %v235 = vld [vmem:[#allocation6 + $0xd8] sm:$0xff]
    %v236 = vld [vmem:[#allocation6 + $0xe0] sm:$0xff]
    %v237 = vld [vmem:[#allocation6 + $0xe8] sm:$0xff]
    %v238 = vld [vmem:[#allocation6 + $0xf0] sm:$0xff]
    %v239 = vld [vmem:[#allocation6 + $0xf8] sm:$0xff]
    %v240 = vld [vmem:[#allocation6 + $0x100] sm:$0xff]
    %v241 = vld [vmem:[#allocation6 + $0x108] sm:$0xff]
    %v242 = vld [vmem:[#allocation6 + $0x110] sm:$0xff]
    %v243 = vld [vmem:[#allocation6 + $0x118] sm:$0xff]
    %v244 = vld [vmem:[#allocation6 + $0x120] sm:$0xff]
    %v245 = vld [vmem:[#allocation6 + $0x128] sm:$0xff]
    %v246 = vld [vmem:[#allocation6 + $0x130] sm:$0xff]
    %v247 = vld [vmem:[#allocation6 + $0x138] sm:$0xff]
    %v248 = vld [vmem:[#allocation6 + $0x140] sm:$0xff]
    %v249 = vld [vmem:[#allocation6 + $0x148] sm:$0xff]
    %v250 = vld [vmem:[#allocation6 + $0x150] sm:$0xff]
    %v251 = vld [vmem:[#allocation6 + $0x158] sm:$0xff]
    %v252 = vld [vmem:[#allocation6 + $0x160] sm:$0xff]
    %v253 = vld [vmem:[#allocation6 + $0x168] sm:$0xff]
    %v254 = vld [vmem:[#allocation6 + $0x170] sm:$0xff]
    %v255 = vld [vmem:[#allocation6 + $0x178] sm:$0xff]
    %v256 = vld [vmem:[#allocation6 + $0x180] sm:$0xff]
    %v257 = vld [vmem:[#allocation6 + $0x188] sm:$0xff]
    %v258 = vld [vmem:[#allocation6 + $0x190] sm:$0xff]
    %v259 = vld [vmem:[#allocation6 + $0x198] sm:$0xff]
    %v260 = vld [vmem:[#allocation6 + $0x1a0] sm:$0xff]
    %v261 = vld [vmem:[#allocation6 + $0x1a8] sm:$0xff]
    %v262 = vld [vmem:[#allocation6 + $0x1b0] sm:$0xff]
    %v263 = vld [vmem:[#allocation6 + $0x1b8] sm:$0xff]
    %v264 = vld [vmem:[#allocation6 + $0x1c0] sm:$0xff]
    %v265 = vld [vmem:[#allocation6 + $0x1c8] sm:$0xff]
    %v266 = vld [vmem:[#allocation6 + $0x1d0] sm:$0xff]
    %v267 = vld [vmem:[#allocation6 + $0x1d8] sm:$0xff]
    %v268 = vld [vmem:[#allocation6 + $0x1e0] sm:$0xff]
    %v269 = vld [vmem:[#allocation6 + $0x1e8] sm:$0xff]
    %v270 = vld [vmem:[#allocation6 + $0x1f0] sm:$0xff]
    %v271 = vld [vmem:[#allocation6 + $0x1f8] sm:$0xff]
    %v272 = vld [vmem:[#allocation6 + $0x200] sm:$0xff]
    %v273 = vld [vmem:[#allocation6 + $0x208] sm:$0xff]
    %v274 = vld [vmem:[#allocation6 + $0x210] sm:$0xff]
    %v275 = vld [vmem:[#allocation6 + $0x218] sm:$0xff]
    %v276 = vld [vmem:[#allocation6 + $0x220] sm:$0xff]
    %v277 = vld [vmem:[#allocation6 + $0x228] sm:$0xff]
    %v278 = vld [vmem:[#allocation6 + $0x230] sm:$0xff]
    %v279 = vld [vmem:[#allocation6 + $0x238] sm:$0xff]
    %v280 = vld [vmem:[#allocation6 + $0x240] sm:$0xff]
    %v281 = vld [vmem:[#allocation6 + $0x248] sm:$0xff]
    %v282 = vld [vmem:[#allocation6 + $0x250] sm:$0xff]
    %v283 = vld [vmem:[#allocation6 + $0x258] sm:$0xff]
    %v284 = vld [vmem:[#allocation6 + $0x260] sm:$0xff]
    %v285 = vld [vmem:[#allocation6 + $0x268] sm:$0xff]
    %v286 = vld [vmem:[#allocation6 + $0x270] sm:$0xff]
    %v287 = vld [vmem:[#allocation6 + $0x278] sm:$0xff]
    %v288 = vld [vmem:[#allocation6 + $0x280] sm:$0xff]
    %v289 = vld [vmem:[#allocation6 + $0x288] sm:$0xff]
    %v290 = vld [vmem:[#allocation6 + $0x290] sm:$0xff]
    %v291 = vld [vmem:[#allocation6 + $0x298] sm:$0xff]
    %v292 = vld [vmem:[#allocation6 + $0x2a0] sm:$0xff]
    %v293 = vld [vmem:[#allocation6 + $0x2a8] sm:$0xff]
    %v294 = vld [vmem:[#allocation6 + $0x2b0] sm:$0xff]
    %v295 = vld [vmem:[#allocation6 + $0x2b8] sm:$0xff]
    %v296 = vld [vmem:[#allocation6 + $0x2c0] sm:$0xff]
    %v297 = vld [vmem:[#allocation6 + $0x2c8] sm:$0xff]
    %v298 = vld [vmem:[#allocation6 + $0x2d0] sm:$0xff]
    %v299 = vld [vmem:[#allocation6 + $0x2d8] sm:$0xff]
    %v300 = vld [vmem:[#allocation6 + $0x2e0] sm:$0xff]
    %v301 = vld [vmem:[#allocation6 + $0x2e8] sm:$0xff]
    %v302 = vld [vmem:[#allocation6 + $0x2f0] sm:$0xff]
    %v303 = vld [vmem:[#allocation6 + $0x2f8] sm:$0xff]
    %v304 = vld [vmem:[#allocation6 + $0x300] sm:$0xff]
    %v305 = vld [vmem:[#allocation6 + $0x308] sm:$0xff]
    %v306 = vld [vmem:[#allocation6 + $0x310] sm:$0xff]
    %v307 = vld [vmem:[#allocation6 + $0x318] sm:$0xff]
    %v308 = vld [vmem:[#allocation6 + $0x320] sm:$0xff]
    %v309 = vld [vmem:[#allocation6 + $0x328] sm:$0xff]
    %v310 = vld [vmem:[#allocation6 + $0x330] sm:$0xff]
    %v311 = vld [vmem:[#allocation6 + $0x338] sm:$0xff]
    %v312 = vld [vmem:[#allocation6 + $0x340] sm:$0xff]
    %v313 = vld [vmem:[#allocation6 + $0x348] sm:$0xff]
    %v314 = vld [vmem:[#allocation6 + $0x350] sm:$0xff]
    %v315 = vld [vmem:[#allocation6 + $0x358] sm:$0xff]
    %v316 = vld [vmem:[#allocation6 + $0x360] sm:$0xff]
    %v317 = vld [vmem:[#allocation6 + $0x368] sm:$0xff]
    %v318 = vld [vmem:[#allocation6 + $0x370] sm:$0xff]
    %v319 = vld [vmem:[#allocation6 + $0x378] sm:$0xff]
    %v320 = vld [vmem:[#allocation6 + $0x380] sm:$0xff]
    %v321 = vld [vmem:[#allocation6 + $0x388] sm:$0xff]
    %v322 = vld [vmem:[#allocation6 + $0x390] sm:$0xff]
    %v323 = vld [vmem:[#allocation6 + $0x398] sm:$0xff]
    %v324 = vld [vmem:[#allocation6 + $0x3a0] sm:$0xff]
    %v325 = vld [vmem:[#allocation6 + $0x3a8] sm:$0xff]
    %v326 = vld [vmem:[#allocation6 + $0x3b0] sm:$0xff]
    %v327 = vld [vmem:[#allocation6 + $0x3b8] sm:$0xff]
    %v328 = vld [vmem:[#allocation6 + $0x3c0] sm:$0xff]
    %v329 = vld [vmem:[#allocation6 + $0x3c8] sm:$0xff]
    %v330 = vld [vmem:[#allocation6 + $0x3d0] sm:$0xff]
    %v331 = vld [vmem:[#allocation6 + $0x3d8] sm:$0xff]
    %v332 = vld [vmem:[#allocation6 + $0x3e0] sm:$0xff]
    %v333 = vld [vmem:[#allocation6 + $0x3e8] sm:$0xff]
    %v334 = vld [vmem:[#allocation6 + $0x3f0] sm:$0xff]
    %v335 = vld [vmem:[#allocation6 + $0x3f8] sm:$0xff]
    %v336 = vld [vmem:[#allocation6 + $0x400] sm:$0xff]
    %v337 = vld [vmem:[#allocation6 + $0x408] sm:$0xff]
    %v338 = vld [vmem:[#allocation6 + $0x410] sm:$0xff]
    %v339 = vld [vmem:[#allocation6 + $0x418] sm:$0xff]
    %v340 = vld [vmem:[#allocation6 + $0x420] sm:$0xff]
    %v341 = vld [vmem:[#allocation6 + $0x428] sm:$0xff]
    %v342 = vld [vmem:[#allocation6 + $0x430] sm:$0xff]
    %v343 = vld [vmem:[#allocation6 + $0x438] sm:$0xff]
    %v344 = vld [vmem:[#allocation6 + $0x440] sm:$0xff]
    %v345 = vld [vmem:[#allocation6 + $0x448] sm:$0xff]
    %v346 = vld [vmem:[#allocation6 + $0x450] sm:$0xff]
    %v347 = vld [vmem:[#allocation6 + $0x458] sm:$0xff]
    %v348 = vld [vmem:[#allocation6 + $0x460] sm:$0xff]
    %v349 = vld [vmem:[#allocation6 + $0x468] sm:$0xff]
    %v350 = vld [vmem:[#allocation6 + $0x470] sm:$0xff]
    %v351 = vld [vmem:[#allocation6 + $0x478] sm:$0xff]
    %v352 = vld [vmem:[#allocation6 + $0x480] sm:$0xff]
    %v353 = vld [vmem:[#allocation6 + $0x488] sm:$0xff]
    %v354 = vld [vmem:[#allocation6 + $0x490] sm:$0xff]
    %v355 = vld [vmem:[#allocation6 + $0x498] sm:$0xff]
    %v356 = vld [vmem:[#allocation6 + $0x4a0] sm:$0xff]
    %v357 = vld [vmem:[#allocation6 + $0x4a8] sm:$0xff]
    %v358 = vld [vmem:[#allocation6 + $0x4b0] sm:$0xff]
    %v359 = vld [vmem:[#allocation6 + $0x4b8] sm:$0xff]
    %v360 = vld [vmem:[#allocation6 + $0x4c0] sm:$0xff]
    %v361 = vld [vmem:[#allocation6 + $0x4c8] sm:$0xff]
    %v362 = vld [vmem:[#allocation6 + $0x4d0] sm:$0xff]
    %v363 = vld [vmem:[#allocation6 + $0x4d8] sm:$0xff]
    %v364 = vld [vmem:[#allocation6 + $0x4e0] sm:$0xff]
    %v365 = vld [vmem:[#allocation6 + $0x4e8] sm:$0xff]
    %v366 = vld [vmem:[#allocation6 + $0x4f0] sm:$0xff]
    %v367 = vld [vmem:[#allocation6 + $0x4f8] sm:$0xff]
    %v368 = vld [vmem:[#allocation6 + $0x500] sm:$0xff]
    %v369 = vld [vmem:[#allocation6 + $0x508] sm:$0xff]
    %v370 = vld [vmem:[#allocation6 + $0x510] sm:$0xff]
    %v371 = vld [vmem:[#allocation6 + $0x518] sm:$0xff]
    %v372 = vld [vmem:[#allocation6 + $0x520] sm:$0xff]
    %v373 = vld [vmem:[#allocation6 + $0x528] sm:$0xff]
    %v374 = vld [vmem:[#allocation6 + $0x530] sm:$0xff]
    %v375 = vld [vmem:[#allocation6 + $0x538] sm:$0xff]
    %v376 = vld [vmem:[#allocation6 + $0x540] sm:$0xff]
    %v377 = vld [vmem:[#allocation6 + $0x548] sm:$0xff]
    %v378 = vld [vmem:[#allocation6 + $0x550] sm:$0xff]
    %v379 = vld [vmem:[#allocation6 + $0x558] sm:$0xff]
    %v380 = vld [vmem:[#allocation6 + $0x560] sm:$0xff]
    %v381 = vld [vmem:[#allocation6 + $0x568] sm:$0xff]
    %v382 = vld [vmem:[#allocation6 + $0x570] sm:$0xff]
    %v383 = vld [vmem:[#allocation6 + $0x578] sm:$0xff]
    %v384 = vld [vmem:[#allocation6 + $0x580] sm:$0xff]
    %v385 = vld [vmem:[#allocation6 + $0x588] sm:$0xff]
    %v386 = vld [vmem:[#allocation6 + $0x590] sm:$0xff]
    %v387 = vld [vmem:[#allocation6 + $0x598] sm:$0xff]
    %v388 = vld [vmem:[#allocation6 + $0x5a0] sm:$0xff]
    %v389 = vld [vmem:[#allocation6 + $0x5a8] sm:$0xff]
    %v390 = vld [vmem:[#allocation6 + $0x5b0] sm:$0xff]
    %v391 = vld [vmem:[#allocation6 + $0x5b8] sm:$0xff]
    %v392 = vld [vmem:[#allocation6 + $0x5c0] sm:$0xff]
    %v393 = vld [vmem:[#allocation6 + $0x5c8] sm:$0xff]
    %v394 = vld [vmem:[#allocation6 + $0x5d0] sm:$0xff]
    %v395 = vld [vmem:[#allocation6 + $0x5d8] sm:$0xff]
    %v396 = vld [vmem:[#allocation6 + $0x5e0] sm:$0xff]
    %v397 = vld [vmem:[#allocation6 + $0x5e8] sm:$0xff]
    %v398 = vld [vmem:[#allocation6 + $0x5f0] sm:$0xff]
    %v399 = vld [vmem:[#allocation6 + $0x5f8] sm:$0xff]
    %v400 = vld [vmem:[#allocation6 + $0x600] sm:$0xff]
    %v401 = vld [vmem:[#allocation6 + $0x608] sm:$0xff]
    %v402 = vld [vmem:[#allocation6 + $0x610] sm:$0xff]
    %v403 = vld [vmem:[#allocation6 + $0x618] sm:$0xff]
    %v404 = vld [vmem:[#allocation6 + $0x620] sm:$0xff]
    %v405 = vld [vmem:[#allocation6 + $0x628] sm:$0xff]
    %v406 = vld [vmem:[#allocation6 + $0x630] sm:$0xff]
    %v407 = vld [vmem:[#allocation6 + $0x638] sm:$0xff]
    %v408 = vld [vmem:[#allocation6 + $0x640] sm:$0xff]
    %v409 = vld [vmem:[#allocation6 + $0x648] sm:$0xff]
    %v410 = vld [vmem:[#allocation6 + $0x650] sm:$0xff]
    %v411 = vld [vmem:[#allocation6 + $0x658] sm:$0xff]
    %v412 = vld [vmem:[#allocation6 + $0x660] sm:$0xff]
    %v413 = vld [vmem:[#allocation6 + $0x668] sm:$0xff]
    %v414 = vld [vmem:[#allocation6 + $0x670] sm:$0xff]
    %v415 = vld [vmem:[#allocation6 + $0x678] sm:$0xff]
    %v416 = vld [vmem:[#allocation6 + $0x680] sm:$0xff]
    %v417 = vld [vmem:[#allocation6 + $0x688] sm:$0xff]
    %v418 = vld [vmem:[#allocation6 + $0x690] sm:$0xff]
    %v419 = vld [vmem:[#allocation6 + $0x698] sm:$0xff]
    %v420 = vld [vmem:[#allocation6 + $0x6a0] sm:$0xff]
    %v421 = vld [vmem:[#allocation6 + $0x6a8] sm:$0xff]
    %v422 = vld [vmem:[#allocation6 + $0x6b0] sm:$0xff]
    %v423 = vld [vmem:[#allocation6 + $0x6b8] sm:$0xff]
    %v424 = vld [vmem:[#allocation6 + $0x6c0] sm:$0xff]
    %v425 = vld [vmem:[#allocation6 + $0x6c8] sm:$0xff]
    %v426 = vld [vmem:[#allocation6 + $0x6d0] sm:$0xff]
    %v427 = vld [vmem:[#allocation6 + $0x6d8] sm:$0xff]
    %v428 = vld [vmem:[#allocation6 + $0x6e0] sm:$0xff]
    %v429 = vld [vmem:[#allocation6 + $0x6e8] sm:$0xff]
    %v430 = vld [vmem:[#allocation6 + $0x6f0] sm:$0xff]
    %v431 = vld [vmem:[#allocation6 + $0x6f8] sm:$0xff]
    %v432 = vld [vmem:[#allocation6 + $0x700] sm:$0xff]
    %v433 = vld [vmem:[#allocation6 + $0x708] sm:$0xff]
    %v434 = vld [vmem:[#allocation6 + $0x710] sm:$0xff]
    %v435 = vld [vmem:[#allocation6 + $0x718] sm:$0xff]
    %v436 = vld [vmem:[#allocation6 + $0x720] sm:$0xff]
    %v437 = vld [vmem:[#allocation6 + $0x728] sm:$0xff]
    %v438 = vld [vmem:[#allocation6 + $0x730] sm:$0xff]
    %v439 = vld [vmem:[#allocation6 + $0x738] sm:$0xff]
    %v440 = vld [vmem:[#allocation6 + $0x740] sm:$0xff]
    %v441 = vld [vmem:[#allocation6 + $0x748] sm:$0xff]
    %v442 = vld [vmem:[#allocation6 + $0x750] sm:$0xff]
    %v443 = vld [vmem:[#allocation6 + $0x758] sm:$0xff]
    %v444 = vld [vmem:[#allocation6 + $0x760] sm:$0xff]
    %v445 = vld [vmem:[#allocation6 + $0x768] sm:$0xff]
    %v446 = vld [vmem:[#allocation6 + $0x770] sm:$0xff]
    %v447 = vld [vmem:[#allocation6 + $0x778] sm:$0xff]
    %v448 = vld [vmem:[#allocation6 + $0x780] sm:$0xff]
    %v449 = vld [vmem:[#allocation6 + $0x788] sm:$0xff]
    %v450 = vld [vmem:[#allocation6 + $0x790] sm:$0xff]
    %v451 = vld [vmem:[#allocation6 + $0x798] sm:$0xff]
    %v452 = vld [vmem:[#allocation6 + $0x7a0] sm:$0xff]
    %v453 = vld [vmem:[#allocation6 + $0x7a8] sm:$0xff]
    %v454 = vld [vmem:[#allocation6 + $0x7b0] sm:$0xff]
    %v455 = vld [vmem:[#allocation6 + $0x7b8] sm:$0xff]
    %v456 = vld [vmem:[#allocation6 + $0x7c0] sm:$0xff]
    %v457 = vld [vmem:[#allocation6 + $0x7c8] sm:$0xff]
    %v458 = vld [vmem:[#allocation6 + $0x7d0] sm:$0xff]
    %v459 = vld [vmem:[#allocation6 + $0x7d8] sm:$0xff]
    %v460 = vld [vmem:[#allocation6 + $0x7e0] sm:$0xff]
    %v461 = vld [vmem:[#allocation6 + $0x7e8] sm:$0xff]
    %v462 = vld [vmem:[#allocation6 + $0x7f0] sm:$0xff]
    %v463 = vld [vmem:[#allocation6 + $0x7f8] sm:$0xff]
    %v464 = vld [vmem:[#allocation6 + $0x800] sm:$0xff]
    %v465 = vld [vmem:[#allocation6 + $0x808] sm:$0xff]
    %v466 = vld [vmem:[#allocation6 + $0x810] sm:$0xff]
    %v467 = vld [vmem:[#allocation6 + $0x818] sm:$0xff]
    %v468 = vld [vmem:[#allocation6 + $0x820] sm:$0xff]
    %v469 = vld [vmem:[#allocation6 + $0x828] sm:$0xff]
    %v470 = vld [vmem:[#allocation6 + $0x830] sm:$0xff]
    %v471 = vld [vmem:[#allocation6 + $0x838] sm:$0xff]
    %v472 = vld [vmem:[#allocation6 + $0x840] sm:$0xff]
    %v473 = vld [vmem:[#allocation6 + $0x848] sm:$0xff]
    %v474 = vld [vmem:[#allocation6 + $0x850] sm:$0xff]
    %v475 = vld [vmem:[#allocation6 + $0x858] sm:$0xff]
    %v476 = vld [vmem:[#allocation6 + $0x860] sm:$0xff]
    %v477 = vld [vmem:[#allocation6 + $0x868] sm:$0xff]
    %v478 = vld [vmem:[#allocation6 + $0x870] sm:$0xff]
    %v479 = vld [vmem:[#allocation6 + $0x878] sm:$0xff]
    %v480 = vld [vmem:[#allocation6 + $0x880] sm:$0xff]
    %v481 = vld [vmem:[#allocation6 + $0x888] sm:$0xff]
    %v482 = vld [vmem:[#allocation6 + $0x890] sm:$0xff]
    %v483 = vld [vmem:[#allocation6 + $0x898] sm:$0xff]
    %v484 = vld [vmem:[#allocation6 + $0x8a0] sm:$0xff]
    %v485 = vld [vmem:[#allocation6 + $0x8a8] sm:$0xff]
    %v486 = vld [vmem:[#allocation6 + $0x8b0] sm:$0xff]
    %v487 = vld [vmem:[#allocation6 + $0x8b8] sm:$0xff]
    %v488 = vld [vmem:[#allocation6 + $0x8c0] sm:$0xff]
    %v489 = vld [vmem:[#allocation6 + $0x8c8] sm:$0xff]
    %v490 = vld [vmem:[#allocation6 + $0x8d0] sm:$0xff]
    %v491 = vld [vmem:[#allocation6 + $0x8d8] sm:$0xff]
    %v492 = vld [vmem:[#allocation6 + $0x8e0] sm:$0xff]
    %v493 = vld [vmem:[#allocation6 + $0x8e8] sm:$0xff]
    %v494 = vld [vmem:[#allocation6 + $0x8f0] sm:$0xff]
    %v495 = vld [vmem:[#allocation6 + $0x8f8] sm:$0xff]
    %v496 = vld [vmem:[#allocation6 + $0x900] sm:$0xff]
    %v497 = vld [vmem:[#allocation6 + $0x908] sm:$0xff]
    %v498 = vld [vmem:[#allocation6 + $0x910] sm:$0xff]
    %v499 = vld [vmem:[#allocation6 + $0x918] sm:$0xff]
    %v500 = vld [vmem:[#allocation6 + $0x920] sm:$0xff]
    %v501 = vld [vmem:[#allocation6 + $0x928] sm:$0xff]
    %v502 = vld [vmem:[#allocation6 + $0x930] sm:$0xff]
    %v503 = vld [vmem:[#allocation6 + $0x938] sm:$0xff]
    %v504 = vld [vmem:[#allocation6 + $0x940] sm:$0xff]
    %v505 = vld [vmem:[#allocation6 + $0x948] sm:$0xff]
    %v506 = vld [vmem:[#allocation6 + $0x950] sm:$0xff]
    %v507 = vld [vmem:[#allocation6 + $0x958] sm:$0xff]
    %v508 = vld [vmem:[#allocation6 + $0x960] sm:$0xff]
    %v509 = vld [vmem:[#allocation6 + $0x968] sm:$0xff]
    %v510 = vld [vmem:[#allocation6 + $0x970] sm:$0xff]
    %v511 = vld [vmem:[#allocation6 + $0x978] sm:$0xff]
    %v512 = vld [vmem:[#allocation6 + $0x980] sm:$0xff]
    %v513 = vld [vmem:[#allocation6 + $0x988] sm:$0xff]
    %v514 = vld [vmem:[#allocation6 + $0x990] sm:$0xff]
    %v515 = vld [vmem:[#allocation6 + $0x998] sm:$0xff]
    %v516 = vld [vmem:[#allocation6 + $0x9a0] sm:$0xff]
    %v517 = vld [vmem:[#allocation6 + $0x9a8] sm:$0xff]
    %v518 = vld [vmem:[#allocation6 + $0x9b0] sm:$0xff]
    %v519 = vld [vmem:[#allocation6 + $0x9b8] sm:$0xff]
    %v520 = vld [vmem:[#allocation6 + $0x9c0] sm:$0xff]
    %v521 = vld [vmem:[#allocation6 + $0x9c8] sm:$0xff]
    %v522 = vld [vmem:[#allocation6 + $0x9d0] sm:$0xff]
    %v523 = vld [vmem:[#allocation6 + $0x9d8] sm:$0xff]
    %v524 = vld [vmem:[#allocation6 + $0x9e0] sm:$0xff]
    %v525 = vld [vmem:[#allocation6 + $0x9e8] sm:$0xff]
    %v526 = vld [vmem:[#allocation6 + $0x9f0] sm:$0xff]
    %v527 = vld [vmem:[#allocation6 + $0x9f8] sm:$0xff]
    %v528 = vld [vmem:[#allocation6 + $0xa00] sm:$0xff]
    %v529 = vld [vmem:[#allocation6 + $0xa08] sm:$0xff]
    %v530 = vld [vmem:[#allocation6 + $0xa10] sm:$0xff]
    %v531 = vld [vmem:[#allocation6 + $0xa18] sm:$0xff]
    %v532 = vld [vmem:[#allocation6 + $0xa20] sm:$0xff]
    %v533 = vld [vmem:[#allocation6 + $0xa28] sm:$0xff]
    %v534 = vld [vmem:[#allocation6 + $0xa30] sm:$0xff]
    %v535 = vld [vmem:[#allocation6 + $0xa38] sm:$0xff]
    %v536 = vld [vmem:[#allocation6 + $0xa40] sm:$0xff]
    %v537 = vld [vmem:[#allocation6 + $0xa48] sm:$0xff]
    %v538 = vld [vmem:[#allocation6 + $0xa50] sm:$0xff]
    %v539 = vld [vmem:[#allocation6 + $0xa58] sm:$0xff]
    %v540 = vld [vmem:[#allocation6 + $0xa60] sm:$0xff]
    %v541 = vld [vmem:[#allocation6 + $0xa68] sm:$0xff]
    %v542 = vld [vmem:[#allocation6 + $0xa70] sm:$0xff]
    %v543 = vld [vmem:[#allocation6 + $0xa78] sm:$0xff]
    %v544 = vld [vmem:[#allocation6 + $0xa80] sm:$0xff]
    %v545 = vld [vmem:[#allocation6 + $0xa88] sm:$0xff]
    %v546 = vld [vmem:[#allocation6 + $0xa90] sm:$0xff]
    %v547 = vld [vmem:[#allocation6 + $0xa98] sm:$0xff]
    %v548 = vld [vmem:[#allocation6 + $0xaa0] sm:$0xff]
    %v549 = vld [vmem:[#allocation6 + $0xaa8] sm:$0xff]
    %v550 = vld [vmem:[#allocation6 + $0xab0] sm:$0xff]
    %v551 = vld [vmem:[#allocation6 + $0xab8] sm:$0xff]
    %v552 = vld [vmem:[#allocation6 + $0xac0] sm:$0xff]
    %v553 = vld [vmem:[#allocation6 + $0xac8] sm:$0xff]
    %v554 = vld [vmem:[#allocation6 + $0xad0] sm:$0xff]
    %v555 = vld [vmem:[#allocation6 + $0xad8] sm:$0xff]
    %v556 = vld [vmem:[#allocation6 + $0xae0] sm:$0xff]
    %v557 = vld [vmem:[#allocation6 + $0xae8] sm:$0xff]
    %v558 = vld [vmem:[#allocation6 + $0xaf0] sm:$0xff]
    %v559 = vld [vmem:[#allocation6 + $0xaf8] sm:$0xff]
    %v560 = vld [vmem:[#allocation6 + $0xb00] sm:$0xff]
    %v561 = vld [vmem:[#allocation6 + $0xb08] sm:$0xff]
    %v562 = vld [vmem:[#allocation6 + $0xb10] sm:$0xff]
    %v563 = vld [vmem:[#allocation6 + $0xb18] sm:$0xff]
    %v564 = vld [vmem:[#allocation6 + $0xb20] sm:$0xff]
    %v565 = vld [vmem:[#allocation6 + $0xb28] sm:$0xff]
    %v566 = vld [vmem:[#allocation6 + $0xb30] sm:$0xff]
    %v567 = vld [vmem:[#allocation6 + $0xb38] sm:$0xff]
    %v568 = vld [vmem:[#allocation6 + $0xb40] sm:$0xff]
    %v569 = vld [vmem:[#allocation6 + $0xb48] sm:$0xff]
    %v570 = vld [vmem:[#allocation6 + $0xb50] sm:$0xff]
    %v571 = vld [vmem:[#allocation6 + $0xb58] sm:$0xff]
    %v572 = vld [vmem:[#allocation6 + $0xb60] sm:$0xff]
    %v573 = vld [vmem:[#allocation6 + $0xb68] sm:$0xff]
    %v574 = vld [vmem:[#allocation6 + $0xb70] sm:$0xff]
    %v575 = vld [vmem:[#allocation6 + $0xb78] sm:$0xff]
    %v576 = vld [vmem:[#allocation6 + $0xb80] sm:$0xff]
    %v577 = vld [vmem:[#allocation6 + $0xb88] sm:$0xff]
    %v578 = vld [vmem:[#allocation6 + $0xb90] sm:$0xff]
    %v579 = vld [vmem:[#allocation6 + $0xb98] sm:$0xff]
    %v580 = vld [vmem:[#allocation6 + $0xba0] sm:$0xff]
    %v581 = vld [vmem:[#allocation6 + $0xba8] sm:$0xff]
    %v582 = vld [vmem:[#allocation6 + $0xbb0] sm:$0xff]
    %v583 = vld [vmem:[#allocation6 + $0xbb8] sm:$0xff]
    %v584 = vld [vmem:[#allocation6 + $0xbc0] sm:$0xff]
    %v585 = vld [vmem:[#allocation6 + $0xbc8] sm:$0xff]
    %v586 = vld [vmem:[#allocation6 + $0xbd0] sm:$0xff]
    %v587 = vld [vmem:[#allocation6 + $0xbd8] sm:$0xff]
    %v588 = vld [vmem:[#allocation6 + $0xbe0] sm:$0xff]
    %v589 = vld [vmem:[#allocation6 + $0xbe8] sm:$0xff]
    %v590 = vld [vmem:[#allocation6 + $0xbf0] sm:$0xff]
    %v591 = vld [vmem:[#allocation6 + $0xbf8] sm:$0xff]
    %v592 = vld [vmem:[#allocation6 + $0xc00] sm:$0xff]
    %v593 = vld [vmem:[#allocation6 + $0xc08] sm:$0xff]
    %v594 = vld [vmem:[#allocation6 + $0xc10] sm:$0xff]
    %v595 = vld [vmem:[#allocation6 + $0xc18] sm:$0xff]
    %v596 = vld [vmem:[#allocation6 + $0xc20] sm:$0xff]
    %v597 = vld [vmem:[#allocation6 + $0xc28] sm:$0xff]
    %v598 = vld [vmem:[#allocation6 + $0xc30] sm:$0xff]
    %v599 = vld [vmem:[#allocation6 + $0xc38] sm:$0xff]
    %v600 = vld [vmem:[#allocation6 + $0xc40] sm:$0xff]
    %v601 = vld [vmem:[#allocation6 + $0xc48] sm:$0xff]
    %v602 = vld [vmem:[#allocation6 + $0xc50] sm:$0xff]
    %v603 = vld [vmem:[#allocation6 + $0xc58] sm:$0xff]
    %v604 = vld [vmem:[#allocation6 + $0xc60] sm:$0xff]
    %v605 = vld [vmem:[#allocation6 + $0xc68] sm:$0xff]
    %v606 = vld [vmem:[#allocation6 + $0xc70] sm:$0xff]
    %v607 = vld [vmem:[#allocation6 + $0xc78] sm:$0xff]
    %v608 = vld [vmem:[#allocation6 + $0xc80] sm:$0xff]
    %v609 = vld [vmem:[#allocation6 + $0xc88] sm:$0xff]
    %v610 = vld [vmem:[#allocation6 + $0xc90] sm:$0xff]
    %v611 = vld [vmem:[#allocation6 + $0xc98] sm:$0xff]
    %v612 = vld [vmem:[#allocation6 + $0xca0] sm:$0xff]
    %v613 = vld [vmem:[#allocation6 + $0xca8] sm:$0xff]
    %v614 = vld [vmem:[#allocation6 + $0xcb0] sm:$0xff]
    %v615 = vld [vmem:[#allocation6 + $0xcb8] sm:$0xff]
    %v616 = vld [vmem:[#allocation6 + $0xcc0] sm:$0xff]
    %v617 = vld [vmem:[#allocation6 + $0xcc8] sm:$0xff]
    %v618 = vld [vmem:[#allocation6 + $0xcd0] sm:$0xff]
    %v619 = vld [vmem:[#allocation6 + $0xcd8] sm:$0xff]
    %v620 = vld [vmem:[#allocation6 + $0xce0] sm:$0xff]
    %v621 = vld [vmem:[#allocation6 + $0xce8] sm:$0xff]
    %v622 = vld [vmem:[#allocation6 + $0xcf0] sm:$0xff]
    %v623 = vld [vmem:[#allocation6 + $0xcf8] sm:$0xff]
    %v624 = vld [vmem:[#allocation6 + $0xd00] sm:$0xff]
    %v625 = vld [vmem:[#allocation6 + $0xd08] sm:$0xff]
    %v626 = vld [vmem:[#allocation6 + $0xd10] sm:$0xff]
    %v627 = vld [vmem:[#allocation6 + $0xd18] sm:$0xff]
    %v628 = vld [vmem:[#allocation6 + $0xd20] sm:$0xff]
    %v629 = vld [vmem:[#allocation6 + $0xd28] sm:$0xff]
    %v630 = vld [vmem:[#allocation6 + $0xd30] sm:$0xff]
    %v631 = vld [vmem:[#allocation6 + $0xd38] sm:$0xff]
    %v632 = vld [vmem:[#allocation6 + $0xd40] sm:$0xff]
    %v633 = vld [vmem:[#allocation6 + $0xd48] sm:$0xff]
    %v634 = vld [vmem:[#allocation6 + $0xd50] sm:$0xff]
    %v635 = vld [vmem:[#allocation6 + $0xd58] sm:$0xff]
    %v636 = vld [vmem:[#allocation6 + $0xd60] sm:$0xff]
    %v637 = vld [vmem:[#allocation6 + $0xd68] sm:$0xff]
    %v638 = vld [vmem:[#allocation6 + $0xd70] sm:$0xff]
    %v639 = vld [vmem:[#allocation6 + $0xd78] sm:$0xff]
    %v640 = vld [vmem:[#allocation6 + $0xd80] sm:$0xff]
    %v641 = vld [vmem:[#allocation6 + $0xd88] sm:$0xff]
    %v642 = vld [vmem:[#allocation6 + $0xd90] sm:$0xff]
    %v643 = vld [vmem:[#allocation6 + $0xd98] sm:$0xff]
    %v644 = vld [vmem:[#allocation6 + $0xda0] sm:$0xff]
    %v645 = vld [vmem:[#allocation6 + $0xda8] sm:$0xff]
    %v646 = vld [vmem:[#allocation6 + $0xdb0] sm:$0xff]
    %v647 = vld [vmem:[#allocation6 + $0xdb8] sm:$0xff]
    %v648 = vld [vmem:[#allocation6 + $0xdc0] sm:$0xff]
    %v649 = vld [vmem:[#allocation6 + $0xdc8] sm:$0xff]
    %v650 = vld [vmem:[#allocation6 + $0xdd0] sm:$0xff]
    %v651 = vld [vmem:[#allocation6 + $0xdd8] sm:$0xff]
    %v652 = vld [vmem:[#allocation6 + $0xde0] sm:$0xff]
    %v653 = vld [vmem:[#allocation6 + $0xde8] sm:$0xff]
    %v654 = vld [vmem:[#allocation6 + $0xdf0] sm:$0xff]
    %v655 = vld [vmem:[#allocation6 + $0xdf8] sm:$0xff]
    %v656 = vld [vmem:[#allocation6 + $0xe00] sm:$0xff]
    %v657 = vld [vmem:[#allocation6 + $0xe08] sm:$0xff]
    %v658 = vld [vmem:[#allocation6 + $0xe10] sm:$0xff]
    %v659 = vld [vmem:[#allocation6 + $0xe18] sm:$0xff]
    %v660 = vld [vmem:[#allocation6 + $0xe20] sm:$0xff]
    %v661 = vld [vmem:[#allocation6 + $0xe28] sm:$0xff]
    %v662 = vld [vmem:[#allocation6 + $0xe30] sm:$0xff]
    %v663 = vld [vmem:[#allocation6 + $0xe38] sm:$0xff]
    %v664 = vld [vmem:[#allocation6 + $0xe40] sm:$0xff]
    %v665 = vld [vmem:[#allocation6 + $0xe48] sm:$0xff]
    %v666 = vld [vmem:[#allocation6 + $0xe50] sm:$0xff]
    %v667 = vld [vmem:[#allocation6 + $0xe58] sm:$0xff]
    %v668 = vld [vmem:[#allocation6 + $0xe60] sm:$0xff]
    %v669 = vld [vmem:[#allocation6 + $0xe68] sm:$0xff]
    %v670 = vld [vmem:[#allocation6 + $0xe70] sm:$0xff]
    %v671 = vld [vmem:[#allocation6 + $0xe78] sm:$0xff]
    %v672 = vld [vmem:[#allocation6 + $0xe80] sm:$0xff]
    %v673 = vld [vmem:[#allocation6 + $0xe88] sm:$0xff]
    %v674 = vld [vmem:[#allocation6 + $0xe90] sm:$0xff]
    %v675 = vld [vmem:[#allocation6 + $0xe98] sm:$0xff]
    %v676 = vld [vmem:[#allocation6 + $0xea0] sm:$0xff]
    %v677 = vld [vmem:[#allocation6 + $0xea8] sm:$0xff]
    %v678 = vld [vmem:[#allocation6 + $0xeb0] sm:$0xff]
    %v679 = vld [vmem:[#allocation6 + $0xeb8] sm:$0xff]
    %v680 = vld [vmem:[#allocation6 + $0xec0] sm:$0xff]
    %v681 = vld [vmem:[#allocation6 + $0xec8] sm:$0xff]
    %v682 = vld [vmem:[#allocation6 + $0xed0] sm:$0xff]
    %v683 = vld [vmem:[#allocation6 + $0xed8] sm:$0xff]
    %v684 = vld [vmem:[#allocation6 + $0xee0] sm:$0xff]
    %v685 = vld [vmem:[#allocation6 + $0xee8] sm:$0xff]
    %v686 = vld [vmem:[#allocation6 + $0xef0] sm:$0xff]
    %v687 = vld [vmem:[#allocation6 + $0xef8] sm:$0xff]
    %v688 = vld [vmem:[#allocation6 + $0xf00] sm:$0xff]
    %v689 = vld [vmem:[#allocation6 + $0xf08] sm:$0xff]
    %v690 = vld [vmem:[#allocation6 + $0xf10] sm:$0xff]
    %v691 = vld [vmem:[#allocation6 + $0xf18] sm:$0xff]
    %v692 = vld [vmem:[#allocation6 + $0xf20] sm:$0xff]
    %v693 = vld [vmem:[#allocation6 + $0xf28] sm:$0xff]
    %v694 = vld [vmem:[#allocation6 + $0xf30] sm:$0xff]
    %v695 = vld [vmem:[#allocation6 + $0xf38] sm:$0xff]
    %v696 = vld [vmem:[#allocation6 + $0xf40] sm:$0xff]
    %v697 = vld [vmem:[#allocation6 + $0xf48] sm:$0xff]
    %v698 = vld [vmem:[#allocation6 + $0xf50] sm:$0xff]
    %v699 = vld [vmem:[#allocation6 + $0xf58] sm:$0xff]
    %v700 = vld [vmem:[#allocation6 + $0xf60] sm:$0xff]
    %v701 = vld [vmem:[#allocation6 + $0xf68] sm:$0xff]
    %v702 = vld [vmem:[#allocation6 + $0xf70] sm:$0xff]
    %v703 = vld [vmem:[#allocation6 + $0xf78] sm:$0xff]
    %v704 = vld [vmem:[#allocation6 + $0xf80] sm:$0xff]
    %v705 = vld [vmem:[#allocation6 + $0xf88] sm:$0xff]
    %v706 = vld [vmem:[#allocation6 + $0xf90] sm:$0xff]
    %v707 = vld [vmem:[#allocation6 + $0xf98] sm:$0xff]
    %v708 = vld [vmem:[#allocation6 + $0xfa0] sm:$0xff]
    %v709 = vld [vmem:[#allocation6 + $0xfa8] sm:$0xff]
    %v710 = vld [vmem:[#allocation6 + $0xfb0] sm:$0xff]
    %v711 = vld [vmem:[#allocation6 + $0xfb8] sm:$0xff]
    %v712 = vld [vmem:[#allocation6 + $0xfc0] sm:$0xff]
    %v713 = vld [vmem:[#allocation6 + $0xfc8] sm:$0xff]
    %v714 = vld [vmem:[#allocation6 + $0xfd0] sm:$0xff]
    %v715 = vld [vmem:[#allocation6 + $0xfd8] sm:$0xff]
    %v716 = vld [vmem:[#allocation6 + $0xfe0] sm:$0xff]
    %v717 = vld [vmem:[#allocation6 + $0xfe8] sm:$0xff]
    %v718 = vld [vmem:[#allocation6 + $0xff0] sm:$0xff]
    %v719 = vld [vmem:[#allocation6 + $0xff8] sm:$0xff]
    %v1232 = vunpack.c.l.b16 %v208
    %v1233 = vunpack.c.h.b16 %v208
    %v1234 = vunpack.c.l.b16 %v209
    %v1235 = vunpack.c.h.b16 %v209
    %v1236 = vunpack.c.l.b16 %v210
    %v1237 = vunpack.c.h.b16 %v210
    %v1238 = vunpack.c.l.b16 %v211
    %v1239 = vunpack.c.h.b16 %v211
    %v1240 = vunpack.c.l.b16 %v212
    %v1241 = vunpack.c.h.b16 %v212
    %v1242 = vunpack.c.l.b16 %v213
    %v1243 = vunpack.c.h.b16 %v213
    %v1244 = vunpack.c.l.b16 %v214
    %v1245 = vunpack.c.h.b16 %v214
    %v1246 = vunpack.c.l.b16 %v215
    %v1247 = vunpack.c.h.b16 %v215
    %v1248 = vunpack.c.l.b16 %v216
    %v1249 = vunpack.c.h.b16 %v216
    %v1250 = vunpack.c.l.b16 %v217
    %v1251 = vunpack.c.h.b16 %v217
    %v1252 = vunpack.c.l.b16 %v218
    %v1253 = vunpack.c.h.b16 %v218
    %v1254 = vunpack.c.l.b16 %v219
    %v1255 = vunpack.c.h.b16 %v219
    %v1256 = vunpack.c.l.b16 %v220
    %v1257 = vunpack.c.h.b16 %v220
    %v1258 = vunpack.c.l.b16 %v221
    %v1259 = vunpack.c.h.b16 %v221
    %v1260 = vunpack.c.l.b16 %v222
    %v1261 = vunpack.c.h.b16 %v222
    %v1262 = vunpack.c.l.b16 %v223
    %v1263 = vunpack.c.h.b16 %v223
    %v1264 = vunpack.c.l.b16 %v224
    %v1265 = vunpack.c.h.b16 %v224
    %v1266 = vunpack.c.l.b16 %v225
    %v1267 = vunpack.c.h.b16 %v225
    %v1268 = vunpack.c.l.b16 %v226
    %v1269 = vunpack.c.h.b16 %v226
    %v1270 = vunpack.c.l.b16 %v227
    %v1271 = vunpack.c.h.b16 %v227
    %v1272 = vunpack.c.l.b16 %v228
    %v1273 = vunpack.c.h.b16 %v228
    %v1274 = vunpack.c.l.b16 %v229
    %v1275 = vunpack.c.h.b16 %v229
    %v1276 = vunpack.c.l.b16 %v230
    %v1277 = vunpack.c.h.b16 %v230
    %v1278 = vunpack.c.l.b16 %v231
    %v1279 = vunpack.c.h.b16 %v231
    %v1280 = vunpack.c.l.b16 %v232
    %v1281 = vunpack.c.h.b16 %v232
    %v1282 = vunpack.c.l.b16 %v233
    %v1283 = vunpack.c.h.b16 %v233
    %v1284 = vunpack.c.l.b16 %v234
    %v1285 = vunpack.c.h.b16 %v234
    %v1286 = vunpack.c.l.b16 %v235
    %v1287 = vunpack.c.h.b16 %v235
    %v1288 = vunpack.c.l.b16 %v236
    %v1289 = vunpack.c.h.b16 %v236
    %v1290 = vunpack.c.l.b16 %v237
    %v1291 = vunpack.c.h.b16 %v237
    %v1292 = vunpack.c.l.b16 %v238
    %v1293 = vunpack.c.h.b16 %v238
    %v1294 = vunpack.c.l.b16 %v239
    %v1295 = vunpack.c.h.b16 %v239
    %v1296 = vunpack.c.l.b16 %v240
    %v1297 = vunpack.c.h.b16 %v240
    %v1298 = vunpack.c.l.b16 %v241
    %v1299 = vunpack.c.h.b16 %v241
    %v1300 = vunpack.c.l.b16 %v242
    %v1301 = vunpack.c.h.b16 %v242
    %v1302 = vunpack.c.l.b16 %v243
    %v1303 = vunpack.c.h.b16 %v243
    %v1304 = vunpack.c.l.b16 %v244
    %v1305 = vunpack.c.h.b16 %v244
    %v1306 = vunpack.c.l.b16 %v245
    %v1307 = vunpack.c.h.b16 %v245
    %v1308 = vunpack.c.l.b16 %v246
    %v1309 = vunpack.c.h.b16 %v246
    %v1310 = vunpack.c.l.b16 %v247
    %v1311 = vunpack.c.h.b16 %v247
    %v1312 = vunpack.c.l.b16 %v248
    %v1313 = vunpack.c.h.b16 %v248
    %v1314 = vunpack.c.l.b16 %v249
    %v1315 = vunpack.c.h.b16 %v249
    %v1316 = vunpack.c.l.b16 %v250
    %v1317 = vunpack.c.h.b16 %v250
    %v1318 = vunpack.c.l.b16 %v251
    %v1319 = vunpack.c.h.b16 %v251
    %v1320 = vunpack.c.l.b16 %v252
    %v1321 = vunpack.c.h.b16 %v252
    %v1322 = vunpack.c.l.b16 %v253
    %v1323 = vunpack.c.h.b16 %v253
    %v1324 = vunpack.c.l.b16 %v254
    %v1325 = vunpack.c.h.b16 %v254
    %v1326 = vunpack.c.l.b16 %v255
    %v1327 = vunpack.c.h.b16 %v255
    %v1328 = vunpack.c.l.b16 %v256
    %v1329 = vunpack.c.h.b16 %v256
    %v1330 = vunpack.c.l.b16 %v257
    %v1331 = vunpack.c.h.b16 %v257
    %v1332 = vunpack.c.l.b16 %v258
    %v1333 = vunpack.c.h.b16 %v258
    %v1334 = vunpack.c.l.b16 %v259
    %v1335 = vunpack.c.h.b16 %v259
    %v1336 = vunpack.c.l.b16 %v260
    %v1337 = vunpack.c.h.b16 %v260
    %v1338 = vunpack.c.l.b16 %v261
    %v1339 = vunpack.c.h.b16 %v261
    %v1340 = vunpack.c.l.b16 %v262
    %v1341 = vunpack.c.h.b16 %v262
    %v1342 = vunpack.c.l.b16 %v263
    %v1343 = vunpack.c.h.b16 %v263
    %v1344 = vunpack.c.l.b16 %v264
    %v1345 = vunpack.c.h.b16 %v264
    %v1346 = vunpack.c.l.b16 %v265
    %v1347 = vunpack.c.h.b16 %v265
    %v1348 = vunpack.c.l.b16 %v266
    %v1349 = vunpack.c.h.b16 %v266
    %v1350 = vunpack.c.l.b16 %v267
    %v1351 = vunpack.c.h.b16 %v267
    %v1352 = vunpack.c.l.b16 %v268
    %v1353 = vunpack.c.h.b16 %v268
    %v1354 = vunpack.c.l.b16 %v269
    %v1355 = vunpack.c.h.b16 %v269
    %v1356 = vunpack.c.l.b16 %v270
    %v1357 = vunpack.c.h.b16 %v270
    %v1358 = vunpack.c.l.b16 %v271
    %v1359 = vunpack.c.h.b16 %v271
    %v1360 = vunpack.c.l.b16 %v272
    %v1361 = vunpack.c.h.b16 %v272
    %v1362 = vunpack.c.l.b16 %v273
    %v1363 = vunpack.c.h.b16 %v273
    %v1364 = vunpack.c.l.b16 %v274
    %v1365 = vunpack.c.h.b16 %v274
    %v1366 = vunpack.c.l.b16 %v275
    %v1367 = vunpack.c.h.b16 %v275
    %v1368 = vunpack.c.l.b16 %v276
    %v1369 = vunpack.c.h.b16 %v276
    %v1370 = vunpack.c.l.b16 %v277
    %v1371 = vunpack.c.h.b16 %v277
    %v1372 = vunpack.c.l.b16 %v278
    %v1373 = vunpack.c.h.b16 %v278
    %v1374 = vunpack.c.l.b16 %v279
    %v1375 = vunpack.c.h.b16 %v279
    %v1376 = vunpack.c.l.b16 %v280
    %v1377 = vunpack.c.h.b16 %v280
    %v1378 = vunpack.c.l.b16 %v281
    %v1379 = vunpack.c.h.b16 %v281
    %v1380 = vunpack.c.l.b16 %v282
    %v1381 = vunpack.c.h.b16 %v282
    %v1382 = vunpack.c.l.b16 %v283
    %v1383 = vunpack.c.h.b16 %v283
    %v1384 = vunpack.c.l.b16 %v284
    %v1385 = vunpack.c.h.b16 %v284
    %v1386 = vunpack.c.l.b16 %v285
    %v1387 = vunpack.c.h.b16 %v285
    %v1388 = vunpack.c.l.b16 %v286
    %v1389 = vunpack.c.h.b16 %v286
    %v1390 = vunpack.c.l.b16 %v287
    %v1391 = vunpack.c.h.b16 %v287
    %v1392 = vunpack.c.l.b16 %v288
    %v1393 = vunpack.c.h.b16 %v288
    %v1394 = vunpack.c.l.b16 %v289
    %v1395 = vunpack.c.h.b16 %v289
    %v1396 = vunpack.c.l.b16 %v290
    %v1397 = vunpack.c.h.b16 %v290
    %v1398 = vunpack.c.l.b16 %v291
    %v1399 = vunpack.c.h.b16 %v291
    %v1400 = vunpack.c.l.b16 %v292
    %v1401 = vunpack.c.h.b16 %v292
    %v1402 = vunpack.c.l.b16 %v293
    %v1403 = vunpack.c.h.b16 %v293
    %v1404 = vunpack.c.l.b16 %v294
    %v1405 = vunpack.c.h.b16 %v294
    %v1406 = vunpack.c.l.b16 %v295
    %v1407 = vunpack.c.h.b16 %v295
    %v1408 = vunpack.c.l.b16 %v296
    %v1409 = vunpack.c.h.b16 %v296
    %v1410 = vunpack.c.l.b16 %v297
    %v1411 = vunpack.c.h.b16 %v297
    %v1412 = vunpack.c.l.b16 %v298
    %v1413 = vunpack.c.h.b16 %v298
    %v1414 = vunpack.c.l.b16 %v299
    %v1415 = vunpack.c.h.b16 %v299
    %v1416 = vunpack.c.l.b16 %v300
    %v1417 = vunpack.c.h.b16 %v300
    %v1418 = vunpack.c.l.b16 %v301
    %v1419 = vunpack.c.h.b16 %v301
    %v1420 = vunpack.c.l.b16 %v302
    %v1421 = vunpack.c.h.b16 %v302
    %v1422 = vunpack.c.l.b16 %v303
    %v1423 = vunpack.c.h.b16 %v303
    %v1424 = vunpack.c.l.b16 %v304
    %v1425 = vunpack.c.h.b16 %v304
    %v1426 = vunpack.c.l.b16 %v305
    %v1427 = vunpack.c.h.b16 %v305
    %v1428 = vunpack.c.l.b16 %v306
    %v1429 = vunpack.c.h.b16 %v306
    %v1430 = vunpack.c.l.b16 %v307
    %v1431 = vunpack.c.h.b16 %v307
    %v1432 = vunpack.c.l.b16 %v308
    %v1433 = vunpack.c.h.b16 %v308
    %v1434 = vunpack.c.l.b16 %v309
    %v1435 = vunpack.c.h.b16 %v309
    %v1436 = vunpack.c.l.b16 %v310
    %v1437 = vunpack.c.h.b16 %v310
    %v1438 = vunpack.c.l.b16 %v311
    %v1439 = vunpack.c.h.b16 %v311
    %v1440 = vunpack.c.l.b16 %v312
    %v1441 = vunpack.c.h.b16 %v312
    %v1442 = vunpack.c.l.b16 %v313
    %v1443 = vunpack.c.h.b16 %v313
    %v1444 = vunpack.c.l.b16 %v314
    %v1445 = vunpack.c.h.b16 %v314
    %v1446 = vunpack.c.l.b16 %v315
    %v1447 = vunpack.c.h.b16 %v315
    %v1448 = vunpack.c.l.b16 %v316
    %v1449 = vunpack.c.h.b16 %v316
    %v1450 = vunpack.c.l.b16 %v317
    %v1451 = vunpack.c.h.b16 %v317
    %v1452 = vunpack.c.l.b16 %v318
    %v1453 = vunpack.c.h.b16 %v318
    %v1454 = vunpack.c.l.b16 %v319
    %v1455 = vunpack.c.h.b16 %v319
    %v1456 = vunpack.c.l.b16 %v320
    %v1457 = vunpack.c.h.b16 %v320
    %v1458 = vunpack.c.l.b16 %v321
    %v1459 = vunpack.c.h.b16 %v321
    %v1460 = vunpack.c.l.b16 %v322
    %v1461 = vunpack.c.h.b16 %v322
    %v1462 = vunpack.c.l.b16 %v323
    %v1463 = vunpack.c.h.b16 %v323
    %v1464 = vunpack.c.l.b16 %v324
    %v1465 = vunpack.c.h.b16 %v324
    %v1466 = vunpack.c.l.b16 %v325
    %v1467 = vunpack.c.h.b16 %v325
    %v1468 = vunpack.c.l.b16 %v326
    %v1469 = vunpack.c.h.b16 %v326
    %v1470 = vunpack.c.l.b16 %v327
    %v1471 = vunpack.c.h.b16 %v327
    %v1472 = vunpack.c.l.b16 %v328
    %v1473 = vunpack.c.h.b16 %v328
    %v1474 = vunpack.c.l.b16 %v329
    %v1475 = vunpack.c.h.b16 %v329
    %v1476 = vunpack.c.l.b16 %v330
    %v1477 = vunpack.c.h.b16 %v330
    %v1478 = vunpack.c.l.b16 %v331
    %v1479 = vunpack.c.h.b16 %v331
    %v1480 = vunpack.c.l.b16 %v332
    %v1481 = vunpack.c.h.b16 %v332
    %v1482 = vunpack.c.l.b16 %v333
    %v1483 = vunpack.c.h.b16 %v333
    %v1484 = vunpack.c.l.b16 %v334
    %v1485 = vunpack.c.h.b16 %v334
    %v1486 = vunpack.c.l.b16 %v335
    %v1487 = vunpack.c.h.b16 %v335
    %v1488 = vunpack.c.l.b16 %v336
    %v1489 = vunpack.c.h.b16 %v336
    %v1490 = vunpack.c.l.b16 %v337
    %v1491 = vunpack.c.h.b16 %v337
    %v1492 = vunpack.c.l.b16 %v338
    %v1493 = vunpack.c.h.b16 %v338
    %v1494 = vunpack.c.l.b16 %v339
    %v1495 = vunpack.c.h.b16 %v339
    %v1496 = vunpack.c.l.b16 %v340
    %v1497 = vunpack.c.h.b16 %v340
    %v1498 = vunpack.c.l.b16 %v341
    %v1499 = vunpack.c.h.b16 %v341
    %v1500 = vunpack.c.l.b16 %v342
    %v1501 = vunpack.c.h.b16 %v342
    %v1502 = vunpack.c.l.b16 %v343
    %v1503 = vunpack.c.h.b16 %v343
    %v1504 = vunpack.c.l.b16 %v344
    %v1505 = vunpack.c.h.b16 %v344
    %v1506 = vunpack.c.l.b16 %v345
    %v1507 = vunpack.c.h.b16 %v345
    %v1508 = vunpack.c.l.b16 %v346
    %v1509 = vunpack.c.h.b16 %v346
    %v1510 = vunpack.c.l.b16 %v347
    %v1511 = vunpack.c.h.b16 %v347
    %v1512 = vunpack.c.l.b16 %v348
    %v1513 = vunpack.c.h.b16 %v348
    %v1514 = vunpack.c.l.b16 %v349
    %v1515 = vunpack.c.h.b16 %v349
    %v1516 = vunpack.c.l.b16 %v350
    %v1517 = vunpack.c.h.b16 %v350
    %v1518 = vunpack.c.l.b16 %v351
    %v1519 = vunpack.c.h.b16 %v351
    %v1520 = vunpack.c.l.b16 %v352
    %v1521 = vunpack.c.h.b16 %v352
    %v1522 = vunpack.c.l.b16 %v353
    %v1523 = vunpack.c.h.b16 %v353
    %v1524 = vunpack.c.l.b16 %v354
    %v1525 = vunpack.c.h.b16 %v354
    %v1526 = vunpack.c.l.b16 %v355
    %v1527 = vunpack.c.h.b16 %v355
    %v1528 = vunpack.c.l.b16 %v356
    %v1529 = vunpack.c.h.b16 %v356
    %v1530 = vunpack.c.l.b16 %v357
    %v1531 = vunpack.c.h.b16 %v357
    %v1532 = vunpack.c.l.b16 %v358
    %v1533 = vunpack.c.h.b16 %v358
    %v1534 = vunpack.c.l.b16 %v359
    %v1535 = vunpack.c.h.b16 %v359
    %v1536 = vunpack.c.l.b16 %v360
    %v1537 = vunpack.c.h.b16 %v360
    %v1538 = vunpack.c.l.b16 %v361
    %v1539 = vunpack.c.h.b16 %v361
    %v1540 = vunpack.c.l.b16 %v362
    %v1541 = vunpack.c.h.b16 %v362
    %v1542 = vunpack.c.l.b16 %v363
    %v1543 = vunpack.c.h.b16 %v363
    %v1544 = vunpack.c.l.b16 %v364
    %v1545 = vunpack.c.h.b16 %v364
    %v1546 = vunpack.c.l.b16 %v365
    %v1547 = vunpack.c.h.b16 %v365
    %v1548 = vunpack.c.l.b16 %v366
    %v1549 = vunpack.c.h.b16 %v366
    %v1550 = vunpack.c.l.b16 %v367
    %v1551 = vunpack.c.h.b16 %v367
    %v1552 = vunpack.c.l.b16 %v368
    %v1553 = vunpack.c.h.b16 %v368
    %v1554 = vunpack.c.l.b16 %v369
    %v1555 = vunpack.c.h.b16 %v369
    %v1556 = vunpack.c.l.b16 %v370
    %v1557 = vunpack.c.h.b16 %v370
    %v1558 = vunpack.c.l.b16 %v371
    %v1559 = vunpack.c.h.b16 %v371
    %v1560 = vunpack.c.l.b16 %v372
    %v1561 = vunpack.c.h.b16 %v372
    %v1562 = vunpack.c.l.b16 %v373
    %v1563 = vunpack.c.h.b16 %v373
    %v1564 = vunpack.c.l.b16 %v374
    %v1565 = vunpack.c.h.b16 %v374
    %v1566 = vunpack.c.l.b16 %v375
    %v1567 = vunpack.c.h.b16 %v375
    %v1568 = vunpack.c.l.b16 %v376
    %v1569 = vunpack.c.h.b16 %v376
    %v1570 = vunpack.c.l.b16 %v377
    %v1571 = vunpack.c.h.b16 %v377
    %v1572 = vunpack.c.l.b16 %v378
    %v1573 = vunpack.c.h.b16 %v378
    %v1574 = vunpack.c.l.b16 %v379
    %v1575 = vunpack.c.h.b16 %v379
    %v1576 = vunpack.c.l.b16 %v380
    %v1577 = vunpack.c.h.b16 %v380
    %v1578 = vunpack.c.l.b16 %v381
    %v1579 = vunpack.c.h.b16 %v381
    %v1580 = vunpack.c.l.b16 %v382
    %v1581 = vunpack.c.h.b16 %v382
    %v1582 = vunpack.c.l.b16 %v383
    %v1583 = vunpack.c.h.b16 %v383
    %v1584 = vunpack.c.l.b16 %v384
    %v1585 = vunpack.c.h.b16 %v384
    %v1586 = vunpack.c.l.b16 %v385
    %v1587 = vunpack.c.h.b16 %v385
    %v1588 = vunpack.c.l.b16 %v386
    %v1589 = vunpack.c.h.b16 %v386
    %v1590 = vunpack.c.l.b16 %v387
    %v1591 = vunpack.c.h.b16 %v387
    %v1592 = vunpack.c.l.b16 %v388
    %v1593 = vunpack.c.h.b16 %v388
    %v1594 = vunpack.c.l.b16 %v389
    %v1595 = vunpack.c.h.b16 %v389
    %v1596 = vunpack.c.l.b16 %v390
    %v1597 = vunpack.c.h.b16 %v390
    %v1598 = vunpack.c.l.b16 %v391
    %v1599 = vunpack.c.h.b16 %v391
    %v1600 = vunpack.c.l.b16 %v392
    %v1601 = vunpack.c.h.b16 %v392
    %v1602 = vunpack.c.l.b16 %v393
    %v1603 = vunpack.c.h.b16 %v393
    %v1604 = vunpack.c.l.b16 %v394
    %v1605 = vunpack.c.h.b16 %v394
    %v1606 = vunpack.c.l.b16 %v395
    %v1607 = vunpack.c.h.b16 %v395
    %v1608 = vunpack.c.l.b16 %v396
    %v1609 = vunpack.c.h.b16 %v396
    %v1610 = vunpack.c.l.b16 %v397
    %v1611 = vunpack.c.h.b16 %v397
    %v1612 = vunpack.c.l.b16 %v398
    %v1613 = vunpack.c.h.b16 %v398
    %v1614 = vunpack.c.l.b16 %v399
    %v1615 = vunpack.c.h.b16 %v399
    %v1616 = vunpack.c.l.b16 %v400
    %v1617 = vunpack.c.h.b16 %v400
    %v1618 = vunpack.c.l.b16 %v401
    %v1619 = vunpack.c.h.b16 %v401
    %v1620 = vunpack.c.l.b16 %v402
    %v1621 = vunpack.c.h.b16 %v402
    %v1622 = vunpack.c.l.b16 %v403
    %v1623 = vunpack.c.h.b16 %v403
    %v1624 = vunpack.c.l.b16 %v404
    %v1625 = vunpack.c.h.b16 %v404
    %v1626 = vunpack.c.l.b16 %v405
    %v1627 = vunpack.c.h.b16 %v405
    %v1628 = vunpack.c.l.b16 %v406
    %v1629 = vunpack.c.h.b16 %v406
    %v1630 = vunpack.c.l.b16 %v407
    %v1631 = vunpack.c.h.b16 %v407
    %v1632 = vunpack.c.l.b16 %v408
    %v1633 = vunpack.c.h.b16 %v408
    %v1634 = vunpack.c.l.b16 %v409
    %v1635 = vunpack.c.h.b16 %v409
    %v1636 = vunpack.c.l.b16 %v410
    %v1637 = vunpack.c.h.b16 %v410
    %v1638 = vunpack.c.l.b16 %v411
    %v1639 = vunpack.c.h.b16 %v411
    %v1640 = vunpack.c.l.b16 %v412
    %v1641 = vunpack.c.h.b16 %v412
    %v1642 = vunpack.c.l.b16 %v413
    %v1643 = vunpack.c.h.b16 %v413
    %v1644 = vunpack.c.l.b16 %v414
    %v1645 = vunpack.c.h.b16 %v414
    %v1646 = vunpack.c.l.b16 %v415
    %v1647 = vunpack.c.h.b16 %v415
    %v1648 = vunpack.c.l.b16 %v416
    %v1649 = vunpack.c.h.b16 %v416
    %v1650 = vunpack.c.l.b16 %v417
    %v1651 = vunpack.c.h.b16 %v417
    %v1652 = vunpack.c.l.b16 %v418
    %v1653 = vunpack.c.h.b16 %v418
    %v1654 = vunpack.c.l.b16 %v419
    %v1655 = vunpack.c.h.b16 %v419
    %v1656 = vunpack.c.l.b16 %v420
    %v1657 = vunpack.c.h.b16 %v420
    %v1658 = vunpack.c.l.b16 %v421
    %v1659 = vunpack.c.h.b16 %v421
    %v1660 = vunpack.c.l.b16 %v422
    %v1661 = vunpack.c.h.b16 %v422
    %v1662 = vunpack.c.l.b16 %v423
    %v1663 = vunpack.c.h.b16 %v423
    %v1664 = vunpack.c.l.b16 %v424
    %v1665 = vunpack.c.h.b16 %v424
    %v1666 = vunpack.c.l.b16 %v425
    %v1667 = vunpack.c.h.b16 %v425
    %v1668 = vunpack.c.l.b16 %v426
    %v1669 = vunpack.c.h.b16 %v426
    %v1670 = vunpack.c.l.b16 %v427
    %v1671 = vunpack.c.h.b16 %v427
    %v1672 = vunpack.c.l.b16 %v428
    %v1673 = vunpack.c.h.b16 %v428
    %v1674 = vunpack.c.l.b16 %v429
    %v1675 = vunpack.c.h.b16 %v429
    %v1676 = vunpack.c.l.b16 %v430
    %v1677 = vunpack.c.h.b16 %v430
    %v1678 = vunpack.c.l.b16 %v431
    %v1679 = vunpack.c.h.b16 %v431
    %v1680 = vunpack.c.l.b16 %v432
    %v1681 = vunpack.c.h.b16 %v432
    %v1682 = vunpack.c.l.b16 %v433
    %v1683 = vunpack.c.h.b16 %v433
    %v1684 = vunpack.c.l.b16 %v434
    %v1685 = vunpack.c.h.b16 %v434
    %v1686 = vunpack.c.l.b16 %v435
    %v1687 = vunpack.c.h.b16 %v435
    %v1688 = vunpack.c.l.b16 %v436
    %v1689 = vunpack.c.h.b16 %v436
    %v1690 = vunpack.c.l.b16 %v437
    %v1691 = vunpack.c.h.b16 %v437
    %v1692 = vunpack.c.l.b16 %v438
    %v1693 = vunpack.c.h.b16 %v438
    %v1694 = vunpack.c.l.b16 %v439
    %v1695 = vunpack.c.h.b16 %v439
    %v1696 = vunpack.c.l.b16 %v440
    %v1697 = vunpack.c.h.b16 %v440
    %v1698 = vunpack.c.l.b16 %v441
    %v1699 = vunpack.c.h.b16 %v441
    %v1700 = vunpack.c.l.b16 %v442
    %v1701 = vunpack.c.h.b16 %v442
    %v1702 = vunpack.c.l.b16 %v443
    %v1703 = vunpack.c.h.b16 %v443
    %v1704 = vunpack.c.l.b16 %v444
    %v1705 = vunpack.c.h.b16 %v444
    %v1706 = vunpack.c.l.b16 %v445
    %v1707 = vunpack.c.h.b16 %v445
    %v1708 = vunpack.c.l.b16 %v446
    %v1709 = vunpack.c.h.b16 %v446
    %v1710 = vunpack.c.l.b16 %v447
    %v1711 = vunpack.c.h.b16 %v447
    %v1712 = vunpack.c.l.b16 %v448
    %v1713 = vunpack.c.h.b16 %v448
    %v1714 = vunpack.c.l.b16 %v449
    %v1715 = vunpack.c.h.b16 %v449
    %v1716 = vunpack.c.l.b16 %v450
    %v1717 = vunpack.c.h.b16 %v450
    %v1718 = vunpack.c.l.b16 %v451
    %v1719 = vunpack.c.h.b16 %v451
    %v1720 = vunpack.c.l.b16 %v452
    %v1721 = vunpack.c.h.b16 %v452
    %v1722 = vunpack.c.l.b16 %v453
    %v1723 = vunpack.c.h.b16 %v453
    %v1724 = vunpack.c.l.b16 %v454
    %v1725 = vunpack.c.h.b16 %v454
    %v1726 = vunpack.c.l.b16 %v455
    %v1727 = vunpack.c.h.b16 %v455
    %v1728 = vunpack.c.l.b16 %v456
    %v1729 = vunpack.c.h.b16 %v456
    %v1730 = vunpack.c.l.b16 %v457
    %v1731 = vunpack.c.h.b16 %v457
    %v1732 = vunpack.c.l.b16 %v458
    %v1733 = vunpack.c.h.b16 %v458
    %v1734 = vunpack.c.l.b16 %v459
    %v1735 = vunpack.c.h.b16 %v459
    %v1736 = vunpack.c.l.b16 %v460
    %v1737 = vunpack.c.h.b16 %v460
    %v1738 = vunpack.c.l.b16 %v461
    %v1739 = vunpack.c.h.b16 %v461
    %v1740 = vunpack.c.l.b16 %v462
    %v1741 = vunpack.c.h.b16 %v462
    %v1742 = vunpack.c.l.b16 %v463
    %v1743 = vunpack.c.h.b16 %v463
    %v1744 = vunpack.c.l.b16 %v464
    %v1745 = vunpack.c.h.b16 %v464
    %v1746 = vunpack.c.l.b16 %v465
    %v1747 = vunpack.c.h.b16 %v465
    %v1748 = vunpack.c.l.b16 %v466
    %v1749 = vunpack.c.h.b16 %v466
    %v1750 = vunpack.c.l.b16 %v467
    %v1751 = vunpack.c.h.b16 %v467
    %v1752 = vunpack.c.l.b16 %v468
    %v1753 = vunpack.c.h.b16 %v468
    %v1754 = vunpack.c.l.b16 %v469
    %v1755 = vunpack.c.h.b16 %v469
    %v1756 = vunpack.c.l.b16 %v470
    %v1757 = vunpack.c.h.b16 %v470
    %v1758 = vunpack.c.l.b16 %v471
    %v1759 = vunpack.c.h.b16 %v471
    %v1760 = vunpack.c.l.b16 %v472
    %v1761 = vunpack.c.h.b16 %v472
    %v1762 = vunpack.c.l.b16 %v473
    %v1763 = vunpack.c.h.b16 %v473
    %v1764 = vunpack.c.l.b16 %v474
    %v1765 = vunpack.c.h.b16 %v474
    %v1766 = vunpack.c.l.b16 %v475
    %v1767 = vunpack.c.h.b16 %v475
    %v1768 = vunpack.c.l.b16 %v476
    %v1769 = vunpack.c.h.b16 %v476
    %v1770 = vunpack.c.l.b16 %v477
    %v1771 = vunpack.c.h.b16 %v477
    %v1772 = vunpack.c.l.b16 %v478
    %v1773 = vunpack.c.h.b16 %v478
    %v1774 = vunpack.c.l.b16 %v479
    %v1775 = vunpack.c.h.b16 %v479
    %v1776 = vunpack.c.l.b16 %v480
    %v1777 = vunpack.c.h.b16 %v480
    %v1778 = vunpack.c.l.b16 %v481
    %v1779 = vunpack.c.h.b16 %v481
    %v1780 = vunpack.c.l.b16 %v482
    %v1781 = vunpack.c.h.b16 %v482
    %v1782 = vunpack.c.l.b16 %v483
    %v1783 = vunpack.c.h.b16 %v483
    %v1784 = vunpack.c.l.b16 %v484
    %v1785 = vunpack.c.h.b16 %v484
    %v1786 = vunpack.c.l.b16 %v485
    %v1787 = vunpack.c.h.b16 %v485
    %v1788 = vunpack.c.l.b16 %v486
    %v1789 = vunpack.c.h.b16 %v486
    %v1790 = vunpack.c.l.b16 %v487
    %v1791 = vunpack.c.h.b16 %v487
    %v1792 = vunpack.c.l.b16 %v488
    %v1793 = vunpack.c.h.b16 %v488
    %v1794 = vunpack.c.l.b16 %v489
    %v1795 = vunpack.c.h.b16 %v489
    %v1796 = vunpack.c.l.b16 %v490
    %v1797 = vunpack.c.h.b16 %v490
    %v1798 = vunpack.c.l.b16 %v491
    %v1799 = vunpack.c.h.b16 %v491
    %v1800 = vunpack.c.l.b16 %v492
    %v1801 = vunpack.c.h.b16 %v492
    %v1802 = vunpack.c.l.b16 %v493
    %v1803 = vunpack.c.h.b16 %v493
    %v1804 = vunpack.c.l.b16 %v494
    %v1805 = vunpack.c.h.b16 %v494
    %v1806 = vunpack.c.l.b16 %v495
    %v1807 = vunpack.c.h.b16 %v495
    %v1808 = vunpack.c.l.b16 %v496
    %v1809 = vunpack.c.h.b16 %v496
    %v1810 = vunpack.c.l.b16 %v497
    %v1811 = vunpack.c.h.b16 %v497
    %v1812 = vunpack.c.l.b16 %v498
    %v1813 = vunpack.c.h.b16 %v498
    %v1814 = vunpack.c.l.b16 %v499
    %v1815 = vunpack.c.h.b16 %v499
    %v1816 = vunpack.c.l.b16 %v500
    %v1817 = vunpack.c.h.b16 %v500
    %v1818 = vunpack.c.l.b16 %v501
    %v1819 = vunpack.c.h.b16 %v501
    %v1820 = vunpack.c.l.b16 %v502
    %v1821 = vunpack.c.h.b16 %v502
    %v1822 = vunpack.c.l.b16 %v503
    %v1823 = vunpack.c.h.b16 %v503
    %v1824 = vunpack.c.l.b16 %v504
    %v1825 = vunpack.c.h.b16 %v504
    %v1826 = vunpack.c.l.b16 %v505
    %v1827 = vunpack.c.h.b16 %v505
    %v1828 = vunpack.c.l.b16 %v506
    %v1829 = vunpack.c.h.b16 %v506
    %v1830 = vunpack.c.l.b16 %v507
    %v1831 = vunpack.c.h.b16 %v507
    %v1832 = vunpack.c.l.b16 %v508
    %v1833 = vunpack.c.h.b16 %v508
    %v1834 = vunpack.c.l.b16 %v509
    %v1835 = vunpack.c.h.b16 %v509
    %v1836 = vunpack.c.l.b16 %v510
    %v1837 = vunpack.c.h.b16 %v510
    %v1838 = vunpack.c.l.b16 %v511
    %v1839 = vunpack.c.h.b16 %v511
    %v1840 = vunpack.c.l.b16 %v512
    %v1841 = vunpack.c.h.b16 %v512
    %v1842 = vunpack.c.l.b16 %v513
    %v1843 = vunpack.c.h.b16 %v513
    %v1844 = vunpack.c.l.b16 %v514
    %v1845 = vunpack.c.h.b16 %v514
    %v1846 = vunpack.c.l.b16 %v515
    %v1847 = vunpack.c.h.b16 %v515
    %v1848 = vunpack.c.l.b16 %v516
    %v1849 = vunpack.c.h.b16 %v516
    %v1850 = vunpack.c.l.b16 %v517
    %v1851 = vunpack.c.h.b16 %v517
    %v1852 = vunpack.c.l.b16 %v518
    %v1853 = vunpack.c.h.b16 %v518
    %v1854 = vunpack.c.l.b16 %v519
    %v1855 = vunpack.c.h.b16 %v519
    %v1856 = vunpack.c.l.b16 %v520
    %v1857 = vunpack.c.h.b16 %v520
    %v1858 = vunpack.c.l.b16 %v521
    %v1859 = vunpack.c.h.b16 %v521
    %v1860 = vunpack.c.l.b16 %v522
    %v1861 = vunpack.c.h.b16 %v522
    %v1862 = vunpack.c.l.b16 %v523
    %v1863 = vunpack.c.h.b16 %v523
    %v1864 = vunpack.c.l.b16 %v524
    %v1865 = vunpack.c.h.b16 %v524
    %v1866 = vunpack.c.l.b16 %v525
    %v1867 = vunpack.c.h.b16 %v525
    %v1868 = vunpack.c.l.b16 %v526
    %v1869 = vunpack.c.h.b16 %v526
    %v1870 = vunpack.c.l.b16 %v527
    %v1871 = vunpack.c.h.b16 %v527
    %v1872 = vunpack.c.l.b16 %v528
    %v1873 = vunpack.c.h.b16 %v528
    %v1874 = vunpack.c.l.b16 %v529
    %v1875 = vunpack.c.h.b16 %v529
    %v1876 = vunpack.c.l.b16 %v530
    %v1877 = vunpack.c.h.b16 %v530
    %v1878 = vunpack.c.l.b16 %v531
    %v1879 = vunpack.c.h.b16 %v531
    %v1880 = vunpack.c.l.b16 %v532
    %v1881 = vunpack.c.h.b16 %v532
    %v1882 = vunpack.c.l.b16 %v533
    %v1883 = vunpack.c.h.b16 %v533
    %v1884 = vunpack.c.l.b16 %v534
    %v1885 = vunpack.c.h.b16 %v534
    %v1886 = vunpack.c.l.b16 %v535
    %v1887 = vunpack.c.h.b16 %v535
    %v1888 = vunpack.c.l.b16 %v536
    %v1889 = vunpack.c.h.b16 %v536
    %v1890 = vunpack.c.l.b16 %v537
    %v1891 = vunpack.c.h.b16 %v537
    %v1892 = vunpack.c.l.b16 %v538
    %v1893 = vunpack.c.h.b16 %v538
    %v1894 = vunpack.c.l.b16 %v539
    %v1895 = vunpack.c.h.b16 %v539
    %v1896 = vunpack.c.l.b16 %v540
    %v1897 = vunpack.c.h.b16 %v540
    %v1898 = vunpack.c.l.b16 %v541
    %v1899 = vunpack.c.h.b16 %v541
    %v1900 = vunpack.c.l.b16 %v542
    %v1901 = vunpack.c.h.b16 %v542
    %v1902 = vunpack.c.l.b16 %v543
    %v1903 = vunpack.c.h.b16 %v543
    %v1904 = vunpack.c.l.b16 %v544
    %v1905 = vunpack.c.h.b16 %v544
    %v1906 = vunpack.c.l.b16 %v545
    %v1907 = vunpack.c.h.b16 %v545
    %v1908 = vunpack.c.l.b16 %v546
    %v1909 = vunpack.c.h.b16 %v546
    %v1910 = vunpack.c.l.b16 %v547
    %v1911 = vunpack.c.h.b16 %v547
    %v1912 = vunpack.c.l.b16 %v548
    %v1913 = vunpack.c.h.b16 %v548
    %v1914 = vunpack.c.l.b16 %v549
    %v1915 = vunpack.c.h.b16 %v549
    %v1916 = vunpack.c.l.b16 %v550
    %v1917 = vunpack.c.h.b16 %v550
    %v1918 = vunpack.c.l.b16 %v551
    %v1919 = vunpack.c.h.b16 %v551
    %v1920 = vunpack.c.l.b16 %v552
    %v1921 = vunpack.c.h.b16 %v552
    %v1922 = vunpack.c.l.b16 %v553
    %v1923 = vunpack.c.h.b16 %v553
    %v1924 = vunpack.c.l.b16 %v554
    %v1925 = vunpack.c.h.b16 %v554
    %v1926 = vunpack.c.l.b16 %v555
    %v1927 = vunpack.c.h.b16 %v555
    %v1928 = vunpack.c.l.b16 %v556
    %v1929 = vunpack.c.h.b16 %v556
    %v1930 = vunpack.c.l.b16 %v557
    %v1931 = vunpack.c.h.b16 %v557
    %v1932 = vunpack.c.l.b16 %v558
    %v1933 = vunpack.c.h.b16 %v558
    %v1934 = vunpack.c.l.b16 %v559
    %v1935 = vunpack.c.h.b16 %v559
    %v1936 = vunpack.c.l.b16 %v560
    %v1937 = vunpack.c.h.b16 %v560
    %v1938 = vunpack.c.l.b16 %v561
    %v1939 = vunpack.c.h.b16 %v561
    %v1940 = vunpack.c.l.b16 %v562
    %v1941 = vunpack.c.h.b16 %v562
    %v1942 = vunpack.c.l.b16 %v563
    %v1943 = vunpack.c.h.b16 %v563
    %v1944 = vunpack.c.l.b16 %v564
    %v1945 = vunpack.c.h.b16 %v564
    %v1946 = vunpack.c.l.b16 %v565
    %v1947 = vunpack.c.h.b16 %v565
    %v1948 = vunpack.c.l.b16 %v566
    %v1949 = vunpack.c.h.b16 %v566
    %v1950 = vunpack.c.l.b16 %v567
    %v1951 = vunpack.c.h.b16 %v567
    %v1952 = vunpack.c.l.b16 %v568
    %v1953 = vunpack.c.h.b16 %v568
    %v1954 = vunpack.c.l.b16 %v569
    %v1955 = vunpack.c.h.b16 %v569
    %v1956 = vunpack.c.l.b16 %v570
    %v1957 = vunpack.c.h.b16 %v570
    %v1958 = vunpack.c.l.b16 %v571
    %v1959 = vunpack.c.h.b16 %v571
    %v1960 = vunpack.c.l.b16 %v572
    %v1961 = vunpack.c.h.b16 %v572
    %v1962 = vunpack.c.l.b16 %v573
    %v1963 = vunpack.c.h.b16 %v573
    %v1964 = vunpack.c.l.b16 %v574
    %v1965 = vunpack.c.h.b16 %v574
    %v1966 = vunpack.c.l.b16 %v575
    %v1967 = vunpack.c.h.b16 %v575
    %v1968 = vunpack.c.l.b16 %v576
    %v1969 = vunpack.c.h.b16 %v576
    %v1970 = vunpack.c.l.b16 %v577
    %v1971 = vunpack.c.h.b16 %v577
    %v1972 = vunpack.c.l.b16 %v578
    %v1973 = vunpack.c.h.b16 %v578
    %v1974 = vunpack.c.l.b16 %v579
    %v1975 = vunpack.c.h.b16 %v579
    %v1976 = vunpack.c.l.b16 %v580
    %v1977 = vunpack.c.h.b16 %v580
    %v1978 = vunpack.c.l.b16 %v581
    %v1979 = vunpack.c.h.b16 %v581
    %v1980 = vunpack.c.l.b16 %v582
    %v1981 = vunpack.c.h.b16 %v582
    %v1982 = vunpack.c.l.b16 %v583
    %v1983 = vunpack.c.h.b16 %v583
    %v1984 = vunpack.c.l.b16 %v584
    %v1985 = vunpack.c.h.b16 %v584
    %v1986 = vunpack.c.l.b16 %v585
    %v1987 = vunpack.c.h.b16 %v585
    %v1988 = vunpack.c.l.b16 %v586
    %v1989 = vunpack.c.h.b16 %v586
    %v1990 = vunpack.c.l.b16 %v587
    %v1991 = vunpack.c.h.b16 %v587
    %v1992 = vunpack.c.l.b16 %v588
    %v1993 = vunpack.c.h.b16 %v588
    %v1994 = vunpack.c.l.b16 %v589
    %v1995 = vunpack.c.h.b16 %v589
    %v1996 = vunpack.c.l.b16 %v590
    %v1997 = vunpack.c.h.b16 %v590
    %v1998 = vunpack.c.l.b16 %v591
    %v1999 = vunpack.c.h.b16 %v591
    %v2000 = vunpack.c.l.b16 %v592
    %v2001 = vunpack.c.h.b16 %v592
    %v2002 = vunpack.c.l.b16 %v593
    %v2003 = vunpack.c.h.b16 %v593
    %v2004 = vunpack.c.l.b16 %v594
    %v2005 = vunpack.c.h.b16 %v594
    %v2006 = vunpack.c.l.b16 %v595
    %v2007 = vunpack.c.h.b16 %v595
    %v2008 = vunpack.c.l.b16 %v596
    %v2009 = vunpack.c.h.b16 %v596
    %v2010 = vunpack.c.l.b16 %v597
    %v2011 = vunpack.c.h.b16 %v597
    %v2012 = vunpack.c.l.b16 %v598
    %v2013 = vunpack.c.h.b16 %v598
    %v2014 = vunpack.c.l.b16 %v599
    %v2015 = vunpack.c.h.b16 %v599
    %v2016 = vunpack.c.l.b16 %v600
    %v2017 = vunpack.c.h.b16 %v600
    %v2018 = vunpack.c.l.b16 %v601
    %v2019 = vunpack.c.h.b16 %v601
    %v2020 = vunpack.c.l.b16 %v602
    %v2021 = vunpack.c.h.b16 %v602
    %v2022 = vunpack.c.l.b16 %v603
    %v2023 = vunpack.c.h.b16 %v603
    %v2024 = vunpack.c.l.b16 %v604
    %v2025 = vunpack.c.h.b16 %v604
    %v2026 = vunpack.c.l.b16 %v605
    %v2027 = vunpack.c.h.b16 %v605
    %v2028 = vunpack.c.l.b16 %v606
    %v2029 = vunpack.c.h.b16 %v606
    %v2030 = vunpack.c.l.b16 %v607
    %v2031 = vunpack.c.h.b16 %v607
    %v2032 = vunpack.c.l.b16 %v608
    %v2033 = vunpack.c.h.b16 %v608
    %v2034 = vunpack.c.l.b16 %v609
    %v2035 = vunpack.c.h.b16 %v609
    %v2036 = vunpack.c.l.b16 %v610
    %v2037 = vunpack.c.h.b16 %v610
    %v2038 = vunpack.c.l.b16 %v611
    %v2039 = vunpack.c.h.b16 %v611
    %v2040 = vunpack.c.l.b16 %v612
    %v2041 = vunpack.c.h.b16 %v612
    %v2042 = vunpack.c.l.b16 %v613
    %v2043 = vunpack.c.h.b16 %v613
    %v2044 = vunpack.c.l.b16 %v614
    %v2045 = vunpack.c.h.b16 %v614
    %v2046 = vunpack.c.l.b16 %v615
    %v2047 = vunpack.c.h.b16 %v615
    %v2048 = vunpack.c.l.b16 %v616
    %v2049 = vunpack.c.h.b16 %v616
    %v2050 = vunpack.c.l.b16 %v617
    %v2051 = vunpack.c.h.b16 %v617
    %v2052 = vunpack.c.l.b16 %v618
    %v2053 = vunpack.c.h.b16 %v618
    %v2054 = vunpack.c.l.b16 %v619
    %v2055 = vunpack.c.h.b16 %v619
    %v2056 = vunpack.c.l.b16 %v620
    %v2057 = vunpack.c.h.b16 %v620
    %v2058 = vunpack.c.l.b16 %v621
    %v2059 = vunpack.c.h.b16 %v621
    %v2060 = vunpack.c.l.b16 %v622
    %v2061 = vunpack.c.h.b16 %v622
    %v2062 = vunpack.c.l.b16 %v623
    %v2063 = vunpack.c.h.b16 %v623
    %v2064 = vunpack.c.l.b16 %v624
    %v2065 = vunpack.c.h.b16 %v624
    %v2066 = vunpack.c.l.b16 %v625
    %v2067 = vunpack.c.h.b16 %v625
    %v2068 = vunpack.c.l.b16 %v626
    %v2069 = vunpack.c.h.b16 %v626
    %v2070 = vunpack.c.l.b16 %v627
    %v2071 = vunpack.c.h.b16 %v627
    %v2072 = vunpack.c.l.b16 %v628
    %v2073 = vunpack.c.h.b16 %v628
    %v2074 = vunpack.c.l.b16 %v629
    %v2075 = vunpack.c.h.b16 %v629
    %v2076 = vunpack.c.l.b16 %v630
    %v2077 = vunpack.c.h.b16 %v630
    %v2078 = vunpack.c.l.b16 %v631
    %v2079 = vunpack.c.h.b16 %v631
    %v2080 = vunpack.c.l.b16 %v632
    %v2081 = vunpack.c.h.b16 %v632
    %v2082 = vunpack.c.l.b16 %v633
    %v2083 = vunpack.c.h.b16 %v633
    %v2084 = vunpack.c.l.b16 %v634
    %v2085 = vunpack.c.h.b16 %v634
    %v2086 = vunpack.c.l.b16 %v635
    %v2087 = vunpack.c.h.b16 %v635
    %v2088 = vunpack.c.l.b16 %v636
    %v2089 = vunpack.c.h.b16 %v636
    %v2090 = vunpack.c.l.b16 %v637
    %v2091 = vunpack.c.h.b16 %v637
    %v2092 = vunpack.c.l.b16 %v638
    %v2093 = vunpack.c.h.b16 %v638
    %v2094 = vunpack.c.l.b16 %v639
    %v2095 = vunpack.c.h.b16 %v639
    %v2096 = vunpack.c.l.b16 %v640
    %v2097 = vunpack.c.h.b16 %v640
    %v2098 = vunpack.c.l.b16 %v641
    %v2099 = vunpack.c.h.b16 %v641
    %v2100 = vunpack.c.l.b16 %v642
    %v2101 = vunpack.c.h.b16 %v642
    %v2102 = vunpack.c.l.b16 %v643
    %v2103 = vunpack.c.h.b16 %v643
    %v2104 = vunpack.c.l.b16 %v644
    %v2105 = vunpack.c.h.b16 %v644
    %v2106 = vunpack.c.l.b16 %v645
    %v2107 = vunpack.c.h.b16 %v645
    %v2108 = vunpack.c.l.b16 %v646
    %v2109 = vunpack.c.h.b16 %v646
    %v2110 = vunpack.c.l.b16 %v647
    %v2111 = vunpack.c.h.b16 %v647
    %v2112 = vunpack.c.l.b16 %v648
    %v2113 = vunpack.c.h.b16 %v648
    %v2114 = vunpack.c.l.b16 %v649
    %v2115 = vunpack.c.h.b16 %v649
    %v2116 = vunpack.c.l.b16 %v650
    %v2117 = vunpack.c.h.b16 %v650
    %v2118 = vunpack.c.l.b16 %v651
    %v2119 = vunpack.c.h.b16 %v651
    %v2120 = vunpack.c.l.b16 %v652
    %v2121 = vunpack.c.h.b16 %v652
    %v2122 = vunpack.c.l.b16 %v653
    %v2123 = vunpack.c.h.b16 %v653
    %v2124 = vunpack.c.l.b16 %v654
    %v2125 = vunpack.c.h.b16 %v654
    %v2126 = vunpack.c.l.b16 %v655
    %v2127 = vunpack.c.h.b16 %v655
    %v2128 = vunpack.c.l.b16 %v656
    %v2129 = vunpack.c.h.b16 %v656
    %v2130 = vunpack.c.l.b16 %v657
    %v2131 = vunpack.c.h.b16 %v657
    %v2132 = vunpack.c.l.b16 %v658
    %v2133 = vunpack.c.h.b16 %v658
    %v2134 = vunpack.c.l.b16 %v659
    %v2135 = vunpack.c.h.b16 %v659
    %v2136 = vunpack.c.l.b16 %v660
    %v2137 = vunpack.c.h.b16 %v660
    %v2138 = vunpack.c.l.b16 %v661
    %v2139 = vunpack.c.h.b16 %v661
    %v2140 = vunpack.c.l.b16 %v662
    %v2141 = vunpack.c.h.b16 %v662
    %v2142 = vunpack.c.l.b16 %v663
    %v2143 = vunpack.c.h.b16 %v663
    %v2144 = vunpack.c.l.b16 %v664
    %v2145 = vunpack.c.h.b16 %v664
    %v2146 = vunpack.c.l.b16 %v665
    %v2147 = vunpack.c.h.b16 %v665
    %v2148 = vunpack.c.l.b16 %v666
    %v2149 = vunpack.c.h.b16 %v666
    %v2150 = vunpack.c.l.b16 %v667
    %v2151 = vunpack.c.h.b16 %v667
    %v2152 = vunpack.c.l.b16 %v668
    %v2153 = vunpack.c.h.b16 %v668
    %v2154 = vunpack.c.l.b16 %v669
    %v2155 = vunpack.c.h.b16 %v669
    %v2156 = vunpack.c.l.b16 %v670
    %v2157 = vunpack.c.h.b16 %v670
    %v2158 = vunpack.c.l.b16 %v671
    %v2159 = vunpack.c.h.b16 %v671
    %v2160 = vunpack.c.l.b16 %v672
    %v2161 = vunpack.c.h.b16 %v672
    %v2162 = vunpack.c.l.b16 %v673
    %v2163 = vunpack.c.h.b16 %v673
    %v2164 = vunpack.c.l.b16 %v674
    %v2165 = vunpack.c.h.b16 %v674
    %v2166 = vunpack.c.l.b16 %v675
    %v2167 = vunpack.c.h.b16 %v675
    %v2168 = vunpack.c.l.b16 %v676
    %v2169 = vunpack.c.h.b16 %v676
    %v2170 = vunpack.c.l.b16 %v677
    %v2171 = vunpack.c.h.b16 %v677
    %v2172 = vunpack.c.l.b16 %v678
    %v2173 = vunpack.c.h.b16 %v678
    %v2174 = vunpack.c.l.b16 %v679
    %v2175 = vunpack.c.h.b16 %v679
    %v2176 = vunpack.c.l.b16 %v680
    %v2177 = vunpack.c.h.b16 %v680
    %v2178 = vunpack.c.l.b16 %v681
    %v2179 = vunpack.c.h.b16 %v681
    %v2180 = vunpack.c.l.b16 %v682
    %v2181 = vunpack.c.h.b16 %v682
    %v2182 = vunpack.c.l.b16 %v683
    %v2183 = vunpack.c.h.b16 %v683
    %v2184 = vunpack.c.l.b16 %v684
    %v2185 = vunpack.c.h.b16 %v684
    %v2186 = vunpack.c.l.b16 %v685
    %v2187 = vunpack.c.h.b16 %v685
    %v2188 = vunpack.c.l.b16 %v686
    %v2189 = vunpack.c.h.b16 %v686
    %v2190 = vunpack.c.l.b16 %v687
    %v2191 = vunpack.c.h.b16 %v687
    %v2192 = vunpack.c.l.b16 %v688
    %v2193 = vunpack.c.h.b16 %v688
    %v2194 = vunpack.c.l.b16 %v689
    %v2195 = vunpack.c.h.b16 %v689
    %v2196 = vunpack.c.l.b16 %v690
    %v2197 = vunpack.c.h.b16 %v690
    %v2198 = vunpack.c.l.b16 %v691
    %v2199 = vunpack.c.h.b16 %v691
    %v2200 = vunpack.c.l.b16 %v692
    %v2201 = vunpack.c.h.b16 %v692
    %v2202 = vunpack.c.l.b16 %v693
    %v2203 = vunpack.c.h.b16 %v693
    %v2204 = vunpack.c.l.b16 %v694
    %v2205 = vunpack.c.h.b16 %v694
    %v2206 = vunpack.c.l.b16 %v695
    %v2207 = vunpack.c.h.b16 %v695
    %v2208 = vunpack.c.l.b16 %v696
    %v2209 = vunpack.c.h.b16 %v696
    %v2210 = vunpack.c.l.b16 %v697
    %v2211 = vunpack.c.h.b16 %v697
    %v2212 = vunpack.c.l.b16 %v698
    %v2213 = vunpack.c.h.b16 %v698
    %v2214 = vunpack.c.l.b16 %v699
    %v2215 = vunpack.c.h.b16 %v699
    %v2216 = vunpack.c.l.b16 %v700
    %v2217 = vunpack.c.h.b16 %v700
    %v2218 = vunpack.c.l.b16 %v701
    %v2219 = vunpack.c.h.b16 %v701
    %v2220 = vunpack.c.l.b16 %v702
    %v2221 = vunpack.c.h.b16 %v702
    %v2222 = vunpack.c.l.b16 %v703
    %v2223 = vunpack.c.h.b16 %v703
    %v2224 = vunpack.c.l.b16 %v704
    %v2225 = vunpack.c.h.b16 %v704
    %v2226 = vunpack.c.l.b16 %v705
    %v2227 = vunpack.c.h.b16 %v705
    %v2228 = vunpack.c.l.b16 %v706
    %v2229 = vunpack.c.h.b16 %v706
    %v2230 = vunpack.c.l.b16 %v707
    %v2231 = vunpack.c.h.b16 %v707
    %v2232 = vunpack.c.l.b16 %v708
    %v2233 = vunpack.c.h.b16 %v708
    %v2234 = vunpack.c.l.b16 %v709
    %v2235 = vunpack.c.h.b16 %v709
    %v2236 = vunpack.c.l.b16 %v710
    %v2237 = vunpack.c.h.b16 %v710
    %v2238 = vunpack.c.l.b16 %v711
    %v2239 = vunpack.c.h.b16 %v711
    %v2240 = vunpack.c.l.b16 %v712
    %v2241 = vunpack.c.h.b16 %v712
    %v2242 = vunpack.c.l.b16 %v713
    %v2243 = vunpack.c.h.b16 %v713
    %v2244 = vunpack.c.l.b16 %v714
    %v2245 = vunpack.c.h.b16 %v714
    %v2246 = vunpack.c.l.b16 %v715
    %v2247 = vunpack.c.h.b16 %v715
    %v2248 = vunpack.c.l.b16 %v716
    %v2249 = vunpack.c.h.b16 %v716
    %v2250 = vunpack.c.l.b16 %v717
    %v2251 = vunpack.c.h.b16 %v717
    %v2252 = vunpack.c.l.b16 %v718
    %v2253 = vunpack.c.h.b16 %v718
    %v2254 = vunpack.c.l.b16 %v719
    %v2255 = vunpack.c.h.b16 %v719
    %v2256 = vpack.c.b16 %v1240, %v1232
    %v2257 = vpack.c.b16 %v1241, %v1233
    %v2258 = vpack.c.b16 %v1242, %v1234
    %v2259 = vpack.c.b16 %v1243, %v1235
    %v2260 = vpack.c.b16 %v1244, %v1236
    %v2261 = vpack.c.b16 %v1245, %v1237
    %v2262 = vpack.c.b16 %v1246, %v1238
    %v2263 = vpack.c.b16 %v1247, %v1239
    %v2264 = vpack.c.b16 %v1256, %v1248
    %v2265 = vpack.c.b16 %v1257, %v1249
    %v2266 = vpack.c.b16 %v1258, %v1250
    %v2267 = vpack.c.b16 %v1259, %v1251
    %v2268 = vpack.c.b16 %v1260, %v1252
    %v2269 = vpack.c.b16 %v1261, %v1253
    %v2270 = vpack.c.b16 %v1262, %v1254
    %v2271 = vpack.c.b16 %v1263, %v1255
    %v2272 = vpack.c.b16 %v1272, %v1264
    %v2273 = vpack.c.b16 %v1273, %v1265
    %v2274 = vpack.c.b16 %v1274, %v1266
    %v2275 = vpack.c.b16 %v1275, %v1267
    %v2276 = vpack.c.b16 %v1276, %v1268
    %v2277 = vpack.c.b16 %v1277, %v1269
    %v2278 = vpack.c.b16 %v1278, %v1270
    %v2279 = vpack.c.b16 %v1279, %v1271
    %v2280 = vpack.c.b16 %v1288, %v1280
    %v2281 = vpack.c.b16 %v1289, %v1281
    %v2282 = vpack.c.b16 %v1290, %v1282
    %v2283 = vpack.c.b16 %v1291, %v1283
    %v2284 = vpack.c.b16 %v1292, %v1284
    %v2285 = vpack.c.b16 %v1293, %v1285
    %v2286 = vpack.c.b16 %v1294, %v1286
    %v2287 = vpack.c.b16 %v1295, %v1287
    %v2288 = vpack.c.b16 %v1304, %v1296
    %v2289 = vpack.c.b16 %v1305, %v1297
    %v2290 = vpack.c.b16 %v1306, %v1298
    %v2291 = vpack.c.b16 %v1307, %v1299
    %v2292 = vpack.c.b16 %v1308, %v1300
    %v2293 = vpack.c.b16 %v1309, %v1301
    %v2294 = vpack.c.b16 %v1310, %v1302
    %v2295 = vpack.c.b16 %v1311, %v1303
    %v2296 = vpack.c.b16 %v1320, %v1312
    %v2297 = vpack.c.b16 %v1321, %v1313
    %v2298 = vpack.c.b16 %v1322, %v1314
    %v2299 = vpack.c.b16 %v1323, %v1315
    %v2300 = vpack.c.b16 %v1324, %v1316
    %v2301 = vpack.c.b16 %v1325, %v1317
    %v2302 = vpack.c.b16 %v1326, %v1318
    %v2303 = vpack.c.b16 %v1327, %v1319
    %v2304 = vpack.c.b16 %v1336, %v1328
    %v2305 = vpack.c.b16 %v1337, %v1329
    %v2306 = vpack.c.b16 %v1338, %v1330
    %v2307 = vpack.c.b16 %v1339, %v1331
    %v2308 = vpack.c.b16 %v1340, %v1332
    %v2309 = vpack.c.b16 %v1341, %v1333
    %v2310 = vpack.c.b16 %v1342, %v1334
    %v2311 = vpack.c.b16 %v1343, %v1335
    %v2312 = vpack.c.b16 %v1352, %v1344
    %v2313 = vpack.c.b16 %v1353, %v1345
    %v2314 = vpack.c.b16 %v1354, %v1346
    %v2315 = vpack.c.b16 %v1355, %v1347
    %v2316 = vpack.c.b16 %v1356, %v1348
    %v2317 = vpack.c.b16 %v1357, %v1349
    %v2318 = vpack.c.b16 %v1358, %v1350
    %v2319 = vpack.c.b16 %v1359, %v1351
    %v2320 = vpack.c.b16 %v1368, %v1360
    %v2321 = vpack.c.b16 %v1369, %v1361
    %v2322 = vpack.c.b16 %v1370, %v1362
    %v2323 = vpack.c.b16 %v1371, %v1363
    %v2324 = vpack.c.b16 %v1372, %v1364
    %v2325 = vpack.c.b16 %v1373, %v1365
    %v2326 = vpack.c.b16 %v1374, %v1366
    %v2327 = vpack.c.b16 %v1375, %v1367
    %v2328 = vpack.c.b16 %v1384, %v1376
    %v2329 = vpack.c.b16 %v1385, %v1377
    %v2330 = vpack.c.b16 %v1386, %v1378
    %v2331 = vpack.c.b16 %v1387, %v1379
    %v2332 = vpack.c.b16 %v1388, %v1380
    %v2333 = vpack.c.b16 %v1389, %v1381
    %v2334 = vpack.c.b16 %v1390, %v1382
    %v2335 = vpack.c.b16 %v1391, %v1383
    %v2336 = vpack.c.b16 %v1400, %v1392
    %v2337 = vpack.c.b16 %v1401, %v1393
    %v2338 = vpack.c.b16 %v1402, %v1394
    %v2339 = vpack.c.b16 %v1403, %v1395
    %v2340 = vpack.c.b16 %v1404, %v1396
    %v2341 = vpack.c.b16 %v1405, %v1397
    %v2342 = vpack.c.b16 %v1406, %v1398
    %v2343 = vpack.c.b16 %v1407, %v1399
    %v2344 = vpack.c.b16 %v1416, %v1408
    %v2345 = vpack.c.b16 %v1417, %v1409
    %v2346 = vpack.c.b16 %v1418, %v1410
    %v2347 = vpack.c.b16 %v1419, %v1411
    %v2348 = vpack.c.b16 %v1420, %v1412
    %v2349 = vpack.c.b16 %v1421, %v1413
    %v2350 = vpack.c.b16 %v1422, %v1414
    %v2351 = vpack.c.b16 %v1423, %v1415
    %v2352 = vpack.c.b16 %v1432, %v1424
    %v2353 = vpack.c.b16 %v1433, %v1425
    %v2354 = vpack.c.b16 %v1434, %v1426
    %v2355 = vpack.c.b16 %v1435, %v1427
    %v2356 = vpack.c.b16 %v1436, %v1428
    %v2357 = vpack.c.b16 %v1437, %v1429
    %v2358 = vpack.c.b16 %v1438, %v1430
    %v2359 = vpack.c.b16 %v1439, %v1431
    %v2360 = vpack.c.b16 %v1448, %v1440
    %v2361 = vpack.c.b16 %v1449, %v1441
    %v2362 = vpack.c.b16 %v1450, %v1442
    %v2363 = vpack.c.b16 %v1451, %v1443
    %v2364 = vpack.c.b16 %v1452, %v1444
    %v2365 = vpack.c.b16 %v1453, %v1445
    %v2366 = vpack.c.b16 %v1454, %v1446
    %v2367 = vpack.c.b16 %v1455, %v1447
    %v2368 = vpack.c.b16 %v1464, %v1456
    %v2369 = vpack.c.b16 %v1465, %v1457
    %v2370 = vpack.c.b16 %v1466, %v1458
    %v2371 = vpack.c.b16 %v1467, %v1459
    %v2372 = vpack.c.b16 %v1468, %v1460
    %v2373 = vpack.c.b16 %v1469, %v1461
    %v2374 = vpack.c.b16 %v1470, %v1462
    %v2375 = vpack.c.b16 %v1471, %v1463
    %v2376 = vpack.c.b16 %v1480, %v1472
    %v2377 = vpack.c.b16 %v1481, %v1473
    %v2378 = vpack.c.b16 %v1482, %v1474
    %v2379 = vpack.c.b16 %v1483, %v1475
    %v2380 = vpack.c.b16 %v1484, %v1476
    %v2381 = vpack.c.b16 %v1485, %v1477
    %v2382 = vpack.c.b16 %v1486, %v1478
    %v2383 = vpack.c.b16 %v1487, %v1479
    %v2384 = vpack.c.b16 %v1496, %v1488
    %v2385 = vpack.c.b16 %v1497, %v1489
    %v2386 = vpack.c.b16 %v1498, %v1490
    %v2387 = vpack.c.b16 %v1499, %v1491
    %v2388 = vpack.c.b16 %v1500, %v1492
    %v2389 = vpack.c.b16 %v1501, %v1493
    %v2390 = vpack.c.b16 %v1502, %v1494
    %v2391 = vpack.c.b16 %v1503, %v1495
    %v2392 = vpack.c.b16 %v1512, %v1504
    %v2393 = vpack.c.b16 %v1513, %v1505
    %v2394 = vpack.c.b16 %v1514, %v1506
    %v2395 = vpack.c.b16 %v1515, %v1507
    %v2396 = vpack.c.b16 %v1516, %v1508
    %v2397 = vpack.c.b16 %v1517, %v1509
    %v2398 = vpack.c.b16 %v1518, %v1510
    %v2399 = vpack.c.b16 %v1519, %v1511
    %v2400 = vpack.c.b16 %v1528, %v1520
    %v2401 = vpack.c.b16 %v1529, %v1521
    %v2402 = vpack.c.b16 %v1530, %v1522
    %v2403 = vpack.c.b16 %v1531, %v1523
    %v2404 = vpack.c.b16 %v1532, %v1524
    %v2405 = vpack.c.b16 %v1533, %v1525
    %v2406 = vpack.c.b16 %v1534, %v1526
    %v2407 = vpack.c.b16 %v1535, %v1527
    %v2408 = vpack.c.b16 %v1544, %v1536
    %v2409 = vpack.c.b16 %v1545, %v1537
    %v2410 = vpack.c.b16 %v1546, %v1538
    %v2411 = vpack.c.b16 %v1547, %v1539
    %v2412 = vpack.c.b16 %v1548, %v1540
    %v2413 = vpack.c.b16 %v1549, %v1541
    %v2414 = vpack.c.b16 %v1550, %v1542
    %v2415 = vpack.c.b16 %v1551, %v1543
    %v2416 = vpack.c.b16 %v1560, %v1552
    %v2417 = vpack.c.b16 %v1561, %v1553
    %v2418 = vpack.c.b16 %v1562, %v1554
    %v2419 = vpack.c.b16 %v1563, %v1555
    %v2420 = vpack.c.b16 %v1564, %v1556
    %v2421 = vpack.c.b16 %v1565, %v1557
    %v2422 = vpack.c.b16 %v1566, %v1558
    %v2423 = vpack.c.b16 %v1567, %v1559
    %v2424 = vpack.c.b16 %v1576, %v1568
    %v2425 = vpack.c.b16 %v1577, %v1569
    %v2426 = vpack.c.b16 %v1578, %v1570
    %v2427 = vpack.c.b16 %v1579, %v1571
    %v2428 = vpack.c.b16 %v1580, %v1572
    %v2429 = vpack.c.b16 %v1581, %v1573
    %v2430 = vpack.c.b16 %v1582, %v1574
    %v2431 = vpack.c.b16 %v1583, %v1575
    %v2432 = vpack.c.b16 %v1592, %v1584
    %v2433 = vpack.c.b16 %v1593, %v1585
    %v2434 = vpack.c.b16 %v1594, %v1586
    %v2435 = vpack.c.b16 %v1595, %v1587
    %v2436 = vpack.c.b16 %v1596, %v1588
    %v2437 = vpack.c.b16 %v1597, %v1589
    %v2438 = vpack.c.b16 %v1598, %v1590
    %v2439 = vpack.c.b16 %v1599, %v1591
    %v2440 = vpack.c.b16 %v1608, %v1600
    %v2441 = vpack.c.b16 %v1609, %v1601
    %v2442 = vpack.c.b16 %v1610, %v1602
    %v2443 = vpack.c.b16 %v1611, %v1603
    %v2444 = vpack.c.b16 %v1612, %v1604
    %v2445 = vpack.c.b16 %v1613, %v1605
    %v2446 = vpack.c.b16 %v1614, %v1606
    %v2447 = vpack.c.b16 %v1615, %v1607
    %v2448 = vpack.c.b16 %v1624, %v1616
    %v2449 = vpack.c.b16 %v1625, %v1617
    %v2450 = vpack.c.b16 %v1626, %v1618
    %v2451 = vpack.c.b16 %v1627, %v1619
    %v2452 = vpack.c.b16 %v1628, %v1620
    %v2453 = vpack.c.b16 %v1629, %v1621
    %v2454 = vpack.c.b16 %v1630, %v1622
    %v2455 = vpack.c.b16 %v1631, %v1623
    %v2456 = vpack.c.b16 %v1640, %v1632
    %v2457 = vpack.c.b16 %v1641, %v1633
    %v2458 = vpack.c.b16 %v1642, %v1634
    %v2459 = vpack.c.b16 %v1643, %v1635
    %v2460 = vpack.c.b16 %v1644, %v1636
    %v2461 = vpack.c.b16 %v1645, %v1637
    %v2462 = vpack.c.b16 %v1646, %v1638
    %v2463 = vpack.c.b16 %v1647, %v1639
    %v2464 = vpack.c.b16 %v1656, %v1648
    %v2465 = vpack.c.b16 %v1657, %v1649
    %v2466 = vpack.c.b16 %v1658, %v1650
    %v2467 = vpack.c.b16 %v1659, %v1651
    %v2468 = vpack.c.b16 %v1660, %v1652
    %v2469 = vpack.c.b16 %v1661, %v1653
    %v2470 = vpack.c.b16 %v1662, %v1654
    %v2471 = vpack.c.b16 %v1663, %v1655
    %v2472 = vpack.c.b16 %v1672, %v1664
    %v2473 = vpack.c.b16 %v1673, %v1665
    %v2474 = vpack.c.b16 %v1674, %v1666
    %v2475 = vpack.c.b16 %v1675, %v1667
    %v2476 = vpack.c.b16 %v1676, %v1668
    %v2477 = vpack.c.b16 %v1677, %v1669
    %v2478 = vpack.c.b16 %v1678, %v1670
    %v2479 = vpack.c.b16 %v1679, %v1671
    %v2480 = vpack.c.b16 %v1688, %v1680
    %v2481 = vpack.c.b16 %v1689, %v1681
    %v2482 = vpack.c.b16 %v1690, %v1682
    %v2483 = vpack.c.b16 %v1691, %v1683
    %v2484 = vpack.c.b16 %v1692, %v1684
    %v2485 = vpack.c.b16 %v1693, %v1685
    %v2486 = vpack.c.b16 %v1694, %v1686
    %v2487 = vpack.c.b16 %v1695, %v1687
    %v2488 = vpack.c.b16 %v1704, %v1696
    %v2489 = vpack.c.b16 %v1705, %v1697
    %v2490 = vpack.c.b16 %v1706, %v1698
    %v2491 = vpack.c.b16 %v1707, %v1699
    %v2492 = vpack.c.b16 %v1708, %v1700
    %v2493 = vpack.c.b16 %v1709, %v1701
    %v2494 = vpack.c.b16 %v1710, %v1702
    %v2495 = vpack.c.b16 %v1711, %v1703
    %v2496 = vpack.c.b16 %v1720, %v1712
    %v2497 = vpack.c.b16 %v1721, %v1713
    %v2498 = vpack.c.b16 %v1722, %v1714
    %v2499 = vpack.c.b16 %v1723, %v1715
    %v2500 = vpack.c.b16 %v1724, %v1716
    %v2501 = vpack.c.b16 %v1725, %v1717
    %v2502 = vpack.c.b16 %v1726, %v1718
    %v2503 = vpack.c.b16 %v1727, %v1719
    %v2504 = vpack.c.b16 %v1736, %v1728
    %v2505 = vpack.c.b16 %v1737, %v1729
    %v2506 = vpack.c.b16 %v1738, %v1730
    %v2507 = vpack.c.b16 %v1739, %v1731
    %v2508 = vpack.c.b16 %v1740, %v1732
    %v2509 = vpack.c.b16 %v1741, %v1733
    %v2510 = vpack.c.b16 %v1742, %v1734
    %v2511 = vpack.c.b16 %v1743, %v1735
    %v2512 = vpack.c.b16 %v1752, %v1744
    %v2513 = vpack.c.b16 %v1753, %v1745
    %v2514 = vpack.c.b16 %v1754, %v1746
    %v2515 = vpack.c.b16 %v1755, %v1747
    %v2516 = vpack.c.b16 %v1756, %v1748
    %v2517 = vpack.c.b16 %v1757, %v1749
    %v2518 = vpack.c.b16 %v1758, %v1750
    %v2519 = vpack.c.b16 %v1759, %v1751
    %v2520 = vpack.c.b16 %v1768, %v1760
    %v2521 = vpack.c.b16 %v1769, %v1761
    %v2522 = vpack.c.b16 %v1770, %v1762
    %v2523 = vpack.c.b16 %v1771, %v1763
    %v2524 = vpack.c.b16 %v1772, %v1764
    %v2525 = vpack.c.b16 %v1773, %v1765
    %v2526 = vpack.c.b16 %v1774, %v1766
    %v2527 = vpack.c.b16 %v1775, %v1767
    %v2528 = vpack.c.b16 %v1784, %v1776
    %v2529 = vpack.c.b16 %v1785, %v1777
    %v2530 = vpack.c.b16 %v1786, %v1778
    %v2531 = vpack.c.b16 %v1787, %v1779
    %v2532 = vpack.c.b16 %v1788, %v1780
    %v2533 = vpack.c.b16 %v1789, %v1781
    %v2534 = vpack.c.b16 %v1790, %v1782
    %v2535 = vpack.c.b16 %v1791, %v1783
    %v2536 = vpack.c.b16 %v1800, %v1792
    %v2537 = vpack.c.b16 %v1801, %v1793
    %v2538 = vpack.c.b16 %v1802, %v1794
    %v2539 = vpack.c.b16 %v1803, %v1795
    %v2540 = vpack.c.b16 %v1804, %v1796
    %v2541 = vpack.c.b16 %v1805, %v1797
    %v2542 = vpack.c.b16 %v1806, %v1798
    %v2543 = vpack.c.b16 %v1807, %v1799
    %v2544 = vpack.c.b16 %v1816, %v1808
    %v2545 = vpack.c.b16 %v1817, %v1809
    %v2546 = vpack.c.b16 %v1818, %v1810
    %v2547 = vpack.c.b16 %v1819, %v1811
    %v2548 = vpack.c.b16 %v1820, %v1812
    %v2549 = vpack.c.b16 %v1821, %v1813
    %v2550 = vpack.c.b16 %v1822, %v1814
    %v2551 = vpack.c.b16 %v1823, %v1815
    %v2552 = vpack.c.b16 %v1832, %v1824
    %v2553 = vpack.c.b16 %v1833, %v1825
    %v2554 = vpack.c.b16 %v1834, %v1826
    %v2555 = vpack.c.b16 %v1835, %v1827
    %v2556 = vpack.c.b16 %v1836, %v1828
    %v2557 = vpack.c.b16 %v1837, %v1829
    %v2558 = vpack.c.b16 %v1838, %v1830
    %v2559 = vpack.c.b16 %v1839, %v1831
    %v2560 = vpack.c.b16 %v1848, %v1840
    %v2561 = vpack.c.b16 %v1849, %v1841
    %v2562 = vpack.c.b16 %v1850, %v1842
    %v2563 = vpack.c.b16 %v1851, %v1843
    %v2564 = vpack.c.b16 %v1852, %v1844
    %v2565 = vpack.c.b16 %v1853, %v1845
    %v2566 = vpack.c.b16 %v1854, %v1846
    %v2567 = vpack.c.b16 %v1855, %v1847
    %v2568 = vpack.c.b16 %v1864, %v1856
    %v2569 = vpack.c.b16 %v1865, %v1857
    %v2570 = vpack.c.b16 %v1866, %v1858
    %v2571 = vpack.c.b16 %v1867, %v1859
    %v2572 = vpack.c.b16 %v1868, %v1860
    %v2573 = vpack.c.b16 %v1869, %v1861
    %v2574 = vpack.c.b16 %v1870, %v1862
    %v2575 = vpack.c.b16 %v1871, %v1863
    %v2576 = vpack.c.b16 %v1880, %v1872
    %v2577 = vpack.c.b16 %v1881, %v1873
    %v2578 = vpack.c.b16 %v1882, %v1874
    %v2579 = vpack.c.b16 %v1883, %v1875
    %v2580 = vpack.c.b16 %v1884, %v1876
    %v2581 = vpack.c.b16 %v1885, %v1877
    %v2582 = vpack.c.b16 %v1886, %v1878
    %v2583 = vpack.c.b16 %v1887, %v1879
    %v2584 = vpack.c.b16 %v1896, %v1888
    %v2585 = vpack.c.b16 %v1897, %v1889
    %v2586 = vpack.c.b16 %v1898, %v1890
    %v2587 = vpack.c.b16 %v1899, %v1891
    %v2588 = vpack.c.b16 %v1900, %v1892
    %v2589 = vpack.c.b16 %v1901, %v1893
    %v2590 = vpack.c.b16 %v1902, %v1894
    %v2591 = vpack.c.b16 %v1903, %v1895
    %v2592 = vpack.c.b16 %v1912, %v1904
    %v2593 = vpack.c.b16 %v1913, %v1905
    %v2594 = vpack.c.b16 %v1914, %v1906
    %v2595 = vpack.c.b16 %v1915, %v1907
    %v2596 = vpack.c.b16 %v1916, %v1908
    %v2597 = vpack.c.b16 %v1917, %v1909
    %v2598 = vpack.c.b16 %v1918, %v1910
    %v2599 = vpack.c.b16 %v1919, %v1911
    %v2600 = vpack.c.b16 %v1928, %v1920
    %v2601 = vpack.c.b16 %v1929, %v1921
    %v2602 = vpack.c.b16 %v1930, %v1922
    %v2603 = vpack.c.b16 %v1931, %v1923
    %v2604 = vpack.c.b16 %v1932, %v1924
    %v2605 = vpack.c.b16 %v1933, %v1925
    %v2606 = vpack.c.b16 %v1934, %v1926
    %v2607 = vpack.c.b16 %v1935, %v1927
    %v2608 = vpack.c.b16 %v1944, %v1936
    %v2609 = vpack.c.b16 %v1945, %v1937
    %v2610 = vpack.c.b16 %v1946, %v1938
    %v2611 = vpack.c.b16 %v1947, %v1939
    %v2612 = vpack.c.b16 %v1948, %v1940
    %v2613 = vpack.c.b16 %v1949, %v1941
    %v2614 = vpack.c.b16 %v1950, %v1942
    %v2615 = vpack.c.b16 %v1951, %v1943
    %v2616 = vpack.c.b16 %v1960, %v1952
    %v2617 = vpack.c.b16 %v1961, %v1953
    %v2618 = vpack.c.b16 %v1962, %v1954
    %v2619 = vpack.c.b16 %v1963, %v1955
    %v2620 = vpack.c.b16 %v1964, %v1956
    %v2621 = vpack.c.b16 %v1965, %v1957
    %v2622 = vpack.c.b16 %v1966, %v1958
    %v2623 = vpack.c.b16 %v1967, %v1959
    %v2624 = vpack.c.b16 %v1976, %v1968
    %v2625 = vpack.c.b16 %v1977, %v1969
    %v2626 = vpack.c.b16 %v1978, %v1970
    %v2627 = vpack.c.b16 %v1979, %v1971
    %v2628 = vpack.c.b16 %v1980, %v1972
    %v2629 = vpack.c.b16 %v1981, %v1973
    %v2630 = vpack.c.b16 %v1982, %v1974
    %v2631 = vpack.c.b16 %v1983, %v1975
    %v2632 = vpack.c.b16 %v1992, %v1984
    %v2633 = vpack.c.b16 %v1993, %v1985
    %v2634 = vpack.c.b16 %v1994, %v1986
    %v2635 = vpack.c.b16 %v1995, %v1987
    %v2636 = vpack.c.b16 %v1996, %v1988
    %v2637 = vpack.c.b16 %v1997, %v1989
    %v2638 = vpack.c.b16 %v1998, %v1990
    %v2639 = vpack.c.b16 %v1999, %v1991
    %v2640 = vpack.c.b16 %v2008, %v2000
    %v2641 = vpack.c.b16 %v2009, %v2001
    %v2642 = vpack.c.b16 %v2010, %v2002
    %v2643 = vpack.c.b16 %v2011, %v2003
    %v2644 = vpack.c.b16 %v2012, %v2004
    %v2645 = vpack.c.b16 %v2013, %v2005
    %v2646 = vpack.c.b16 %v2014, %v2006
    %v2647 = vpack.c.b16 %v2015, %v2007
    %v2648 = vpack.c.b16 %v2024, %v2016
    %v2649 = vpack.c.b16 %v2025, %v2017
    %v2650 = vpack.c.b16 %v2026, %v2018
    %v2651 = vpack.c.b16 %v2027, %v2019
    %v2652 = vpack.c.b16 %v2028, %v2020
    %v2653 = vpack.c.b16 %v2029, %v2021
    %v2654 = vpack.c.b16 %v2030, %v2022
    %v2655 = vpack.c.b16 %v2031, %v2023
    %v2656 = vpack.c.b16 %v2040, %v2032
    %v2657 = vpack.c.b16 %v2041, %v2033
    %v2658 = vpack.c.b16 %v2042, %v2034
    %v2659 = vpack.c.b16 %v2043, %v2035
    %v2660 = vpack.c.b16 %v2044, %v2036
    %v2661 = vpack.c.b16 %v2045, %v2037
    %v2662 = vpack.c.b16 %v2046, %v2038
    %v2663 = vpack.c.b16 %v2047, %v2039
    %v2664 = vpack.c.b16 %v2056, %v2048
    %v2665 = vpack.c.b16 %v2057, %v2049
    %v2666 = vpack.c.b16 %v2058, %v2050
    %v2667 = vpack.c.b16 %v2059, %v2051
    %v2668 = vpack.c.b16 %v2060, %v2052
    %v2669 = vpack.c.b16 %v2061, %v2053
    %v2670 = vpack.c.b16 %v2062, %v2054
    %v2671 = vpack.c.b16 %v2063, %v2055
    %v2672 = vpack.c.b16 %v2072, %v2064
    %v2673 = vpack.c.b16 %v2073, %v2065
    %v2674 = vpack.c.b16 %v2074, %v2066
    %v2675 = vpack.c.b16 %v2075, %v2067
    %v2676 = vpack.c.b16 %v2076, %v2068
    %v2677 = vpack.c.b16 %v2077, %v2069
    %v2678 = vpack.c.b16 %v2078, %v2070
    %v2679 = vpack.c.b16 %v2079, %v2071
    %v2680 = vpack.c.b16 %v2088, %v2080
    %v2681 = vpack.c.b16 %v2089, %v2081
    %v2682 = vpack.c.b16 %v2090, %v2082
    %v2683 = vpack.c.b16 %v2091, %v2083
    %v2684 = vpack.c.b16 %v2092, %v2084
    %v2685 = vpack.c.b16 %v2093, %v2085
    %v2686 = vpack.c.b16 %v2094, %v2086
    %v2687 = vpack.c.b16 %v2095, %v2087
    %v2688 = vpack.c.b16 %v2104, %v2096
    %v2689 = vpack.c.b16 %v2105, %v2097
    %v2690 = vpack.c.b16 %v2106, %v2098
    %v2691 = vpack.c.b16 %v2107, %v2099
    %v2692 = vpack.c.b16 %v2108, %v2100
    %v2693 = vpack.c.b16 %v2109, %v2101
    %v2694 = vpack.c.b16 %v2110, %v2102
    %v2695 = vpack.c.b16 %v2111, %v2103
    %v2696 = vpack.c.b16 %v2120, %v2112
    %v2697 = vpack.c.b16 %v2121, %v2113
    %v2698 = vpack.c.b16 %v2122, %v2114
    %v2699 = vpack.c.b16 %v2123, %v2115
    %v2700 = vpack.c.b16 %v2124, %v2116
    %v2701 = vpack.c.b16 %v2125, %v2117
    %v2702 = vpack.c.b16 %v2126, %v2118
    %v2703 = vpack.c.b16 %v2127, %v2119
    %v2704 = vpack.c.b16 %v2136, %v2128
    %v2705 = vpack.c.b16 %v2137, %v2129
    %v2706 = vpack.c.b16 %v2138, %v2130
    %v2707 = vpack.c.b16 %v2139, %v2131
    %v2708 = vpack.c.b16 %v2140, %v2132
    %v2709 = vpack.c.b16 %v2141, %v2133
    %v2710 = vpack.c.b16 %v2142, %v2134
    %v2711 = vpack.c.b16 %v2143, %v2135
    %v2712 = vpack.c.b16 %v2152, %v2144
    %v2713 = vpack.c.b16 %v2153, %v2145
    %v2714 = vpack.c.b16 %v2154, %v2146
    %v2715 = vpack.c.b16 %v2155, %v2147
    %v2716 = vpack.c.b16 %v2156, %v2148
    %v2717 = vpack.c.b16 %v2157, %v2149
    %v2718 = vpack.c.b16 %v2158, %v2150
    %v2719 = vpack.c.b16 %v2159, %v2151
    %v2720 = vpack.c.b16 %v2168, %v2160
    %v2721 = vpack.c.b16 %v2169, %v2161
    %v2722 = vpack.c.b16 %v2170, %v2162
    %v2723 = vpack.c.b16 %v2171, %v2163
    %v2724 = vpack.c.b16 %v2172, %v2164
    %v2725 = vpack.c.b16 %v2173, %v2165
    %v2726 = vpack.c.b16 %v2174, %v2166
    %v2727 = vpack.c.b16 %v2175, %v2167
    %v2728 = vpack.c.b16 %v2184, %v2176
    %v2729 = vpack.c.b16 %v2185, %v2177
    %v2730 = vpack.c.b16 %v2186, %v2178
    %v2731 = vpack.c.b16 %v2187, %v2179
    %v2732 = vpack.c.b16 %v2188, %v2180
    %v2733 = vpack.c.b16 %v2189, %v2181
    %v2734 = vpack.c.b16 %v2190, %v2182
    %v2735 = vpack.c.b16 %v2191, %v2183
    %v2736 = vpack.c.b16 %v2200, %v2192
    %v2737 = vpack.c.b16 %v2201, %v2193
    %v2738 = vpack.c.b16 %v2202, %v2194
    %v2739 = vpack.c.b16 %v2203, %v2195
    %v2740 = vpack.c.b16 %v2204, %v2196
    %v2741 = vpack.c.b16 %v2205, %v2197
    %v2742 = vpack.c.b16 %v2206, %v2198
    %v2743 = vpack.c.b16 %v2207, %v2199
    %v2744 = vpack.c.b16 %v2216, %v2208
    %v2745 = vpack.c.b16 %v2217, %v2209
    %v2746 = vpack.c.b16 %v2218, %v2210
    %v2747 = vpack.c.b16 %v2219, %v2211
    %v2748 = vpack.c.b16 %v2220, %v2212
    %v2749 = vpack.c.b16 %v2221, %v2213
    %v2750 = vpack.c.b16 %v2222, %v2214
    %v2751 = vpack.c.b16 %v2223, %v2215
    %v2752 = vpack.c.b16 %v2232, %v2224
    %v2753 = vpack.c.b16 %v2233, %v2225
    %v2754 = vpack.c.b16 %v2234, %v2226
    %v2755 = vpack.c.b16 %v2235, %v2227
    %v2756 = vpack.c.b16 %v2236, %v2228
    %v2757 = vpack.c.b16 %v2237, %v2229
    %v2758 = vpack.c.b16 %v2238, %v2230
    %v2759 = vpack.c.b16 %v2239, %v2231
    %v2760 = vpack.c.b16 %v2248, %v2240
    %v2761 = vpack.c.b16 %v2249, %v2241
    %v2762 = vpack.c.b16 %v2250, %v2242
    %v2763 = vpack.c.b16 %v2251, %v2243
    %v2764 = vpack.c.b16 %v2252, %v2244
    %v2765 = vpack.c.b16 %v2253, %v2245
    %v2766 = vpack.c.b16 %v2254, %v2246
    %v2767 = vpack.c.b16 %v2255, %v2247
    %3280 = vmatprep.subr.bf16.mxu0 %v2257
    %3281 = vmatpush1.bf16.msra.mxu0 %v2256
    %3282 = vmatprep.subr.bf16.mxu0 %v2265
    %3283 = vmatpush1.bf16.msra.mxu0 %v2264
    %3284 = vmatprep.subr.bf16.mxu0 %v2273
    %3285 = vmatpush1.bf16.msra.mxu0 %v2272
    %3286 = vmatprep.subr.bf16.mxu0 %v2281
    %3287 = vmatpush1.bf16.msra.mxu0 %v2280
    %3288 = vmatprep.subr.bf16.mxu0 %v2289
    %3289 = vmatpush1.bf16.msra.mxu0 %v2288
    %3290 = vmatprep.subr.bf16.mxu0 %v2297
    %3291 = vmatpush1.bf16.msra.mxu0 %v2296
    %3292 = vmatprep.subr.bf16.mxu0 %v2305
    %3293 = vmatpush1.bf16.msra.mxu0 %v2304
    %3294 = vmatprep.subr.bf16.mxu0 %v2313
    %3295 = vmatpush1.bf16.msra.mxu0 %v2312
    %3296 = vmatprep.subr.bf16.mxu0 %v2321
    %3297 = vmatpush1.bf16.msra.mxu0 %v2320
    %3298 = vmatprep.subr.bf16.mxu0 %v2329
    %3299 = vmatpush1.bf16.msra.mxu0 %v2328
    %3300 = vmatprep.subr.bf16.mxu0 %v2337
    %3301 = vmatpush1.bf16.msra.mxu0 %v2336
    %3302 = vmatprep.subr.bf16.mxu0 %v2345
    %3303 = vmatpush1.bf16.msra.mxu0 %v2344
    %3304 = vmatprep.subr.bf16.mxu0 %v2353
    %3305 = vmatpush1.bf16.msra.mxu0 %v2352
    %3306 = vmatprep.subr.bf16.mxu0 %v2361
    %3307 = vmatpush1.bf16.msra.mxu0 %v2360
    %3308 = vmatprep.subr.bf16.mxu0 %v2369
    %3309 = vmatpush1.bf16.msra.mxu0 %v2368
    %3310 = vmatprep.subr.bf16.mxu0 %v2377
    %3311 = vmatpush1.bf16.msra.mxu0 %v2376
    %3312 = vmatprep.mubr.bf16.mxu0 %v201
    %3313 = vmatmul.mubr.bf16.gmra.mrb[0].mxu0 %v200
    %v3314 = vpop.f32.mrb[0].mxu0
    %v3315 = vadd.f32 0.0, %v3314
    %v3316 = vpop.f32.mrb[0].mxu0
    %v3317 = vadd.f32 0.0, %v3316
    %v3318 = vpop.f32.mrb[0].mxu0
    %v3319 = vadd.f32 0.0, %v3318
    %v3320 = vpop.f32.mrb[0].mxu0
    %v3321 = vadd.f32 0.0, %v3320
    %3322 = vdwg.mxu0
    %3323 = vmatprep.subr.bf16.mxu0 %v2385
    %3324 = vmatpush1.bf16.msra.mxu0 %v2384
    %3325 = vmatprep.subr.bf16.mxu0 %v2393
    %3326 = vmatpush1.bf16.msra.mxu0 %v2392
    %3327 = vmatprep.subr.bf16.mxu0 %v2401
    %3328 = vmatpush1.bf16.msra.mxu0 %v2400
    %3329 = vmatprep.subr.bf16.mxu0 %v2409
    %3330 = vmatpush1.bf16.msra.mxu0 %v2408
    %3331 = vmatprep.subr.bf16.mxu0 %v2417
    %3332 = vmatpush1.bf16.msra.mxu0 %v2416
    %3333 = vmatprep.subr.bf16.mxu0 %v2425
    %3334 = vmatpush1.bf16.msra.mxu0 %v2424
    %3335 = vmatprep.subr.bf16.mxu0 %v2433
    %3336 = vmatpush1.bf16.msra.mxu0 %v2432
    %3337 = vmatprep.subr.bf16.mxu0 %v2441
    %3338 = vmatpush1.bf16.msra.mxu0 %v2440
    %3339 = vmatprep.subr.bf16.mxu0 %v2449
    %3340 = vmatpush1.bf16.msra.mxu0 %v2448
    %3341 = vmatprep.subr.bf16.mxu0 %v2457
    %3342 = vmatpush1.bf16.msra.mxu0 %v2456
    %3343 = vmatprep.subr.bf16.mxu0 %v2465
    %3344 = vmatpush1.bf16.msra.mxu0 %v2464
    %3345 = vmatprep.subr.bf16.mxu0 %v2473
    %3346 = vmatpush1.bf16.msra.mxu0 %v2472
    %3347 = vmatprep.subr.bf16.mxu0 %v2481
    %3348 = vmatpush1.bf16.msra.mxu0 %v2480
    %3349 = vmatprep.subr.bf16.mxu0 %v2489
    %3350 = vmatpush1.bf16.msra.mxu0 %v2488
    %3351 = vmatprep.subr.bf16.mxu0 %v2497
    %3352 = vmatpush1.bf16.msra.mxu0 %v2496
    %3353 = vmatprep.subr.bf16.mxu0 %v2505
    %3354 = vmatpush1.bf16.msra.mxu0 %v2504
    %3355 = vmatprep.mubr.bf16.mxu0 %v203
    %3356 = vmatmul.mubr.bf16.gmra.mrb[0].mxu0 %v202
    %v3357 = vpop.f32.mrb[0].mxu0
    %v3358 = vadd.f32 %v3315, %v3357
    %v3359 = vpop.f32.mrb[0].mxu0
    %v3360 = vadd.f32 %v3317, %v3359
    %v3361 = vpop.f32.mrb[0].mxu0
    %v3362 = vadd.f32 %v3319, %v3361
    %v3363 = vpop.f32.mrb[0].mxu0
    %v3364 = vadd.f32 %v3321, %v3363
    %3365 = vdwg.mxu0
    %3366 = vmatprep.subr.bf16.mxu0 %v2513
    %3367 = vmatpush1.bf16.msra.mxu0 %v2512
    %3368 = vmatprep.subr.bf16.mxu0 %v2521
    %3369 = vmatpush1.bf16.msra.mxu0 %v2520
    %3370 = vmatprep.subr.bf16.mxu0 %v2529
    %3371 = vmatpush1.bf16.msra.mxu0 %v2528
    %3372 = vmatprep.subr.bf16.mxu0 %v2537
    %3373 = vmatpush1.bf16.msra.mxu0 %v2536
    %3374 = vmatprep.subr.bf16.mxu0 %v2545
    %3375 = vmatpush1.bf16.msra.mxu0 %v2544
    %3376 = vmatprep.subr.bf16.mxu0 %v2553
    %3377 = vmatpush1.bf16.msra.mxu0 %v2552
    %3378 = vmatprep.subr.bf16.mxu0 %v2561
    %3379 = vmatpush1.bf16.msra.mxu0 %v2560
    %3380 = vmatprep.subr.bf16.mxu0 %v2569
    %3381 = vmatpush1.bf16.msra.mxu0 %v2568
    %3382 = vmatprep.subr.bf16.mxu0 %v2577
    %3383 = vmatpush1.bf16.msra.mxu0 %v2576
    %3384 = vmatprep.subr.bf16.mxu0 %v2585
    %3385 = vmatpush1.bf16.msra.mxu0 %v2584
    %3386 = vmatprep.subr.bf16.mxu0 %v2593
    %3387 = vmatpush1.bf16.msra.mxu0 %v2592
    %3388 = vmatprep.subr.bf16.mxu0 %v2601
    %3389 = vmatpush1.bf16.msra.mxu0 %v2600
    %3390 = vmatprep.subr.bf16.mxu0 %v2609
    %3391 = vmatpush1.bf16.msra.mxu0 %v2608
    %3392 = vmatprep.subr.bf16.mxu0 %v2617
    %3393 = vmatpush1.bf16.msra.mxu0 %v2616
    %3394 = vmatprep.subr.bf16.mxu0 %v2625
    %3395 = vmatpush1.bf16.msra.mxu0 %v2624
    %3396 = vmatprep.subr.bf16.mxu0 %v2633
    %3397 = vmatpush1.bf16.msra.mxu0 %v2632
    %3398 = vmatprep.mubr.bf16.mxu0 %v205
    %3399 = vmatmul.mubr.bf16.gmra.mrb[0].mxu0 %v204
    %v3400 = vpop.f32.mrb[0].mxu0
    %v3401 = vadd.f32 %v3358, %v3400
    %v3402 = vpop.f32.mrb[0].mxu0
    %v3403 = vadd.f32 %v3360, %v3402
    %v3404 = vpop.f32.mrb[0].mxu0
    %v3405 = vadd.f32 %v3362, %v3404
    %v3406 = vpop.f32.mrb[0].mxu0
    %v3407 = vadd.f32 %v3364, %v3406
    %3408 = vdwg.mxu0
    %3409 = vmatprep.subr.bf16.mxu0 %v2641
    %3410 = vmatpush1.bf16.msra.mxu0 %v2640
    %3411 = vmatprep.subr.bf16.mxu0 %v2649
    %3412 = vmatpush1.bf16.msra.mxu0 %v2648
    %3413 = vmatprep.subr.bf16.mxu0 %v2657
    %3414 = vmatpush1.bf16.msra.mxu0 %v2656
    %3415 = vmatprep.subr.bf16.mxu0 %v2665
    %3416 = vmatpush1.bf16.msra.mxu0 %v2664
    %3417 = vmatprep.subr.bf16.mxu0 %v2673
    %3418 = vmatpush1.bf16.msra.mxu0 %v2672
    %3419 = vmatprep.subr.bf16.mxu0 %v2681
    %3420 = vmatpush1.bf16.msra.mxu0 %v2680
    %3421 = vmatprep.subr.bf16.mxu0 %v2689
    %3422 = vmatpush1.bf16.msra.mxu0 %v2688
    %3423 = vmatprep.subr.bf16.mxu0 %v2697
    %3424 = vmatpush1.bf16.msra.mxu0 %v2696
    %3425 = vmatprep.subr.bf16.mxu0 %v2705
    %3426 = vmatpush1.bf16.msra.mxu0 %v2704
    %3427 = vmatprep.subr.bf16.mxu0 %v2713
    %3428 = vmatpush1.bf16.msra.mxu0 %v2712
    %3429 = vmatprep.subr.bf16.mxu0 %v2721
    %3430 = vmatpush1.bf16.msra.mxu0 %v2720
    %3431 = vmatprep.subr.bf16.mxu0 %v2729
    %3432 = vmatpush1.bf16.msra.mxu0 %v2728
    %3433 = vmatprep.subr.bf16.mxu0 %v2737
    %3434 = vmatpush1.bf16.msra.mxu0 %v2736
    %3435 = vmatprep.subr.bf16.mxu0 %v2745
    %3436 = vmatpush1.bf16.msra.mxu0 %v2744
    %3437 = vmatprep.subr.bf16.mxu0 %v2753
    %3438 = vmatpush1.bf16.msra.mxu0 %v2752
    %3439 = vmatprep.subr.bf16.mxu0 %v2761
    %3440 = vmatpush1.bf16.msra.mxu0 %v2760
    %3441 = vmatprep.mubr.bf16.mxu0 %v207
    %3442 = vmatmul.mubr.bf16.gmra.mrb[0].mxu0 %v206
    %v3443 = vpop.f32.mrb[0].mxu0
    %v3444 = vadd.f32 %v3401, %v3443
    %v3445 = vpop.f32.mrb[0].mxu0
    %v3446 = vadd.f32 %v3403, %v3445
    %v3447 = vpop.f32.mrb[0].mxu0
    %v3448 = vadd.f32 %v3405, %v3447
    %v3449 = vpop.f32.mrb[0].mxu0
    %v3450 = vadd.f32 %v3407, %v3449
    %3451 = vdwg.mxu0
    %3452 = vmatprep.subr.bf16.mxu0 %v2259
    %3453 = vmatpush1.bf16.msra.mxu0 %v2258
    %3454 = vmatprep.subr.bf16.mxu0 %v2267
    %3455 = vmatpush1.bf16.msra.mxu0 %v2266
    %3456 = vmatprep.subr.bf16.mxu0 %v2275
    %3457 = vmatpush1.bf16.msra.mxu0 %v2274
    %3458 = vmatprep.subr.bf16.mxu0 %v2283
    %3459 = vmatpush1.bf16.msra.mxu0 %v2282
    %3460 = vmatprep.subr.bf16.mxu0 %v2291
    %3461 = vmatpush1.bf16.msra.mxu0 %v2290
    %3462 = vmatprep.subr.bf16.mxu0 %v2299
    %3463 = vmatpush1.bf16.msra.mxu0 %v2298
    %3464 = vmatprep.subr.bf16.mxu0 %v2307
    %3465 = vmatpush1.bf16.msra.mxu0 %v2306
    %3466 = vmatprep.subr.bf16.mxu0 %v2315
    %3467 = vmatpush1.bf16.msra.mxu0 %v2314
    %3468 = vmatprep.subr.bf16.mxu0 %v2323
    %3469 = vmatpush1.bf16.msra.mxu0 %v2322
    %3470 = vmatprep.subr.bf16.mxu0 %v2331
    %3471 = vmatpush1.bf16.msra.mxu0 %v2330
    %3472 = vmatprep.subr.bf16.mxu0 %v2339
    %3473 = vmatpush1.bf16.msra.mxu0 %v2338
    %3474 = vmatprep.subr.bf16.mxu0 %v2347
    %3475 = vmatpush1.bf16.msra.mxu0 %v2346
    %3476 = vmatprep.subr.bf16.mxu0 %v2355
    %3477 = vmatpush1.bf16.msra.mxu0 %v2354
    %3478 = vmatprep.subr.bf16.mxu0 %v2363
    %3479 = vmatpush1.bf16.msra.mxu0 %v2362
    %3480 = vmatprep.subr.bf16.mxu0 %v2371
    %3481 = vmatpush1.bf16.msra.mxu0 %v2370
    %3482 = vmatprep.subr.bf16.mxu0 %v2379
    %3483 = vmatpush1.bf16.msra.mxu0 %v2378
    %3484 = vmatprep.mubr.bf16.mxu0 %v201
    %3485 = vmatmul.mubr.bf16.gmra.mrb[0].mxu0 %v200
    %v3486 = vpop.f32.mrb[0].mxu0
    %v3487 = vadd.f32 0.0, %v3486
    %v3488 = vpop.f32.mrb[0].mxu0
    %v3489 = vadd.f32 0.0, %v3488
    %v3490 = vpop.f32.mrb[0].mxu0
    %v3491 = vadd.f32 0.0, %v3490
    %v3492 = vpop.f32.mrb[0].mxu0
    %v3493 = vadd.f32 0.0, %v3492
    %3494 = vdwg.mxu0
    %3495 = vmatprep.subr.bf16.mxu0 %v2387
    %3496 = vmatpush1.bf16.msra.mxu0 %v2386
    %3497 = vmatprep.subr.bf16.mxu0 %v2395
    %3498 = vmatpush1.bf16.msra.mxu0 %v2394
    %3499 = vmatprep.subr.bf16.mxu0 %v2403
    %3500 = vmatpush1.bf16.msra.mxu0 %v2402
    %3501 = vmatprep.subr.bf16.mxu0 %v2411
    %3502 = vmatpush1.bf16.msra.mxu0 %v2410
    %3503 = vmatprep.subr.bf16.mxu0 %v2419
    %3504 = vmatpush1.bf16.msra.mxu0 %v2418
    %3505 = vmatprep.subr.bf16.mxu0 %v2427
    %3506 = vmatpush1.bf16.msra.mxu0 %v2426
    %3507 = vmatprep.subr.bf16.mxu0 %v2435
    %3508 = vmatpush1.bf16.msra.mxu0 %v2434
    %3509 = vmatprep.subr.bf16.mxu0 %v2443
    %3510 = vmatpush1.bf16.msra.mxu0 %v2442
    %3511 = vmatprep.subr.bf16.mxu0 %v2451
    %3512 = vmatpush1.bf16.msra.mxu0 %v2450
    %3513 = vmatprep.subr.bf16.mxu0 %v2459
    %3514 = vmatpush1.bf16.msra.mxu0 %v2458
    %3515 = vmatprep.subr.bf16.mxu0 %v2467
    %3516 = vmatpush1.bf16.msra.mxu0 %v2466
    %3517 = vmatprep.subr.bf16.mxu0 %v2475
    %3518 = vmatpush1.bf16.msra.mxu0 %v2474
    %3519 = vmatprep.subr.bf16.mxu0 %v2483
    %3520 = vmatpush1.bf16.msra.mxu0 %v2482
    %3521 = vmatprep.subr.bf16.mxu0 %v2491
    %3522 = vmatpush1.bf16.msra.mxu0 %v2490
    %3523 = vmatprep.subr.bf16.mxu0 %v2499
    %3524 = vmatpush1.bf16.msra.mxu0 %v2498
    %3525 = vmatprep.subr.bf16.mxu0 %v2507
    %3526 = vmatpush1.bf16.msra.mxu0 %v2506
    %3527 = vmatprep.mubr.bf16.mxu0 %v203
    %3528 = vmatmul.mubr.bf16.gmra.mrb[0].mxu0 %v202
    %v3529 = vpop.f32.mrb[0].mxu0
    %v3530 = vadd.f32 %v3487, %v3529
    %v3531 = vpop.f32.mrb[0].mxu0
    %v3532 = vadd.f32 %v3489, %v3531
    %v3533 = vpop.f32.mrb[0].mxu0
    %v3534 = vadd.f32 %v3491, %v3533
    %v3535 = vpop.f32.mrb[0].mxu0
    %v3536 = vadd.f32 %v3493, %v3535
    %3537 = vdwg.mxu0
    %3538 = vmatprep.subr.bf16.mxu0 %v2515
    %3539 = vmatpush1.bf16.msra.mxu0 %v2514
    %3540 = vmatprep.subr.bf16.mxu0 %v2523
    %3541 = vmatpush1.bf16.msra.mxu0 %v2522
    %3542 = vmatprep.subr.bf16.mxu0 %v2531
    %3543 = vmatpush1.bf16.msra.mxu0 %v2530
    %3544 = vmatprep.subr.bf16.mxu0 %v2539
    %3545 = vmatpush1.bf16.msra.mxu0 %v2538
    %3546 = vmatprep.subr.bf16.mxu0 %v2547
    %3547 = vmatpush1.bf16.msra.mxu0 %v2546
    %3548 = vmatprep.subr.bf16.mxu0 %v2555
    %3549 = vmatpush1.bf16.msra.mxu0 %v2554
    %3550 = vmatprep.subr.bf16.mxu0 %v2563
    %3551 = vmatpush1.bf16.msra.mxu0 %v2562
    %3552 = vmatprep.subr.bf16.mxu0 %v2571
    %3553 = vmatpush1.bf16.msra.mxu0 %v2570
    %3554 = vmatprep.subr.bf16.mxu0 %v2579
    %3555 = vmatpush1.bf16.msra.mxu0 %v2578
    %3556 = vmatprep.subr.bf16.mxu0 %v2587
    %3557 = vmatpush1.bf16.msra.mxu0 %v2586
    %3558 = vmatprep.subr.bf16.mxu0 %v2595
    %3559 = vmatpush1.bf16.msra.mxu0 %v2594
    %3560 = vmatprep.subr.bf16.mxu0 %v2603
    %3561 = vmatpush1.bf16.msra.mxu0 %v2602
    %3562 = vmatprep.subr.bf16.mxu0 %v2611
    %3563 = vmatpush1.bf16.msra.mxu0 %v2610
    %3564 = vmatprep.subr.bf16.mxu0 %v2619
    %3565 = vmatpush1.bf16.msra.mxu0 %v2618
    %3566 = vmatprep.subr.bf16.mxu0 %v2627
    %3567 = vmatpush1.bf16.msra.mxu0 %v2626
    %3568 = vmatprep.subr.bf16.mxu0 %v2635
    %3569 = vmatpush1.bf16.msra.mxu0 %v2634
    %3570 = vmatprep.mubr.bf16.mxu0 %v205
    %3571 = vmatmul.mubr.bf16.gmra.mrb[0].mxu0 %v204
    %v3572 = vpop.f32.mrb[0].mxu0
    %v3573 = vadd.f32 %v3530, %v3572
    %v3574 = vpop.f32.mrb[0].mxu0
    %v3575 = vadd.f32 %v3532, %v3574
    %v3576 = vpop.f32.mrb[0].mxu0
    %v3577 = vadd.f32 %v3534, %v3576
    %v3578 = vpop.f32.mrb[0].mxu0
    %v3579 = vadd.f32 %v3536, %v3578
    %3580 = vdwg.mxu0
    %3581 = vmatprep.subr.bf16.mxu0 %v2643
    %3582 = vmatpush1.bf16.msra.mxu0 %v2642
    %3583 = vmatprep.subr.bf16.mxu0 %v2651
    %3584 = vmatpush1.bf16.msra.mxu0 %v2650
    %3585 = vmatprep.subr.bf16.mxu0 %v2659
    %3586 = vmatpush1.bf16.msra.mxu0 %v2658
    %3587 = vmatprep.subr.bf16.mxu0 %v2667
    %3588 = vmatpush1.bf16.msra.mxu0 %v2666
    %3589 = vmatprep.subr.bf16.mxu0 %v2675
    %3590 = vmatpush1.bf16.msra.mxu0 %v2674
    %3591 = vmatprep.subr.bf16.mxu0 %v2683
    %3592 = vmatpush1.bf16.msra.mxu0 %v2682
    %3593 = vmatprep.subr.bf16.mxu0 %v2691
    %3594 = vmatpush1.bf16.msra.mxu0 %v2690
    %3595 = vmatprep.subr.bf16.mxu0 %v2699
    %3596 = vmatpush1.bf16.msra.mxu0 %v2698
    %3597 = vmatprep.subr.bf16.mxu0 %v2707
    %3598 = vmatpush1.bf16.msra.mxu0 %v2706
    %3599 = vmatprep.subr.bf16.mxu0 %v2715
    %3600 = vmatpush1.bf16.msra.mxu0 %v2714
    %3601 = vmatprep.subr.bf16.mxu0 %v2723
    %3602 = vmatpush1.bf16.msra.mxu0 %v2722
    %3603 = vmatprep.subr.bf16.mxu0 %v2731
    %3604 = vmatpush1.bf16.msra.mxu0 %v2730
    %3605 = vmatprep.subr.bf16.mxu0 %v2739
    %3606 = vmatpush1.bf16.msra.mxu0 %v2738
    %3607 = vmatprep.subr.bf16.mxu0 %v2747
    %3608 = vmatpush1.bf16.msra.mxu0 %v2746
    %3609 = vmatprep.subr.bf16.mxu0 %v2755
    %3610 = vmatpush1.bf16.msra.mxu0 %v2754
    %3611 = vmatprep.subr.bf16.mxu0 %v2763
    %3612 = vmatpush1.bf16.msra.mxu0 %v2762
    %3613 = vmatprep.mubr.bf16.mxu0 %v207
    %3614 = vmatmul.mubr.bf16.gmra.mrb[0].mxu0 %v206
    %v3615 = vpop.f32.mrb[0].mxu0
    %v3616 = vadd.f32 %v3573, %v3615
    %v3617 = vpop.f32.mrb[0].mxu0
    %v3618 = vadd.f32 %v3575, %v3617
    %v3619 = vpop.f32.mrb[0].mxu0
    %v3620 = vadd.f32 %v3577, %v3619
    %v3621 = vpop.f32.mrb[0].mxu0
    %v3622 = vadd.f32 %v3579, %v3621
    %3623 = vdwg.mxu0
    %3624 = vmatprep.subr.bf16.mxu0 %v2261
    %3625 = vmatpush1.bf16.msra.mxu0 %v2260
    %3626 = vmatprep.subr.bf16.mxu0 %v2269
    %3627 = vmatpush1.bf16.msra.mxu0 %v2268
    %3628 = vmatprep.subr.bf16.mxu0 %v2277
    %3629 = vmatpush1.bf16.msra.mxu0 %v2276
    %3630 = vmatprep.subr.bf16.mxu0 %v2285
    %3631 = vmatpush1.bf16.msra.mxu0 %v2284
    %3632 = vmatprep.subr.bf16.mxu0 %v2293
    %3633 = vmatpush1.bf16.msra.mxu0 %v2292
    %3634 = vmatprep.subr.bf16.mxu0 %v2301
    %3635 = vmatpush1.bf16.msra.mxu0 %v2300
    %3636 = vmatprep.subr.bf16.mxu0 %v2309
    %3637 = vmatpush1.bf16.msra.mxu0 %v2308
    %3638 = vmatprep.subr.bf16.mxu0 %v2317
    %3639 = vmatpush1.bf16.msra.mxu0 %v2316
    %3640 = vmatprep.subr.bf16.mxu0 %v2325
    %3641 = vmatpush1.bf16.msra.mxu0 %v2324
    %3642 = vmatprep.subr.bf16.mxu0 %v2333
    %3643 = vmatpush1.bf16.msra.mxu0 %v2332
    %3644 = vmatprep.subr.bf16.mxu0 %v2341
    %3645 = vmatpush1.bf16.msra.mxu0 %v2340
    %3646 = vmatprep.subr.bf16.mxu0 %v2349
    %3647 = vmatpush1.bf16.msra.mxu0 %v2348
    %3648 = vmatprep.subr.bf16.mxu0 %v2357
    %3649 = vmatpush1.bf16.msra.mxu0 %v2356
    %3650 = vmatprep.subr.bf16.mxu0 %v2365
    %3651 = vmatpush1.bf16.msra.mxu0 %v2364
    %3652 = vmatprep.subr.bf16.mxu0 %v2373
    %3653 = vmatpush1.bf16.msra.mxu0 %v2372
    %3654 = vmatprep.subr.bf16.mxu0 %v2381
    %3655 = vmatpush1.bf16.msra.mxu0 %v2380
    %3656 = vmatprep.mubr.bf16.mxu0 %v201
    %3657 = vmatmul.mubr.bf16.gmra.mrb[0].mxu0 %v200
    %v3658 = vpop.f32.mrb[0].mxu0
    %v3659 = vadd.f32 0.0, %v3658
    %v3660 = vpop.f32.mrb[0].mxu0
    %v3661 = vadd.f32 0.0, %v3660
    %v3662 = vpop.f32.mrb[0].mxu0
    %v3663 = vadd.f32 0.0, %v3662
    %v3664 = vpop.f32.mrb[0].mxu0
    %v3665 = vadd.f32 0.0, %v3664
    %3666 = vdwg.mxu0
    %3667 = vmatprep.subr.bf16.mxu0 %v2389
    %3668 = vmatpush1.bf16.msra.mxu0 %v2388
    %3669 = vmatprep.subr.bf16.mxu0 %v2397
    %3670 = vmatpush1.bf16.msra.mxu0 %v2396
    %3671 = vmatprep.subr.bf16.mxu0 %v2405
    %3672 = vmatpush1.bf16.msra.mxu0 %v2404
    %3673 = vmatprep.subr.bf16.mxu0 %v2413
    %3674 = vmatpush1.bf16.msra.mxu0 %v2412
    %3675 = vmatprep.subr.bf16.mxu0 %v2421
    %3676 = vmatpush1.bf16.msra.mxu0 %v2420
    %3677 = vmatprep.subr.bf16.mxu0 %v2429
    %3678 = vmatpush1.bf16.msra.mxu0 %v2428
    %3679 = vmatprep.subr.bf16.mxu0 %v2437
    %3680 = vmatpush1.bf16.msra.mxu0 %v2436
    %3681 = vmatprep.subr.bf16.mxu0 %v2445
    %3682 = vmatpush1.bf16.msra.mxu0 %v2444
    %3683 = vmatprep.subr.bf16.mxu0 %v2453
    %3684 = vmatpush1.bf16.msra.mxu0 %v2452
    %3685 = vmatprep.subr.bf16.mxu0 %v2461
    %3686 = vmatpush1.bf16.msra.mxu0 %v2460
    %3687 = vmatprep.subr.bf16.mxu0 %v2469
    %3688 = vmatpush1.bf16.msra.mxu0 %v2468
    %3689 = vmatprep.subr.bf16.mxu0 %v2477
    %3690 = vmatpush1.bf16.msra.mxu0 %v2476
    %3691 = vmatprep.subr.bf16.mxu0 %v2485
    %3692 = vmatpush1.bf16.msra.mxu0 %v2484
    %3693 = vmatprep.subr.bf16.mxu0 %v2493
    %3694 = vmatpush1.bf16.msra.mxu0 %v2492
    %3695 = vmatprep.subr.bf16.mxu0 %v2501
    %3696 = vmatpush1.bf16.msra.mxu0 %v2500
    %3697 = vmatprep.subr.bf16.mxu0 %v2509
    %3698 = vmatpush1.bf16.msra.mxu0 %v2508
    %3699 = vmatprep.mubr.bf16.mxu0 %v203
    %3700 = vmatmul.mubr.bf16.gmra.mrb[0].mxu0 %v202
    %v3701 = vpop.f32.mrb[0].mxu0
    %v3702 = vadd.f32 %v3659, %v3701
    %v3703 = vpop.f32.mrb[0].mxu0
    %v3704 = vadd.f32 %v3661, %v3703
    %v3705 = vpop.f32.mrb[0].mxu0
    %v3706 = vadd.f32 %v3663, %v3705
    %v3707 = vpop.f32.mrb[0].mxu0
    %v3708 = vadd.f32 %v3665, %v3707
    %3709 = vdwg.mxu0
    %3710 = vmatprep.subr.bf16.mxu0 %v2517
    %3711 = vmatpush1.bf16.msra.mxu0 %v2516
    %3712 = vmatprep.subr.bf16.mxu0 %v2525
    %3713 = vmatpush1.bf16.msra.mxu0 %v2524
    %3714 = vmatprep.subr.bf16.mxu0 %v2533
    %3715 = vmatpush1.bf16.msra.mxu0 %v2532
    %3716 = vmatprep.subr.bf16.mxu0 %v2541
    %3717 = vmatpush1.bf16.msra.mxu0 %v2540
    %3718 = vmatprep.subr.bf16.mxu0 %v2549
    %3719 = vmatpush1.bf16.msra.mxu0 %v2548
    %3720 = vmatprep.subr.bf16.mxu0 %v2557
    %3721 = vmatpush1.bf16.msra.mxu0 %v2556
    %3722 = vmatprep.subr.bf16.mxu0 %v2565
    %3723 = vmatpush1.bf16.msra.mxu0 %v2564
    %3724 = vmatprep.subr.bf16.mxu0 %v2573
    %3725 = vmatpush1.bf16.msra.mxu0 %v2572
    %3726 = vmatprep.subr.bf16.mxu0 %v2581
    %3727 = vmatpush1.bf16.msra.mxu0 %v2580
    %3728 = vmatprep.subr.bf16.mxu0 %v2589
    %3729 = vmatpush1.bf16.msra.mxu0 %v2588
    %3730 = vmatprep.subr.bf16.mxu0 %v2597
    %3731 = vmatpush1.bf16.msra.mxu0 %v2596
    %3732 = vmatprep.subr.bf16.mxu0 %v2605
    %3733 = vmatpush1.bf16.msra.mxu0 %v2604
    %3734 = vmatprep.subr.bf16.mxu0 %v2613
    %3735 = vmatpush1.bf16.msra.mxu0 %v2612
    %3736 = vmatprep.subr.bf16.mxu0 %v2621
    %3737 = vmatpush1.bf16.msra.mxu0 %v2620
    %3738 = vmatprep.subr.bf16.mxu0 %v2629
    %3739 = vmatpush1.bf16.msra.mxu0 %v2628
    %3740 = vmatprep.subr.bf16.mxu0 %v2637
    %3741 = vmatpush1.bf16.msra.mxu0 %v2636
    %3742 = vmatprep.mubr.bf16.mxu0 %v205
    %3743 = vmatmul.mubr.bf16.gmra.mrb[0].mxu0 %v204
    %v3744 = vpop.f32.mrb[0].mxu0
    %v3745 = vadd.f32 %v3702, %v3744
    %v3746 = vpop.f32.mrb[0].mxu0
    %v3747 = vadd.f32 %v3704, %v3746
    %v3748 = vpop.f32.mrb[0].mxu0
    %v3749 = vadd.f32 %v3706, %v3748
    %v3750 = vpop.f32.mrb[0].mxu0
    %v3751 = vadd.f32 %v3708, %v3750
    %3752 = vdwg.mxu0
    %3753 = vmatprep.subr.bf16.mxu0 %v2645
    %3754 = vmatpush1.bf16.msra.mxu0 %v2644
    %3755 = vmatprep.subr.bf16.mxu0 %v2653
    %3756 = vmatpush1.bf16.msra.mxu0 %v2652
    %3757 = vmatprep.subr.bf16.mxu0 %v2661
    %3758 = vmatpush1.bf16.msra.mxu0 %v2660
    %3759 = vmatprep.subr.bf16.mxu0 %v2669
    %3760 = vmatpush1.bf16.msra.mxu0 %v2668
    %3761 = vmatprep.subr.bf16.mxu0 %v2677
    %3762 = vmatpush1.bf16.msra.mxu0 %v2676
    %3763 = vmatprep.subr.bf16.mxu0 %v2685
    %3764 = vmatpush1.bf16.msra.mxu0 %v2684
    %3765 = vmatprep.subr.bf16.mxu0 %v2693
    %3766 = vmatpush1.bf16.msra.mxu0 %v2692
    %3767 = vmatprep.subr.bf16.mxu0 %v2701
    %3768 = vmatpush1.bf16.msra.mxu0 %v2700
    %3769 = vmatprep.subr.bf16.mxu0 %v2709
    %3770 = vmatpush1.bf16.msra.mxu0 %v2708
    %3771 = vmatprep.subr.bf16.mxu0 %v2717
    %3772 = vmatpush1.bf16.msra.mxu0 %v2716
    %3773 = vmatprep.subr.bf16.mxu0 %v2725
    %3774 = vmatpush1.bf16.msra.mxu0 %v2724
    %3775 = vmatprep.subr.bf16.mxu0 %v2733
    %3776 = vmatpush1.bf16.msra.mxu0 %v2732
    %3777 = vmatprep.subr.bf16.mxu0 %v2741
    %3778 = vmatpush1.bf16.msra.mxu0 %v2740
    %3779 = vmatprep.subr.bf16.mxu0 %v2749
    %3780 = vmatpush1.bf16.msra.mxu0 %v2748
    %3781 = vmatprep.subr.bf16.mxu0 %v2757
    %3782 = vmatpush1.bf16.msra.mxu0 %v2756
    %3783 = vmatprep.subr.bf16.mxu0 %v2765
    %3784 = vmatpush1.bf16.msra.mxu0 %v2764
    %3785 = vmatprep.mubr.bf16.mxu0 %v207
    %3786 = vmatmul.mubr.bf16.gmra.mrb[0].mxu0 %v206
    %v3787 = vpop.f32.mrb[0].mxu0
    %v3788 = vadd.f32 %v3745, %v3787
    %v3789 = vpop.f32.mrb[0].mxu0
    %v3790 = vadd.f32 %v3747, %v3789
    %v3791 = vpop.f32.mrb[0].mxu0
    %v3792 = vadd.f32 %v3749, %v3791
    %v3793 = vpop.f32.mrb[0].mxu0
    %v3794 = vadd.f32 %v3751, %v3793
    %3795 = vdwg.mxu0
    %3796 = vmatprep.subr.bf16.mxu0 %v2263
    %3797 = vmatpush1.bf16.msra.mxu0 %v2262
    %3798 = vmatprep.subr.bf16.mxu0 %v2271
    %3799 = vmatpush1.bf16.msra.mxu0 %v2270
    %3800 = vmatprep.subr.bf16.mxu0 %v2279
    %3801 = vmatpush1.bf16.msra.mxu0 %v2278
    %3802 = vmatprep.subr.bf16.mxu0 %v2287
    %3803 = vmatpush1.bf16.msra.mxu0 %v2286
    %3804 = vmatprep.subr.bf16.mxu0 %v2295
    %3805 = vmatpush1.bf16.msra.mxu0 %v2294
    %3806 = vmatprep.subr.bf16.mxu0 %v2303
    %3807 = vmatpush1.bf16.msra.mxu0 %v2302
    %3808 = vmatprep.subr.bf16.mxu0 %v2311
    %3809 = vmatpush1.bf16.msra.mxu0 %v2310
    %3810 = vmatprep.subr.bf16.mxu0 %v2319
    %3811 = vmatpush1.bf16.msra.mxu0 %v2318
    %3812 = vmatprep.subr.bf16.mxu0 %v2327
    %3813 = vmatpush1.bf16.msra.mxu0 %v2326
    %3814 = vmatprep.subr.bf16.mxu0 %v2335
    %3815 = vmatpush1.bf16.msra.mxu0 %v2334
    %3816 = vmatprep.subr.bf16.mxu0 %v2343
    %3817 = vmatpush1.bf16.msra.mxu0 %v2342
    %3818 = vmatprep.subr.bf16.mxu0 %v2351
    %3819 = vmatpush1.bf16.msra.mxu0 %v2350
    %3820 = vmatprep.subr.bf16.mxu0 %v2359
    %3821 = vmatpush1.bf16.msra.mxu0 %v2358
    %3822 = vmatprep.subr.bf16.mxu0 %v2367
    %3823 = vmatpush1.bf16.msra.mxu0 %v2366
    %3824 = vmatprep.subr.bf16.mxu0 %v2375
    %3825 = vmatpush1.bf16.msra.mxu0 %v2374
    %3826 = vmatprep.subr.bf16.mxu0 %v2383
    %3827 = vmatpush1.bf16.msra.mxu0 %v2382
    %3828 = vmatprep.mubr.bf16.mxu0 %v201
    %3829 = vmatmul.mubr.bf16.gmra.mrb[0].mxu0 %v200
    %v3830 = vpop.f32.mrb[0].mxu0
    %v3831 = vadd.f32 0.0, %v3830
    %v3832 = vpop.f32.mrb[0].mxu0
    %v3833 = vadd.f32 0.0, %v3832
    %v3834 = vpop.f32.mrb[0].mxu0
    %v3835 = vadd.f32 0.0, %v3834
    %v3836 = vpop.f32.mrb[0].mxu0
    %v3837 = vadd.f32 0.0, %v3836
    %3838 = vdwg.mxu0
    %3839 = vmatprep.subr.bf16.mxu0 %v2391
    %3840 = vmatpush1.bf16.msra.mxu0 %v2390
    %3841 = vmatprep.subr.bf16.mxu0 %v2399
    %3842 = vmatpush1.bf16.msra.mxu0 %v2398
    %3843 = vmatprep.subr.bf16.mxu0 %v2407
    %3844 = vmatpush1.bf16.msra.mxu0 %v2406
    %3845 = vmatprep.subr.bf16.mxu0 %v2415
    %3846 = vmatpush1.bf16.msra.mxu0 %v2414
    %3847 = vmatprep.subr.bf16.mxu0 %v2423
    %3848 = vmatpush1.bf16.msra.mxu0 %v2422
    %3849 = vmatprep.subr.bf16.mxu0 %v2431
    %3850 = vmatpush1.bf16.msra.mxu0 %v2430
    %3851 = vmatprep.subr.bf16.mxu0 %v2439
    %3852 = vmatpush1.bf16.msra.mxu0 %v2438
    %3853 = vmatprep.subr.bf16.mxu0 %v2447
    %3854 = vmatpush1.bf16.msra.mxu0 %v2446
    %3855 = vmatprep.subr.bf16.mxu0 %v2455
    %3856 = vmatpush1.bf16.msra.mxu0 %v2454
    %3857 = vmatprep.subr.bf16.mxu0 %v2463
    %3858 = vmatpush1.bf16.msra.mxu0 %v2462
    %3859 = vmatprep.subr.bf16.mxu0 %v2471
    %3860 = vmatpush1.bf16.msra.mxu0 %v2470
    %3861 = vmatprep.subr.bf16.mxu0 %v2479
    %3862 = vmatpush1.bf16.msra.mxu0 %v2478
    %3863 = vmatprep.subr.bf16.mxu0 %v2487
    %3864 = vmatpush1.bf16.msra.mxu0 %v2486
    %3865 = vmatprep.subr.bf16.mxu0 %v2495
    %3866 = vmatpush1.bf16.msra.mxu0 %v2494
    %3867 = vmatprep.subr.bf16.mxu0 %v2503
    %3868 = vmatpush1.bf16.msra.mxu0 %v2502
    %3869 = vmatprep.subr.bf16.mxu0 %v2511
    %3870 = vmatpush1.bf16.msra.mxu0 %v2510
    %3871 = vmatprep.mubr.bf16.mxu0 %v203
    %3872 = vmatmul.mubr.bf16.gmra.mrb[0].mxu0 %v202
    %v3873 = vpop.f32.mrb[0].mxu0
    %v3874 = vadd.f32 %v3831, %v3873
    %v3875 = vpop.f32.mrb[0].mxu0
    %v3876 = vadd.f32 %v3833, %v3875
    %v3877 = vpop.f32.mrb[0].mxu0
    %v3878 = vadd.f32 %v3835, %v3877
    %v3879 = vpop.f32.mrb[0].mxu0
    %v3880 = vadd.f32 %v3837, %v3879
    %3881 = vdwg.mxu0
    %3882 = vmatprep.subr.bf16.mxu0 %v2519
    %3883 = vmatpush1.bf16.msra.mxu0 %v2518
    %3884 = vmatprep.subr.bf16.mxu0 %v2527
    %3885 = vmatpush1.bf16.msra.mxu0 %v2526
    %3886 = vmatprep.subr.bf16.mxu0 %v2535
    %3887 = vmatpush1.bf16.msra.mxu0 %v2534
    %3888 = vmatprep.subr.bf16.mxu0 %v2543
    %3889 = vmatpush1.bf16.msra.mxu0 %v2542
    %3890 = vmatprep.subr.bf16.mxu0 %v2551
    %3891 = vmatpush1.bf16.msra.mxu0 %v2550
    %3892 = vmatprep.subr.bf16.mxu0 %v2559
    %3893 = vmatpush1.bf16.msra.mxu0 %v2558
    %3894 = vmatprep.subr.bf16.mxu0 %v2567
    %3895 = vmatpush1.bf16.msra.mxu0 %v2566
    %3896 = vmatprep.subr.bf16.mxu0 %v2575
    %3897 = vmatpush1.bf16.msra.mxu0 %v2574
    %3898 = vmatprep.subr.bf16.mxu0 %v2583
    %3899 = vmatpush1.bf16.msra.mxu0 %v2582
    %3900 = vmatprep.subr.bf16.mxu0 %v2591
    %3901 = vmatpush1.bf16.msra.mxu0 %v2590
    %3902 = vmatprep.subr.bf16.mxu0 %v2599
    %3903 = vmatpush1.bf16.msra.mxu0 %v2598
    %3904 = vmatprep.subr.bf16.mxu0 %v2607
    %3905 = vmatpush1.bf16.msra.mxu0 %v2606
    %3906 = vmatprep.subr.bf16.mxu0 %v2615
    %3907 = vmatpush1.bf16.msra.mxu0 %v2614
    %3908 = vmatprep.subr.bf16.mxu0 %v2623
    %3909 = vmatpush1.bf16.msra.mxu0 %v2622
    %3910 = vmatprep.subr.bf16.mxu0 %v2631
    %3911 = vmatpush1.bf16.msra.mxu0 %v2630
    %3912 = vmatprep.subr.bf16.mxu0 %v2639
    %3913 = vmatpush1.bf16.msra.mxu0 %v2638
    %3914 = vmatprep.mubr.bf16.mxu0 %v205
    %3915 = vmatmul.mubr.bf16.gmra.mrb[0].mxu0 %v204
    %v3916 = vpop.f32.mrb[0].mxu0
    %v3917 = vadd.f32 %v3874, %v3916
    %v3918 = vpop.f32.mrb[0].mxu0
    %v3919 = vadd.f32 %v3876, %v3918
    %v3920 = vpop.f32.mrb[0].mxu0
    %v3921 = vadd.f32 %v3878, %v3920
    %v3922 = vpop.f32.mrb[0].mxu0
    %v3923 = vadd.f32 %v3880, %v3922
    %3924 = vdwg.mxu0
    %3925 = vmatprep.subr.bf16.mxu0 %v2647
    %3926 = vmatpush1.bf16.msra.mxu0 %v2646
    %3927 = vmatprep.subr.bf16.mxu0 %v2655
    %3928 = vmatpush1.bf16.msra.mxu0 %v2654
    %3929 = vmatprep.subr.bf16.mxu0 %v2663
    %3930 = vmatpush1.bf16.msra.mxu0 %v2662
    %3931 = vmatprep.subr.bf16.mxu0 %v2671
    %3932 = vmatpush1.bf16.msra.mxu0 %v2670
    %3933 = vmatprep.subr.bf16.mxu0 %v2679
    %3934 = vmatpush1.bf16.msra.mxu0 %v2678
    %3935 = vmatprep.subr.bf16.mxu0 %v2687
    %3936 = vmatpush1.bf16.msra.mxu0 %v2686
    %3937 = vmatprep.subr.bf16.mxu0 %v2695
    %3938 = vmatpush1.bf16.msra.mxu0 %v2694
    %3939 = vmatprep.subr.bf16.mxu0 %v2703
    %3940 = vmatpush1.bf16.msra.mxu0 %v2702
    %3941 = vmatprep.subr.bf16.mxu0 %v2711
    %3942 = vmatpush1.bf16.msra.mxu0 %v2710
    %3943 = vmatprep.subr.bf16.mxu0 %v2719
    %3944 = vmatpush1.bf16.msra.mxu0 %v2718
    %3945 = vmatprep.subr.bf16.mxu0 %v2727
    %3946 = vmatpush1.bf16.msra.mxu0 %v2726
    %3947 = vmatprep.subr.bf16.mxu0 %v2735
    %3948 = vmatpush1.bf16.msra.mxu0 %v2734
    %3949 = vmatprep.subr.bf16.mxu0 %v2743
    %3950 = vmatpush1.bf16.msra.mxu0 %v2742
    %3951 = vmatprep.subr.bf16.mxu0 %v2751
    %3952 = vmatpush1.bf16.msra.mxu0 %v2750
    %3953 = vmatprep.subr.bf16.mxu0 %v2759
    %3954 = vmatpush1.bf16.msra.mxu0 %v2758
    %3955 = vmatprep.subr.bf16.mxu0 %v2767
    %3956 = vmatpush1.bf16.msra.mxu0 %v2766
    %3957 = vmatprep.mubr.bf16.mxu0 %v207
    %3958 = vmatmul.mubr.bf16.gmra.mrb[0].mxu0 %v206
    %v3959 = vpop.f32.mrb[0].mxu0
    %v3960 = vadd.f32 %v3917, %v3959
    %v3961 = vpop.f32.mrb[0].mxu0
    %v3962 = vadd.f32 %v3919, %v3961
    %v3963 = vpop.f32.mrb[0].mxu0
    %v3964 = vadd.f32 %v3921, %v3963
    %v3965 = vpop.f32.mrb[0].mxu0
    %v3966 = vadd.f32 %v3923, %v3965
    %3967 = vdwg.mxu0
    %v3968 = vadd.f32 %v168, %v3444
    %v3969 = vadd.f32 %v169, %v3446
    %v3970 = vadd.f32 %v170, %v3616
    %v3971 = vadd.f32 %v171, %v3618
    %v3972 = vadd.f32 %v172, %v3788
    %v3973 = vadd.f32 %v173, %v3790
    %v3974 = vadd.f32 %v174, %v3960
    %v3975 = vadd.f32 %v175, %v3962
    %v3976 = vadd.f32 %v176, %v3448
    %v3977 = vadd.f32 %v177, %v3450
    %v3978 = vadd.f32 %v178, %v3620
    %v3979 = vadd.f32 %v179, %v3622
    %v3980 = vadd.f32 %v180, %v3792
    %v3981 = vadd.f32 %v181, %v3794
    %v3982 = vadd.f32 %v182, %v3964
    %v3983 = vadd.f32 %v183, %v3966
    %3984 = vst [vmem:[#allocation2] sm:$0xff] %v3968
    %3985 = vst [vmem:[#allocation2 + $0x8] sm:$0xff] %v3969
    %3986 = vst [vmem:[#allocation2 + $0x10] sm:$0xff] %v3970
    %3987 = vst [vmem:[#allocation2 + $0x18] sm:$0xff] %v3971
    %3988 = vst [vmem:[#allocation2 + $0x20] sm:$0xff] %v3972
    %3989 = vst [vmem:[#allocation2 + $0x28] sm:$0xff] %v3973
    %3990 = vst [vmem:[#allocation2 + $0x30] sm:$0xff] %v3974
    %3991 = vst [vmem:[#allocation2 + $0x38] sm:$0xff] %v3975
    %3992 = vst [vmem:[#allocation2 + $0x40] sm:$0xff] %v3976
    %3993 = vst [vmem:[#allocation2 + $0x48] sm:$0xff] %v3977
    %3994 = vst [vmem:[#allocation2 + $0x50] sm:$0xff] %v3978
    %3995 = vst [vmem:[#allocation2 + $0x58] sm:$0xff] %v3979
    %3996 = vst [vmem:[#allocation2 + $0x60] sm:$0xff] %v3980
    %3997 = vst [vmem:[#allocation2 + $0x68] sm:$0xff] %v3981
    %3998 = vst [vmem:[#allocation2 + $0x70] sm:$0xff] %v3982
    %3999 = vst [vmem:[#allocation2 + $0x78] sm:$0xff] %v3983
    // Predicated region
    $region78: #{tpu_custom_call.1} parent=1 // pred_check
      %p4000 = pneg %p148
    $region79: #{tpu_custom_call.1} parent=1 // pred_check_branch
      %4002 = sbr.rel (%p4000) target = $region81
    $region80: #{tpu_custom_call.1} parent=1 // pred_region
      %v4003 = vld [vmem:[#allocation2] sm:$0xff]
      %v4004 = vld [vmem:[#allocation2 + $0x8] sm:$0xff]
      %v4005 = vld [vmem:[#allocation2 + $0x10] sm:$0xff]
      %v4006 = vld [vmem:[#allocation2 + $0x18] sm:$0xff]
      %v4007 = vld [vmem:[#allocation2 + $0x20] sm:$0xff]
      %v4008 = vld [vmem:[#allocation2 + $0x28] sm:$0xff]
      %v4009 = vld [vmem:[#allocation2 + $0x30] sm:$0xff]
      %v4010 = vld [vmem:[#allocation2 + $0x38] sm:$0xff]
      %v4011 = vld [vmem:[#allocation2 + $0x40] sm:$0xff]
      %v4012 = vld [vmem:[#allocation2 + $0x48] sm:$0xff]
      %v4013 = vld [vmem:[#allocation2 + $0x50] sm:$0xff]
      %v4014 = vld [vmem:[#allocation2 + $0x58] sm:$0xff]
      %v4015 = vld [vmem:[#allocation2 + $0x60] sm:$0xff]
      %v4016 = vld [vmem:[#allocation2 + $0x68] sm:$0xff]
      %v4017 = vld [vmem:[#allocation2 + $0x70] sm:$0xff]
      %v4018 = vld [vmem:[#allocation2 + $0x78] sm:$0xff]
      %v4019 = vld [vmem:[#allocation8] sm:$0xff]
      %v4021 = vlaneseq
      %v4022 = vshrl.u32 %v4021, 7
      %v4023 = vsub.s32 0, %v4022
      %v4024 = vrot.slane %v4019, %v4023
      %v4025 = vlaneseq
      %v4026 = vshrl.u32 %v4025, 7
      %v4027 = vsub.s32 1, %v4026
      %v4028 = vrot.slane %v4019, %v4027
      %v4029 = vlaneseq
      %v4030 = vshrl.u32 %v4029, 7
      %v4031 = vsub.s32 2, %v4030
      %v4032 = vrot.slane %v4019, %v4031
      %v4033 = vlaneseq
      %v4034 = vshrl.u32 %v4033, 7
      %v4035 = vsub.s32 3, %v4034
      %v4036 = vrot.slane %v4019, %v4035
      %v4037 = vlaneseq
      %v4038 = vshrl.u32 %v4037, 7
      %v4039 = vsub.s32 4, %v4038
      %v4040 = vrot.slane %v4019, %v4039
      %v4041 = vlaneseq
      %v4042 = vshrl.u32 %v4041, 7
      %v4043 = vsub.s32 5, %v4042
      %v4044 = vrot.slane %v4019, %v4043
      %v4045 = vlaneseq
      %v4046 = vshrl.u32 %v4045, 7
      %v4047 = vsub.s32 6, %v4046
      %v4048 = vrot.slane %v4019, %v4047
      %v4049 = vlaneseq
      %v4050 = vshrl.u32 %v4049, 7
      %v4051 = vsub.s32 7, %v4050
      %v4052 = vrot.slane %v4019, %v4051
      %v4061 = vadd.f32 %v4003, %v4024
      %v4062 = vadd.f32 %v4004, %v4028
      %v4063 = vadd.f32 %v4005, %v4032
      %v4064 = vadd.f32 %v4006, %v4036
      %v4065 = vadd.f32 %v4007, %v4040
      %v4066 = vadd.f32 %v4008, %v4044
      %v4067 = vadd.f32 %v4009, %v4048
      %v4068 = vadd.f32 %v4010, %v4052
      %v4069 = vadd.f32 %v4011, %v4024
      %v4070 = vadd.f32 %v4012, %v4028
      %v4071 = vadd.f32 %v4013, %v4032
      %v4072 = vadd.f32 %v4014, %v4036
      %v4073 = vadd.f32 %v4015, %v4040
      %v4074 = vadd.f32 %v4016, %v4044
      %v4075 = vadd.f32 %v4017, %v4048
      %v4076 = vadd.f32 %v4018, %v4052
      %vm4077 = vcmp.gt.f32.partialorder %v4061, 0.0
      %vm4078 = vcmp.gt.f32.partialorder %v4062, 0.0
      %vm4079 = vcmp.gt.f32.partialorder %v4063, 0.0
      %vm4080 = vcmp.gt.f32.partialorder %v4064, 0.0
      %vm4081 = vcmp.gt.f32.partialorder %v4065, 0.0
      %vm4082 = vcmp.gt.f32.partialorder %v4066, 0.0
      %vm4083 = vcmp.gt.f32.partialorder %v4067, 0.0
      %vm4084 = vcmp.gt.f32.partialorder %v4068, 0.0
      %vm4085 = vcmp.gt.f32.partialorder %v4069, 0.0
      %vm4086 = vcmp.gt.f32.partialorder %v4070, 0.0
      %vm4087 = vcmp.gt.f32.partialorder %v4071, 0.0
      %vm4088 = vcmp.gt.f32.partialorder %v4072, 0.0
      %vm4089 = vcmp.gt.f32.partialorder %v4073, 0.0
      %vm4090 = vcmp.gt.f32.partialorder %v4074, 0.0
      %vm4091 = vcmp.gt.f32.partialorder %v4075, 0.0
      %vm4092 = vcmp.gt.f32.partialorder %v4076, 0.0
      %v4093 = vmul.f32 %v4061, 0.2
      %v4094 = vmul.f32 %v4062, 0.2
      %v4095 = vmul.f32 %v4063, 0.2
      %v4096 = vmul.f32 %v4064, 0.2
      %v4097 = vmul.f32 %v4065, 0.2
      %v4098 = vmul.f32 %v4066, 0.2
      %v4099 = vmul.f32 %v4067, 0.2
      %v4100 = vmul.f32 %v4068, 0.2
      %v4101 = vmul.f32 %v4069, 0.2
      %v4102 = vmul.f32 %v4070, 0.2
      %v4103 = vmul.f32 %v4071, 0.2
      %v4104 = vmul.f32 %v4072, 0.2
      %v4105 = vmul.f32 %v4073, 0.2
      %v4106 = vmul.f32 %v4074, 0.2
      %v4107 = vmul.f32 %v4075, 0.2
      %v4108 = vmul.f32 %v4076, 0.2
      %v4109 = vsel %vm4077, %v4061, %v4093
      %v4110 = vsel %vm4078, %v4062, %v4094
      %v4111 = vsel %vm4079, %v4063, %v4095
      %v4112 = vsel %vm4080, %v4064, %v4096
      %v4113 = vsel %vm4081, %v4065, %v4097
      %v4114 = vsel %vm4082, %v4066, %v4098
      %v4115 = vsel %vm4083, %v4067, %v4099
      %v4116 = vsel %vm4084, %v4068, %v4100
      %v4117 = vsel %vm4085, %v4069, %v4101
      %v4118 = vsel %vm4086, %v4070, %v4102
      %v4119 = vsel %vm4087, %v4071, %v4103
      %v4120 = vsel %vm4088, %v4072, %v4104
      %v4121 = vsel %vm4089, %v4073, %v4105
      %v4122 = vsel %vm4090, %v4074, %v4106
      %v4123 = vsel %vm4091, %v4075, %v4107
      %v4124 = vsel %vm4092, %v4076, %v4108
      %v4125 = vpack.c.bf16 %v4117, %v4109
      %v4126 = vpack.c.bf16 %v4118, %v4110
      %v4127 = vpack.c.bf16 %v4119, %v4111
      %v4128 = vpack.c.bf16 %v4120, %v4112
      %v4129 = vpack.c.bf16 %v4121, %v4113
      %v4130 = vpack.c.bf16 %v4122, %v4114
      %v4131 = vpack.c.bf16 %v4123, %v4115
      %v4132 = vpack.c.bf16 %v4124, %v4116
      %v4133 = vld [vmem:[#allocation9] sm:$0xff]
      %v4134 = vld [vmem:[#allocation9 + $0x8] sm:$0xff]
      %v4135 = vld [vmem:[#allocation9 + $0x10] sm:$0xff]
      %v4136 = vld [vmem:[#allocation9 + $0x18] sm:$0xff]
      %v4137 = vld [vmem:[#allocation9 + $0x20] sm:$0xff]
      %v4138 = vld [vmem:[#allocation9 + $0x28] sm:$0xff]
      %v4139 = vld [vmem:[#allocation9 + $0x30] sm:$0xff]
      %v4140 = vld [vmem:[#allocation9 + $0x38] sm:$0xff]
      %v4141 = vld [vmem:[#allocation9 + $0x40] sm:$0xff]
      %v4142 = vld [vmem:[#allocation9 + $0x48] sm:$0xff]
      %v4143 = vld [vmem:[#allocation9 + $0x50] sm:$0xff]
      %v4144 = vld [vmem:[#allocation9 + $0x58] sm:$0xff]
      %v4145 = vld [vmem:[#allocation9 + $0x60] sm:$0xff]
      %v4146 = vld [vmem:[#allocation9 + $0x68] sm:$0xff]
      %v4147 = vld [vmem:[#allocation9 + $0x70] sm:$0xff]
      %v4148 = vld [vmem:[#allocation9 + $0x78] sm:$0xff]
      %v4149 = vld [vmem:[#allocation9 + $0x80] sm:$0xff]
      %v4150 = vld [vmem:[#allocation9 + $0x88] sm:$0xff]
      %v4151 = vld [vmem:[#allocation9 + $0x90] sm:$0xff]
      %v4152 = vld [vmem:[#allocation9 + $0x98] sm:$0xff]
      %v4153 = vld [vmem:[#allocation9 + $0xa0] sm:$0xff]
      %v4154 = vld [vmem:[#allocation9 + $0xa8] sm:$0xff]
      %v4155 = vld [vmem:[#allocation9 + $0xb0] sm:$0xff]
      %v4156 = vld [vmem:[#allocation9 + $0xb8] sm:$0xff]
      %v4157 = vld [vmem:[#allocation9 + $0xc0] sm:$0xff]
      %v4158 = vld [vmem:[#allocation9 + $0xc8] sm:$0xff]
      %v4159 = vld [vmem:[#allocation9 + $0xd0] sm:$0xff]
      %v4160 = vld [vmem:[#allocation9 + $0xd8] sm:$0xff]
      %v4161 = vld [vmem:[#allocation9 + $0xe0] sm:$0xff]
      %v4162 = vld [vmem:[#allocation9 + $0xe8] sm:$0xff]
      %v4163 = vld [vmem:[#allocation9 + $0xf0] sm:$0xff]
      %v4164 = vld [vmem:[#allocation9 + $0xf8] sm:$0xff]
      %v4165 = vld [vmem:[#allocation9 + $0x100] sm:$0xff]
      %v4166 = vld [vmem:[#allocation9 + $0x108] sm:$0xff]
      %v4167 = vld [vmem:[#allocation9 + $0x110] sm:$0xff]
      %v4168 = vld [vmem:[#allocation9 + $0x118] sm:$0xff]
      %v4169 = vld [vmem:[#allocation9 + $0x120] sm:$0xff]
      %v4170 = vld [vmem:[#allocation9 + $0x128] sm:$0xff]
      %v4171 = vld [vmem:[#allocation9 + $0x130] sm:$0xff]
      %v4172 = vld [vmem:[#allocation9 + $0x138] sm:$0xff]
      %v4173 = vld [vmem:[#allocation9 + $0x140] sm:$0xff]
      %v4174 = vld [vmem:[#allocation9 + $0x148] sm:$0xff]
      %v4175 = vld [vmem:[#allocation9 + $0x150] sm:$0xff]
      %v4176 = vld [vmem:[#allocation9 + $0x158] sm:$0xff]
      %v4177 = vld [vmem:[#allocation9 + $0x160] sm:$0xff]
      %v4178 = vld [vmem:[#allocation9 + $0x168] sm:$0xff]
      %v4179 = vld [vmem:[#allocation9 + $0x170] sm:$0xff]
      %v4180 = vld [vmem:[#allocation9 + $0x178] sm:$0xff]
      %v4181 = vld [vmem:[#allocation9 + $0x180] sm:$0xff]
      %v4182 = vld [vmem:[#allocation9 + $0x188] sm:$0xff]
      %v4183 = vld [vmem:[#allocation9 + $0x190] sm:$0xff]
      %v4184 = vld [vmem:[#allocation9 + $0x198] sm:$0xff]
      %v4185 = vld [vmem:[#allocation9 + $0x1a0] sm:$0xff]
      %v4186 = vld [vmem:[#allocation9 + $0x1a8] sm:$0xff]
      %v4187 = vld [vmem:[#allocation9 + $0x1b0] sm:$0xff]
      %v4188 = vld [vmem:[#allocation9 + $0x1b8] sm:$0xff]
      %v4189 = vld [vmem:[#allocation9 + $0x1c0] sm:$0xff]
      %v4190 = vld [vmem:[#allocation9 + $0x1c8] sm:$0xff]
      %v4191 = vld [vmem:[#allocation9 + $0x1d0] sm:$0xff]
      %v4192 = vld [vmem:[#allocation9 + $0x1d8] sm:$0xff]
      %v4193 = vld [vmem:[#allocation9 + $0x1e0] sm:$0xff]
      %v4194 = vld [vmem:[#allocation9 + $0x1e8] sm:$0xff]
      %v4195 = vld [vmem:[#allocation9 + $0x1f0] sm:$0xff]
      %v4196 = vld [vmem:[#allocation9 + $0x1f8] sm:$0xff]
      %v4197 = vld [vmem:[#allocation9 + $0x200] sm:$0xff]
      %v4198 = vld [vmem:[#allocation9 + $0x208] sm:$0xff]
      %v4199 = vld [vmem:[#allocation9 + $0x210] sm:$0xff]
      %v4200 = vld [vmem:[#allocation9 + $0x218] sm:$0xff]
      %v4201 = vld [vmem:[#allocation9 + $0x220] sm:$0xff]
      %v4202 = vld [vmem:[#allocation9 + $0x228] sm:$0xff]
      %v4203 = vld [vmem:[#allocation9 + $0x230] sm:$0xff]
      %v4204 = vld [vmem:[#allocation9 + $0x238] sm:$0xff]
      %v4205 = vld [vmem:[#allocation9 + $0x240] sm:$0xff]
      %v4206 = vld [vmem:[#allocation9 + $0x248] sm:$0xff]
      %v4207 = vld [vmem:[#allocation9 + $0x250] sm:$0xff]
      %v4208 = vld [vmem:[#allocation9 + $0x258] sm:$0xff]
      %v4209 = vld [vmem:[#allocation9 + $0x260] sm:$0xff]
      %v4210 = vld [vmem:[#allocation9 + $0x268] sm:$0xff]
      %v4211 = vld [vmem:[#allocation9 + $0x270] sm:$0xff]
      %v4212 = vld [vmem:[#allocation9 + $0x278] sm:$0xff]
      %v4213 = vld [vmem:[#allocation9 + $0x280] sm:$0xff]
      %v4214 = vld [vmem:[#allocation9 + $0x288] sm:$0xff]
      %v4215 = vld [vmem:[#allocation9 + $0x290] sm:$0xff]
      %v4216 = vld [vmem:[#allocation9 + $0x298] sm:$0xff]
      %v4217 = vld [vmem:[#allocation9 + $0x2a0] sm:$0xff]
      %v4218 = vld [vmem:[#allocation9 + $0x2a8] sm:$0xff]
      %v4219 = vld [vmem:[#allocation9 + $0x2b0] sm:$0xff]
      %v4220 = vld [vmem:[#allocation9 + $0x2b8] sm:$0xff]
      %v4221 = vld [vmem:[#allocation9 + $0x2c0] sm:$0xff]
      %v4222 = vld [vmem:[#allocation9 + $0x2c8] sm:$0xff]
      %v4223 = vld [vmem:[#allocation9 + $0x2d0] sm:$0xff]
      %v4224 = vld [vmem:[#allocation9 + $0x2d8] sm:$0xff]
      %v4225 = vld [vmem:[#allocation9 + $0x2e0] sm:$0xff]
      %v4226 = vld [vmem:[#allocation9 + $0x2e8] sm:$0xff]
      %v4227 = vld [vmem:[#allocation9 + $0x2f0] sm:$0xff]
      %v4228 = vld [vmem:[#allocation9 + $0x2f8] sm:$0xff]
      %v4229 = vld [vmem:[#allocation9 + $0x300] sm:$0xff]
      %v4230 = vld [vmem:[#allocation9 + $0x308] sm:$0xff]
      %v4231 = vld [vmem:[#allocation9 + $0x310] sm:$0xff]
      %v4232 = vld [vmem:[#allocation9 + $0x318] sm:$0xff]
      %v4233 = vld [vmem:[#allocation9 + $0x320] sm:$0xff]
      %v4234 = vld [vmem:[#allocation9 + $0x328] sm:$0xff]
      %v4235 = vld [vmem:[#allocation9 + $0x330] sm:$0xff]
      %v4236 = vld [vmem:[#allocation9 + $0x338] sm:$0xff]
      %v4237 = vld [vmem:[#allocation9 + $0x340] sm:$0xff]
      %v4238 = vld [vmem:[#allocation9 + $0x348] sm:$0xff]
      %v4239 = vld [vmem:[#allocation9 + $0x350] sm:$0xff]
      %v4240 = vld [vmem:[#allocation9 + $0x358] sm:$0xff]
      %v4241 = vld [vmem:[#allocation9 + $0x360] sm:$0xff]
      %v4242 = vld [vmem:[#allocation9 + $0x368] sm:$0xff]
      %v4243 = vld [vmem:[#allocation9 + $0x370] sm:$0xff]
      %v4244 = vld [vmem:[#allocation9 + $0x378] sm:$0xff]
      %v4245 = vld [vmem:[#allocation9 + $0x380] sm:$0xff]
      %v4246 = vld [vmem:[#allocation9 + $0x388] sm:$0xff]
      %v4247 = vld [vmem:[#allocation9 + $0x390] sm:$0xff]
      %v4248 = vld [vmem:[#allocation9 + $0x398] sm:$0xff]
      %v4249 = vld [vmem:[#allocation9 + $0x3a0] sm:$0xff]
      %v4250 = vld [vmem:[#allocation9 + $0x3a8] sm:$0xff]
      %v4251 = vld [vmem:[#allocation9 + $0x3b0] sm:$0xff]
      %v4252 = vld [vmem:[#allocation9 + $0x3b8] sm:$0xff]
      %v4253 = vld [vmem:[#allocation9 + $0x3c0] sm:$0xff]
      %v4254 = vld [vmem:[#allocation9 + $0x3c8] sm:$0xff]
      %v4255 = vld [vmem:[#allocation9 + $0x3d0] sm:$0xff]
      %v4256 = vld [vmem:[#allocation9 + $0x3d8] sm:$0xff]
      %v4257 = vld [vmem:[#allocation9 + $0x3e0] sm:$0xff]
      %v4258 = vld [vmem:[#allocation9 + $0x3e8] sm:$0xff]
      %v4259 = vld [vmem:[#allocation9 + $0x3f0] sm:$0xff]
      %v4260 = vld [vmem:[#allocation9 + $0x3f8] sm:$0xff]
      %v4261 = vld [vmem:[#allocation9 + $0x400] sm:$0xff]
      %v4262 = vld [vmem:[#allocation9 + $0x408] sm:$0xff]
      %v4263 = vld [vmem:[#allocation9 + $0x410] sm:$0xff]
      %v4264 = vld [vmem:[#allocation9 + $0x418] sm:$0xff]
      %v4265 = vld [vmem:[#allocation9 + $0x420] sm:$0xff]
      %v4266 = vld [vmem:[#allocation9 + $0x428] sm:$0xff]
      %v4267 = vld [vmem:[#allocation9 + $0x430] sm:$0xff]
      %v4268 = vld [vmem:[#allocation9 + $0x438] sm:$0xff]
      %v4269 = vld [vmem:[#allocation9 + $0x440] sm:$0xff]
      %v4270 = vld [vmem:[#allocation9 + $0x448] sm:$0xff]
      %v4271 = vld [vmem:[#allocation9 + $0x450] sm:$0xff]
      %v4272 = vld [vmem:[#allocation9 + $0x458] sm:$0xff]
      %v4273 = vld [vmem:[#allocation9 + $0x460] sm:$0xff]
      %v4274 = vld [vmem:[#allocation9 + $0x468] sm:$0xff]
      %v4275 = vld [vmem:[#allocation9 + $0x470] sm:$0xff]
      %v4276 = vld [vmem:[#allocation9 + $0x478] sm:$0xff]
      %v4277 = vld [vmem:[#allocation9 + $0x480] sm:$0xff]
      %v4278 = vld [vmem:[#allocation9 + $0x488] sm:$0xff]
      %v4279 = vld [vmem:[#allocation9 + $0x490] sm:$0xff]
      %v4280 = vld [vmem:[#allocation9 + $0x498] sm:$0xff]
      %v4281 = vld [vmem:[#allocation9 + $0x4a0] sm:$0xff]
      %v4282 = vld [vmem:[#allocation9 + $0x4a8] sm:$0xff]
      %v4283 = vld [vmem:[#allocation9 + $0x4b0] sm:$0xff]
      %v4284 = vld [vmem:[#allocation9 + $0x4b8] sm:$0xff]
      %v4285 = vld [vmem:[#allocation9 + $0x4c0] sm:$0xff]
      %v4286 = vld [vmem:[#allocation9 + $0x4c8] sm:$0xff]
      %v4287 = vld [vmem:[#allocation9 + $0x4d0] sm:$0xff]
      %v4288 = vld [vmem:[#allocation9 + $0x4d8] sm:$0xff]
      %v4289 = vld [vmem:[#allocation9 + $0x4e0] sm:$0xff]
      %v4290 = vld [vmem:[#allocation9 + $0x4e8] sm:$0xff]
      %v4291 = vld [vmem:[#allocation9 + $0x4f0] sm:$0xff]
      %v4292 = vld [vmem:[#allocation9 + $0x4f8] sm:$0xff]
      %v4293 = vld [vmem:[#allocation9 + $0x500] sm:$0xff]
      %v4294 = vld [vmem:[#allocation9 + $0x508] sm:$0xff]
      %v4295 = vld [vmem:[#allocation9 + $0x510] sm:$0xff]
      %v4296 = vld [vmem:[#allocation9 + $0x518] sm:$0xff]
      %v4297 = vld [vmem:[#allocation9 + $0x520] sm:$0xff]
      %v4298 = vld [vmem:[#allocation9 + $0x528] sm:$0xff]
      %v4299 = vld [vmem:[#allocation9 + $0x530] sm:$0xff]
      %v4300 = vld [vmem:[#allocation9 + $0x538] sm:$0xff]
      %v4301 = vld [vmem:[#allocation9 + $0x540] sm:$0xff]
      %v4302 = vld [vmem:[#allocation9 + $0x548] sm:$0xff]
      %v4303 = vld [vmem:[#allocation9 + $0x550] sm:$0xff]
      %v4304 = vld [vmem:[#allocation9 + $0x558] sm:$0xff]
      %v4305 = vld [vmem:[#allocation9 + $0x560] sm:$0xff]
      %v4306 = vld [vmem:[#allocation9 + $0x568] sm:$0xff]
      %v4307 = vld [vmem:[#allocation9 + $0x570] sm:$0xff]
      %v4308 = vld [vmem:[#allocation9 + $0x578] sm:$0xff]
      %v4309 = vld [vmem:[#allocation9 + $0x580] sm:$0xff]
      %v4310 = vld [vmem:[#allocation9 + $0x588] sm:$0xff]
      %v4311 = vld [vmem:[#allocation9 + $0x590] sm:$0xff]
      %v4312 = vld [vmem:[#allocation9 + $0x598] sm:$0xff]
      %v4313 = vld [vmem:[#allocation9 + $0x5a0] sm:$0xff]
      %v4314 = vld [vmem:[#allocation9 + $0x5a8] sm:$0xff]
      %v4315 = vld [vmem:[#allocation9 + $0x5b0] sm:$0xff]
      %v4316 = vld [vmem:[#allocation9 + $0x5b8] sm:$0xff]
      %v4317 = vld [vmem:[#allocation9 + $0x5c0] sm:$0xff]
      %v4318 = vld [vmem:[#allocation9 + $0x5c8] sm:$0xff]
      %v4319 = vld [vmem:[#allocation9 + $0x5d0] sm:$0xff]
      %v4320 = vld [vmem:[#allocation9 + $0x5d8] sm:$0xff]
      %v4321 = vld [vmem:[#allocation9 + $0x5e0] sm:$0xff]
      %v4322 = vld [vmem:[#allocation9 + $0x5e8] sm:$0xff]
      %v4323 = vld [vmem:[#allocation9 + $0x5f0] sm:$0xff]
      %v4324 = vld [vmem:[#allocation9 + $0x5f8] sm:$0xff]
      %v4325 = vld [vmem:[#allocation9 + $0x600] sm:$0xff]
      %v4326 = vld [vmem:[#allocation9 + $0x608] sm:$0xff]
      %v4327 = vld [vmem:[#allocation9 + $0x610] sm:$0xff]
      %v4328 = vld [vmem:[#allocation9 + $0x618] sm:$0xff]
      %v4329 = vld [vmem:[#allocation9 + $0x620] sm:$0xff]
      %v4330 = vld [vmem:[#allocation9 + $0x628] sm:$0xff]
      %v4331 = vld [vmem:[#allocation9 + $0x630] sm:$0xff]
      %v4332 = vld [vmem:[#allocation9 + $0x638] sm:$0xff]
      %v4333 = vld [vmem:[#allocation9 + $0x640] sm:$0xff]
      %v4334 = vld [vmem:[#allocation9 + $0x648] sm:$0xff]
      %v4335 = vld [vmem:[#allocation9 + $0x650] sm:$0xff]
      %v4336 = vld [vmem:[#allocation9 + $0x658] sm:$0xff]
      %v4337 = vld [vmem:[#allocation9 + $0x660] sm:$0xff]
      %v4338 = vld [vmem:[#allocation9 + $0x668] sm:$0xff]
      %v4339 = vld [vmem:[#allocation9 + $0x670] sm:$0xff]
      %v4340 = vld [vmem:[#allocation9 + $0x678] sm:$0xff]
      %v4341 = vld [vmem:[#allocation9 + $0x680] sm:$0xff]
      %v4342 = vld [vmem:[#allocation9 + $0x688] sm:$0xff]
      %v4343 = vld [vmem:[#allocation9 + $0x690] sm:$0xff]
      %v4344 = vld [vmem:[#allocation9 + $0x698] sm:$0xff]
      %v4345 = vld [vmem:[#allocation9 + $0x6a0] sm:$0xff]
      %v4346 = vld [vmem:[#allocation9 + $0x6a8] sm:$0xff]
      %v4347 = vld [vmem:[#allocation9 + $0x6b0] sm:$0xff]
      %v4348 = vld [vmem:[#allocation9 + $0x6b8] sm:$0xff]
      %v4349 = vld [vmem:[#allocation9 + $0x6c0] sm:$0xff]
      %v4350 = vld [vmem:[#allocation9 + $0x6c8] sm:$0xff]
      %v4351 = vld [vmem:[#allocation9 + $0x6d0] sm:$0xff]
      %v4352 = vld [vmem:[#allocation9 + $0x6d8] sm:$0xff]
      %v4353 = vld [vmem:[#allocation9 + $0x6e0] sm:$0xff]
      %v4354 = vld [vmem:[#allocation9 + $0x6e8] sm:$0xff]
      %v4355 = vld [vmem:[#allocation9 + $0x6f0] sm:$0xff]
      %v4356 = vld [vmem:[#allocation9 + $0x6f8] sm:$0xff]
      %v4357 = vld [vmem:[#allocation9 + $0x700] sm:$0xff]
      %v4358 = vld [vmem:[#allocation9 + $0x708] sm:$0xff]
      %v4359 = vld [vmem:[#allocation9 + $0x710] sm:$0xff]
      %v4360 = vld [vmem:[#allocation9 + $0x718] sm:$0xff]
      %v4361 = vld [vmem:[#allocation9 + $0x720] sm:$0xff]
      %v4362 = vld [vmem:[#allocation9 + $0x728] sm:$0xff]
      %v4363 = vld [vmem:[#allocation9 + $0x730] sm:$0xff]
      %v4364 = vld [vmem:[#allocation9 + $0x738] sm:$0xff]
      %v4365 = vld [vmem:[#allocation9 + $0x740] sm:$0xff]
      %v4366 = vld [vmem:[#allocation9 + $0x748] sm:$0xff]
      %v4367 = vld [vmem:[#allocation9 + $0x750] sm:$0xff]
      %v4368 = vld [vmem:[#allocation9 + $0x758] sm:$0xff]
      %v4369 = vld [vmem:[#allocation9 + $0x760] sm:$0xff]
      %v4370 = vld [vmem:[#allocation9 + $0x768] sm:$0xff]
      %v4371 = vld [vmem:[#allocation9 + $0x770] sm:$0xff]
      %v4372 = vld [vmem:[#allocation9 + $0x778] sm:$0xff]
      %v4373 = vld [vmem:[#allocation9 + $0x780] sm:$0xff]
      %v4374 = vld [vmem:[#allocation9 + $0x788] sm:$0xff]
      %v4375 = vld [vmem:[#allocation9 + $0x790] sm:$0xff]
      %v4376 = vld [vmem:[#allocation9 + $0x798] sm:$0xff]
      %v4377 = vld [vmem:[#allocation9 + $0x7a0] sm:$0xff]
      %v4378 = vld [vmem:[#allocation9 + $0x7a8] sm:$0xff]
      %v4379 = vld [vmem:[#allocation9 + $0x7b0] sm:$0xff]
      %v4380 = vld [vmem:[#allocation9 + $0x7b8] sm:$0xff]
      %v4381 = vld [vmem:[#allocation9 + $0x7c0] sm:$0xff]
      %v4382 = vld [vmem:[#allocation9 + $0x7c8] sm:$0xff]
      %v4383 = vld [vmem:[#allocation9 + $0x7d0] sm:$0xff]
      %v4384 = vld [vmem:[#allocation9 + $0x7d8] sm:$0xff]
      %v4385 = vld [vmem:[#allocation9 + $0x7e0] sm:$0xff]
      %v4386 = vld [vmem:[#allocation9 + $0x7e8] sm:$0xff]
      %v4387 = vld [vmem:[#allocation9 + $0x7f0] sm:$0xff]
      %v4388 = vld [vmem:[#allocation9 + $0x7f8] sm:$0xff]
      %v4389 = vld [vmem:[#allocation11] sm:$0xf]
      %v4391 = vlaneseq
      %v4392 = vshrl.u32 %v4391, 7
      %v4393 = vsub.s32 0, %v4392
      %v4394 = vrot.slane %v4389, %v4393
      %v4395 = vlaneseq
      %v4396 = vshrl.u32 %v4395, 7
      %v4397 = vsub.s32 1, %v4396
      %v4398 = vrot.slane %v4389, %v4397
      %v4399 = vlaneseq
      %v4400 = vshrl.u32 %v4399, 7
      %v4401 = vsub.s32 2, %v4400
      %v4402 = vrot.slane %v4389, %v4401
      %v4403 = vlaneseq
      %v4404 = vshrl.u32 %v4403, 7
      %v4405 = vsub.s32 3, %v4404
      %v4406 = vrot.slane %v4389, %v4405
      %v4667 = vunpack.c.l.b16 %v4133
      %v4668 = vunpack.c.h.b16 %v4133
      %v4669 = vunpack.c.l.b16 %v4134
      %v4670 = vunpack.c.h.b16 %v4134
      %v4671 = vunpack.c.l.b16 %v4135
      %v4672 = vunpack.c.h.b16 %v4135
      %v4673 = vunpack.c.l.b16 %v4136
      %v4674 = vunpack.c.h.b16 %v4136
      %v4675 = vunpack.c.l.b16 %v4137
      %v4676 = vunpack.c.h.b16 %v4137
      %v4677 = vunpack.c.l.b16 %v4138
      %v4678 = vunpack.c.h.b16 %v4138
      %v4679 = vunpack.c.l.b16 %v4139
      %v4680 = vunpack.c.h.b16 %v4139
      %v4681 = vunpack.c.l.b16 %v4140
      %v4682 = vunpack.c.h.b16 %v4140
      %v4683 = vunpack.c.l.b16 %v4141
      %v4684 = vunpack.c.h.b16 %v4141
      %v4685 = vunpack.c.l.b16 %v4142
      %v4686 = vunpack.c.h.b16 %v4142
      %v4687 = vunpack.c.l.b16 %v4143
      %v4688 = vunpack.c.h.b16 %v4143
      %v4689 = vunpack.c.l.b16 %v4144
      %v4690 = vunpack.c.h.b16 %v4144
      %v4691 = vunpack.c.l.b16 %v4145
      %v4692 = vunpack.c.h.b16 %v4145
      %v4693 = vunpack.c.l.b16 %v4146
      %v4694 = vunpack.c.h.b16 %v4146
      %v4695 = vunpack.c.l.b16 %v4147
      %v4696 = vunpack.c.h.b16 %v4147
      %v4697 = vunpack.c.l.b16 %v4148
      %v4698 = vunpack.c.h.b16 %v4148
      %v4699 = vunpack.c.l.b16 %v4149
      %v4700 = vunpack.c.h.b16 %v4149
      %v4701 = vunpack.c.l.b16 %v4150
      %v4702 = vunpack.c.h.b16 %v4150
      %v4703 = vunpack.c.l.b16 %v4151
      %v4704 = vunpack.c.h.b16 %v4151
      %v4705 = vunpack.c.l.b16 %v4152
      %v4706 = vunpack.c.h.b16 %v4152
      %v4707 = vunpack.c.l.b16 %v4153
      %v4708 = vunpack.c.h.b16 %v4153
      %v4709 = vunpack.c.l.b16 %v4154
      %v4710 = vunpack.c.h.b16 %v4154
      %v4711 = vunpack.c.l.b16 %v4155
      %v4712 = vunpack.c.h.b16 %v4155
      %v4713 = vunpack.c.l.b16 %v4156
      %v4714 = vunpack.c.h.b16 %v4156
      %v4715 = vunpack.c.l.b16 %v4157
      %v4716 = vunpack.c.h.b16 %v4157
      %v4717 = vunpack.c.l.b16 %v4158
      %v4718 = vunpack.c.h.b16 %v4158
      %v4719 = vunpack.c.l.b16 %v4159
      %v4720 = vunpack.c.h.b16 %v4159
      %v4721 = vunpack.c.l.b16 %v4160
      %v4722 = vunpack.c.h.b16 %v4160
      %v4723 = vunpack.c.l.b16 %v4161
      %v4724 = vunpack.c.h.b16 %v4161
      %v4725 = vunpack.c.l.b16 %v4162
      %v4726 = vunpack.c.h.b16 %v4162
      %v4727 = vunpack.c.l.b16 %v4163
      %v4728 = vunpack.c.h.b16 %v4163
      %v4729 = vunpack.c.l.b16 %v4164
      %v4730 = vunpack.c.h.b16 %v4164
      %v4731 = vunpack.c.l.b16 %v4165
      %v4732 = vunpack.c.h.b16 %v4165
      %v4733 = vunpack.c.l.b16 %v4166
      %v4734 = vunpack.c.h.b16 %v4166
      %v4735 = vunpack.c.l.b16 %v4167
      %v4736 = vunpack.c.h.b16 %v4167
      %v4737 = vunpack.c.l.b16 %v4168
      %v4738 = vunpack.c.h.b16 %v4168
      %v4739 = vunpack.c.l.b16 %v4169
      %v4740 = vunpack.c.h.b16 %v4169
      %v4741 = vunpack.c.l.b16 %v4170
      %v4742 = vunpack.c.h.b16 %v4170
      %v4743 = vunpack.c.l.b16 %v4171
      %v4744 = vunpack.c.h.b16 %v4171
      %v4745 = vunpack.c.l.b16 %v4172
      %v4746 = vunpack.c.h.b16 %v4172
      %v4747 = vunpack.c.l.b16 %v4173
      %v4748 = vunpack.c.h.b16 %v4173
      %v4749 = vunpack.c.l.b16 %v4174
      %v4750 = vunpack.c.h.b16 %v4174
      %v4751 = vunpack.c.l.b16 %v4175
      %v4752 = vunpack.c.h.b16 %v4175
      %v4753 = vunpack.c.l.b16 %v4176
      %v4754 = vunpack.c.h.b16 %v4176
      %v4755 = vunpack.c.l.b16 %v4177
      %v4756 = vunpack.c.h.b16 %v4177
      %v4757 = vunpack.c.l.b16 %v4178
      %v4758 = vunpack.c.h.b16 %v4178
      %v4759 = vunpack.c.l.b16 %v4179
      %v4760 = vunpack.c.h.b16 %v4179
      %v4761 = vunpack.c.l.b16 %v4180
      %v4762 = vunpack.c.h.b16 %v4180
      %v4763 = vunpack.c.l.b16 %v4181
      %v4764 = vunpack.c.h.b16 %v4181
      %v4765 = vunpack.c.l.b16 %v4182
      %v4766 = vunpack.c.h.b16 %v4182
      %v4767 = vunpack.c.l.b16 %v4183
      %v4768 = vunpack.c.h.b16 %v4183
      %v4769 = vunpack.c.l.b16 %v4184
      %v4770 = vunpack.c.h.b16 %v4184
      %v4771 = vunpack.c.l.b16 %v4185
      %v4772 = vunpack.c.h.b16 %v4185
      %v4773 = vunpack.c.l.b16 %v4186
      %v4774 = vunpack.c.h.b16 %v4186
      %v4775 = vunpack.c.l.b16 %v4187
      %v4776 = vunpack.c.h.b16 %v4187
      %v4777 = vunpack.c.l.b16 %v4188
      %v4778 = vunpack.c.h.b16 %v4188
      %v4779 = vunpack.c.l.b16 %v4189
      %v4780 = vunpack.c.h.b16 %v4189
      %v4781 = vunpack.c.l.b16 %v4190
      %v4782 = vunpack.c.h.b16 %v4190
      %v4783 = vunpack.c.l.b16 %v4191
      %v4784 = vunpack.c.h.b16 %v4191
      %v4785 = vunpack.c.l.b16 %v4192
      %v4786 = vunpack.c.h.b16 %v4192
      %v4787 = vunpack.c.l.b16 %v4193
      %v4788 = vunpack.c.h.b16 %v4193
      %v4789 = vunpack.c.l.b16 %v4194
      %v4790 = vunpack.c.h.b16 %v4194
      %v4791 = vunpack.c.l.b16 %v4195
      %v4792 = vunpack.c.h.b16 %v4195
      %v4793 = vunpack.c.l.b16 %v4196
      %v4794 = vunpack.c.h.b16 %v4196
      %v4795 = vunpack.c.l.b16 %v4197
      %v4796 = vunpack.c.h.b16 %v4197
      %v4797 = vunpack.c.l.b16 %v4198
      %v4798 = vunpack.c.h.b16 %v4198
      %v4799 = vunpack.c.l.b16 %v4199
      %v4800 = vunpack.c.h.b16 %v4199
      %v4801 = vunpack.c.l.b16 %v4200
      %v4802 = vunpack.c.h.b16 %v4200
      %v4803 = vunpack.c.l.b16 %v4201
      %v4804 = vunpack.c.h.b16 %v4201
      %v4805 = vunpack.c.l.b16 %v4202
      %v4806 = vunpack.c.h.b16 %v4202
      %v4807 = vunpack.c.l.b16 %v4203
      %v4808 = vunpack.c.h.b16 %v4203
      %v4809 = vunpack.c.l.b16 %v4204
      %v4810 = vunpack.c.h.b16 %v4204
      %v4811 = vunpack.c.l.b16 %v4205
      %v4812 = vunpack.c.h.b16 %v4205
      %v4813 = vunpack.c.l.b16 %v4206
      %v4814 = vunpack.c.h.b16 %v4206
      %v4815 = vunpack.c.l.b16 %v4207
      %v4816 = vunpack.c.h.b16 %v4207
      %v4817 = vunpack.c.l.b16 %v4208
      %v4818 = vunpack.c.h.b16 %v4208
      %v4819 = vunpack.c.l.b16 %v4209
      %v4820 = vunpack.c.h.b16 %v4209
      %v4821 = vunpack.c.l.b16 %v4210
      %v4822 = vunpack.c.h.b16 %v4210
      %v4823 = vunpack.c.l.b16 %v4211
      %v4824 = vunpack.c.h.b16 %v4211
      %v4825 = vunpack.c.l.b16 %v4212
      %v4826 = vunpack.c.h.b16 %v4212
      %v4827 = vunpack.c.l.b16 %v4213
      %v4828 = vunpack.c.h.b16 %v4213
      %v4829 = vunpack.c.l.b16 %v4214
      %v4830 = vunpack.c.h.b16 %v4214
      %v4831 = vunpack.c.l.b16 %v4215
      %v4832 = vunpack.c.h.b16 %v4215
      %v4833 = vunpack.c.l.b16 %v4216
      %v4834 = vunpack.c.h.b16 %v4216
      %v4835 = vunpack.c.l.b16 %v4217
      %v4836 = vunpack.c.h.b16 %v4217
      %v4837 = vunpack.c.l.b16 %v4218
      %v4838 = vunpack.c.h.b16 %v4218
      %v4839 = vunpack.c.l.b16 %v4219
      %v4840 = vunpack.c.h.b16 %v4219
      %v4841 = vunpack.c.l.b16 %v4220
      %v4842 = vunpack.c.h.b16 %v4220
      %v4843 = vunpack.c.l.b16 %v4221
      %v4844 = vunpack.c.h.b16 %v4221
      %v4845 = vunpack.c.l.b16 %v4222
      %v4846 = vunpack.c.h.b16 %v4222
      %v4847 = vunpack.c.l.b16 %v4223
      %v4848 = vunpack.c.h.b16 %v4223
      %v4849 = vunpack.c.l.b16 %v4224
      %v4850 = vunpack.c.h.b16 %v4224
      %v4851 = vunpack.c.l.b16 %v4225
      %v4852 = vunpack.c.h.b16 %v4225
      %v4853 = vunpack.c.l.b16 %v4226
      %v4854 = vunpack.c.h.b16 %v4226
      %v4855 = vunpack.c.l.b16 %v4227
      %v4856 = vunpack.c.h.b16 %v4227
      %v4857 = vunpack.c.l.b16 %v4228
      %v4858 = vunpack.c.h.b16 %v4228
      %v4859 = vunpack.c.l.b16 %v4229
      %v4860 = vunpack.c.h.b16 %v4229
      %v4861 = vunpack.c.l.b16 %v4230
      %v4862 = vunpack.c.h.b16 %v4230
      %v4863 = vunpack.c.l.b16 %v4231
      %v4864 = vunpack.c.h.b16 %v4231
      %v4865 = vunpack.c.l.b16 %v4232
      %v4866 = vunpack.c.h.b16 %v4232
      %v4867 = vunpack.c.l.b16 %v4233
      %v4868 = vunpack.c.h.b16 %v4233
      %v4869 = vunpack.c.l.b16 %v4234
      %v4870 = vunpack.c.h.b16 %v4234
      %v4871 = vunpack.c.l.b16 %v4235
      %v4872 = vunpack.c.h.b16 %v4235
      %v4873 = vunpack.c.l.b16 %v4236
      %v4874 = vunpack.c.h.b16 %v4236
      %v4875 = vunpack.c.l.b16 %v4237
      %v4876 = vunpack.c.h.b16 %v4237
      %v4877 = vunpack.c.l.b16 %v4238
      %v4878 = vunpack.c.h.b16 %v4238
      %v4879 = vunpack.c.l.b16 %v4239
      %v4880 = vunpack.c.h.b16 %v4239
      %v4881 = vunpack.c.l.b16 %v4240
      %v4882 = vunpack.c.h.b16 %v4240
      %v4883 = vunpack.c.l.b16 %v4241
      %v4884 = vunpack.c.h.b16 %v4241
      %v4885 = vunpack.c.l.b16 %v4242
      %v4886 = vunpack.c.h.b16 %v4242
      %v4887 = vunpack.c.l.b16 %v4243
      %v4888 = vunpack.c.h.b16 %v4243
      %v4889 = vunpack.c.l.b16 %v4244
      %v4890 = vunpack.c.h.b16 %v4244
      %v4891 = vunpack.c.l.b16 %v4245
      %v4892 = vunpack.c.h.b16 %v4245
      %v4893 = vunpack.c.l.b16 %v4246
      %v4894 = vunpack.c.h.b16 %v4246
      %v4895 = vunpack.c.l.b16 %v4247
      %v4896 = vunpack.c.h.b16 %v4247
      %v4897 = vunpack.c.l.b16 %v4248
      %v4898 = vunpack.c.h.b16 %v4248
      %v4899 = vunpack.c.l.b16 %v4249
      %v4900 = vunpack.c.h.b16 %v4249
      %v4901 = vunpack.c.l.b16 %v4250
      %v4902 = vunpack.c.h.b16 %v4250
      %v4903 = vunpack.c.l.b16 %v4251
      %v4904 = vunpack.c.h.b16 %v4251
      %v4905 = vunpack.c.l.b16 %v4252
      %v4906 = vunpack.c.h.b16 %v4252
      %v4907 = vunpack.c.l.b16 %v4253
      %v4908 = vunpack.c.h.b16 %v4253
      %v4909 = vunpack.c.l.b16 %v4254
      %v4910 = vunpack.c.h.b16 %v4254
      %v4911 = vunpack.c.l.b16 %v4255
      %v4912 = vunpack.c.h.b16 %v4255
      %v4913 = vunpack.c.l.b16 %v4256
      %v4914 = vunpack.c.h.b16 %v4256
      %v4915 = vunpack.c.l.b16 %v4257
      %v4916 = vunpack.c.h.b16 %v4257
      %v4917 = vunpack.c.l.b16 %v4258
      %v4918 = vunpack.c.h.b16 %v4258
      %v4919 = vunpack.c.l.b16 %v4259
      %v4920 = vunpack.c.h.b16 %v4259
      %v4921 = vunpack.c.l.b16 %v4260
      %v4922 = vunpack.c.h.b16 %v4260
      %v4923 = vunpack.c.l.b16 %v4261
      %v4924 = vunpack.c.h.b16 %v4261
      %v4925 = vunpack.c.l.b16 %v4262
      %v4926 = vunpack.c.h.b16 %v4262
      %v4927 = vunpack.c.l.b16 %v4263
      %v4928 = vunpack.c.h.b16 %v4263
      %v4929 = vunpack.c.l.b16 %v4264
      %v4930 = vunpack.c.h.b16 %v4264
      %v4931 = vunpack.c.l.b16 %v4265
      %v4932 = vunpack.c.h.b16 %v4265
      %v4933 = vunpack.c.l.b16 %v4266
      %v4934 = vunpack.c.h.b16 %v4266
      %v4935 = vunpack.c.l.b16 %v4267
      %v4936 = vunpack.c.h.b16 %v4267
      %v4937 = vunpack.c.l.b16 %v4268
      %v4938 = vunpack.c.h.b16 %v4268
      %v4939 = vunpack.c.l.b16 %v4269
      %v4940 = vunpack.c.h.b16 %v4269
      %v4941 = vunpack.c.l.b16 %v4270
      %v4942 = vunpack.c.h.b16 %v4270
      %v4943 = vunpack.c.l.b16 %v4271
      %v4944 = vunpack.c.h.b16 %v4271
      %v4945 = vunpack.c.l.b16 %v4272
      %v4946 = vunpack.c.h.b16 %v4272
      %v4947 = vunpack.c.l.b16 %v4273
      %v4948 = vunpack.c.h.b16 %v4273
      %v4949 = vunpack.c.l.b16 %v4274
      %v4950 = vunpack.c.h.b16 %v4274
      %v4951 = vunpack.c.l.b16 %v4275
      %v4952 = vunpack.c.h.b16 %v4275
      %v4953 = vunpack.c.l.b16 %v4276
      %v4954 = vunpack.c.h.b16 %v4276
      %v4955 = vunpack.c.l.b16 %v4277
      %v4956 = vunpack.c.h.b16 %v4277
      %v4957 = vunpack.c.l.b16 %v4278
      %v4958 = vunpack.c.h.b16 %v4278
      %v4959 = vunpack.c.l.b16 %v4279
      %v4960 = vunpack.c.h.b16 %v4279
      %v4961 = vunpack.c.l.b16 %v4280
      %v4962 = vunpack.c.h.b16 %v4280
      %v4963 = vunpack.c.l.b16 %v4281
      %v4964 = vunpack.c.h.b16 %v4281
      %v4965 = vunpack.c.l.b16 %v4282
      %v4966 = vunpack.c.h.b16 %v4282
      %v4967 = vunpack.c.l.b16 %v4283
      %v4968 = vunpack.c.h.b16 %v4283
      %v4969 = vunpack.c.l.b16 %v4284
      %v4970 = vunpack.c.h.b16 %v4284
      %v4971 = vunpack.c.l.b16 %v4285
      %v4972 = vunpack.c.h.b16 %v4285
      %v4973 = vunpack.c.l.b16 %v4286
      %v4974 = vunpack.c.h.b16 %v4286
      %v4975 = vunpack.c.l.b16 %v4287
      %v4976 = vunpack.c.h.b16 %v4287
      %v4977 = vunpack.c.l.b16 %v4288
      %v4978 = vunpack.c.h.b16 %v4288
      %v4979 = vunpack.c.l.b16 %v4289
      %v4980 = vunpack.c.h.b16 %v4289
      %v4981 = vunpack.c.l.b16 %v4290
      %v4982 = vunpack.c.h.b16 %v4290
      %v4983 = vunpack.c.l.b16 %v4291
      %v4984 = vunpack.c.h.b16 %v4291
      %v4985 = vunpack.c.l.b16 %v4292
      %v4986 = vunpack.c.h.b16 %v4292
      %v4987 = vunpack.c.l.b16 %v4293
      %v4988 = vunpack.c.h.b16 %v4293
      %v4989 = vunpack.c.l.b16 %v4294
      %v4990 = vunpack.c.h.b16 %v4294
      %v4991 = vunpack.c.l.b16 %v4295
      %v4992 = vunpack.c.h.b16 %v4295
      %v4993 = vunpack.c.l.b16 %v4296
      %v4994 = vunpack.c.h.b16 %v4296
      %v4995 = vunpack.c.l.b16 %v4297
      %v4996 = vunpack.c.h.b16 %v4297
      %v4997 = vunpack.c.l.b16 %v4298
      %v4998 = vunpack.c.h.b16 %v4298
      %v4999 = vunpack.c.l.b16 %v4299
      %v5000 = vunpack.c.h.b16 %v4299
      %v5001 = vunpack.c.l.b16 %v4300
      %v5002 = vunpack.c.h.b16 %v4300
      %v5003 = vunpack.c.l.b16 %v4301
      %v5004 = vunpack.c.h.b16 %v4301
      %v5005 = vunpack.c.l.b16 %v4302
      %v5006 = vunpack.c.h.b16 %v4302
      %v5007 = vunpack.c.l.b16 %v4303
      %v5008 = vunpack.c.h.b16 %v4303
      %v5009 = vunpack.c.l.b16 %v4304
      %v5010 = vunpack.c.h.b16 %v4304
      %v5011 = vunpack.c.l.b16 %v4305
      %v5012 = vunpack.c.h.b16 %v4305
      %v5013 = vunpack.c.l.b16 %v4306
      %v5014 = vunpack.c.h.b16 %v4306
      %v5015 = vunpack.c.l.b16 %v4307
      %v5016 = vunpack.c.h.b16 %v4307
      %v5017 = vunpack.c.l.b16 %v4308
      %v5018 = vunpack.c.h.b16 %v4308
      %v5019 = vunpack.c.l.b16 %v4309
      %v5020 = vunpack.c.h.b16 %v4309
      %v5021 = vunpack.c.l.b16 %v4310
      %v5022 = vunpack.c.h.b16 %v4310
      %v5023 = vunpack.c.l.b16 %v4311
      %v5024 = vunpack.c.h.b16 %v4311
      %v5025 = vunpack.c.l.b16 %v4312
      %v5026 = vunpack.c.h.b16 %v4312
      %v5027 = vunpack.c.l.b16 %v4313
      %v5028 = vunpack.c.h.b16 %v4313
      %v5029 = vunpack.c.l.b16 %v4314
      %v5030 = vunpack.c.h.b16 %v4314
      %v5031 = vunpack.c.l.b16 %v4315
      %v5032 = vunpack.c.h.b16 %v4315
      %v5033 = vunpack.c.l.b16 %v4316
      %v5034 = vunpack.c.h.b16 %v4316
      %v5035 = vunpack.c.l.b16 %v4317
      %v5036 = vunpack.c.h.b16 %v4317
      %v5037 = vunpack.c.l.b16 %v4318
      %v5038 = vunpack.c.h.b16 %v4318
      %v5039 = vunpack.c.l.b16 %v4319
      %v5040 = vunpack.c.h.b16 %v4319
      %v5041 = vunpack.c.l.b16 %v4320
      %v5042 = vunpack.c.h.b16 %v4320
      %v5043 = vunpack.c.l.b16 %v4321
      %v5044 = vunpack.c.h.b16 %v4321
      %v5045 = vunpack.c.l.b16 %v4322
      %v5046 = vunpack.c.h.b16 %v4322
      %v5047 = vunpack.c.l.b16 %v4323
      %v5048 = vunpack.c.h.b16 %v4323
      %v5049 = vunpack.c.l.b16 %v4324
      %v5050 = vunpack.c.h.b16 %v4324
      %v5051 = vunpack.c.l.b16 %v4325
      %v5052 = vunpack.c.h.b16 %v4325
      %v5053 = vunpack.c.l.b16 %v4326
      %v5054 = vunpack.c.h.b16 %v4326
      %v5055 = vunpack.c.l.b16 %v4327
      %v5056 = vunpack.c.h.b16 %v4327
      %v5057 = vunpack.c.l.b16 %v4328
      %v5058 = vunpack.c.h.b16 %v4328
      %v5059 = vunpack.c.l.b16 %v4329
      %v5060 = vunpack.c.h.b16 %v4329
      %v5061 = vunpack.c.l.b16 %v4330
      %v5062 = vunpack.c.h.b16 %v4330
      %v5063 = vunpack.c.l.b16 %v4331
      %v5064 = vunpack.c.h.b16 %v4331
      %v5065 = vunpack.c.l.b16 %v4332
      %v5066 = vunpack.c.h.b16 %v4332
      %v5067 = vunpack.c.l.b16 %v4333
      %v5068 = vunpack.c.h.b16 %v4333
      %v5069 = vunpack.c.l.b16 %v4334
      %v5070 = vunpack.c.h.b16 %v4334
      %v5071 = vunpack.c.l.b16 %v4335
      %v5072 = vunpack.c.h.b16 %v4335
      %v5073 = vunpack.c.l.b16 %v4336
      %v5074 = vunpack.c.h.b16 %v4336
      %v5075 = vunpack.c.l.b16 %v4337
      %v5076 = vunpack.c.h.b16 %v4337
      %v5077 = vunpack.c.l.b16 %v4338
      %v5078 = vunpack.c.h.b16 %v4338
      %v5079 = vunpack.c.l.b16 %v4339
      %v5080 = vunpack.c.h.b16 %v4339
      %v5081 = vunpack.c.l.b16 %v4340
      %v5082 = vunpack.c.h.b16 %v4340
      %v5083 = vunpack.c.l.b16 %v4341
      %v5084 = vunpack.c.h.b16 %v4341
      %v5085 = vunpack.c.l.b16 %v4342
      %v5086 = vunpack.c.h.b16 %v4342
      %v5087 = vunpack.c.l.b16 %v4343
      %v5088 = vunpack.c.h.b16 %v4343
      %v5089 = vunpack.c.l.b16 %v4344
      %v5090 = vunpack.c.h.b16 %v4344
      %v5091 = vunpack.c.l.b16 %v4345
      %v5092 = vunpack.c.h.b16 %v4345
      %v5093 = vunpack.c.l.b16 %v4346
      %v5094 = vunpack.c.h.b16 %v4346
      %v5095 = vunpack.c.l.b16 %v4347
      %v5096 = vunpack.c.h.b16 %v4347
      %v5097 = vunpack.c.l.b16 %v4348
      %v5098 = vunpack.c.h.b16 %v4348
      %v5099 = vunpack.c.l.b16 %v4349
      %v5100 = vunpack.c.h.b16 %v4349
      %v5101 = vunpack.c.l.b16 %v4350
      %v5102 = vunpack.c.h.b16 %v4350
      %v5103 = vunpack.c.l.b16 %v4351
      %v5104 = vunpack.c.h.b16 %v4351
      %v5105 = vunpack.c.l.b16 %v4352
      %v5106 = vunpack.c.h.b16 %v4352
      %v5107 = vunpack.c.l.b16 %v4353
      %v5108 = vunpack.c.h.b16 %v4353
      %v5109 = vunpack.c.l.b16 %v4354
      %v5110 = vunpack.c.h.b16 %v4354
      %v5111 = vunpack.c.l.b16 %v4355
      %v5112 = vunpack.c.h.b16 %v4355
      %v5113 = vunpack.c.l.b16 %v4356
      %v5114 = vunpack.c.h.b16 %v4356
      %v5115 = vunpack.c.l.b16 %v4357
      %v5116 = vunpack.c.h.b16 %v4357
      %v5117 = vunpack.c.l.b16 %v4358
      %v5118 = vunpack.c.h.b16 %v4358
      %v5119 = vunpack.c.l.b16 %v4359
      %v5120 = vunpack.c.h.b16 %v4359
      %v5121 = vunpack.c.l.b16 %v4360
      %v5122 = vunpack.c.h.b16 %v4360
      %v5123 = vunpack.c.l.b16 %v4361
      %v5124 = vunpack.c.h.b16 %v4361
      %v5125 = vunpack.c.l.b16 %v4362
      %v5126 = vunpack.c.h.b16 %v4362
      %v5127 = vunpack.c.l.b16 %v4363
      %v5128 = vunpack.c.h.b16 %v4363
      %v5129 = vunpack.c.l.b16 %v4364
      %v5130 = vunpack.c.h.b16 %v4364
      %v5131 = vunpack.c.l.b16 %v4365
      %v5132 = vunpack.c.h.b16 %v4365
      %v5133 = vunpack.c.l.b16 %v4366
      %v5134 = vunpack.c.h.b16 %v4366
      %v5135 = vunpack.c.l.b16 %v4367
      %v5136 = vunpack.c.h.b16 %v4367
      %v5137 = vunpack.c.l.b16 %v4368
      %v5138 = vunpack.c.h.b16 %v4368
      %v5139 = vunpack.c.l.b16 %v4369
      %v5140 = vunpack.c.h.b16 %v4369
      %v5141 = vunpack.c.l.b16 %v4370
      %v5142 = vunpack.c.h.b16 %v4370
      %v5143 = vunpack.c.l.b16 %v4371
      %v5144 = vunpack.c.h.b16 %v4371
      %v5145 = vunpack.c.l.b16 %v4372
      %v5146 = vunpack.c.h.b16 %v4372
      %v5147 = vunpack.c.l.b16 %v4373
      %v5148 = vunpack.c.h.b16 %v4373
      %v5149 = vunpack.c.l.b16 %v4374
      %v5150 = vunpack.c.h.b16 %v4374
      %v5151 = vunpack.c.l.b16 %v4375
      %v5152 = vunpack.c.h.b16 %v4375
      %v5153 = vunpack.c.l.b16 %v4376
      %v5154 = vunpack.c.h.b16 %v4376
      %v5155 = vunpack.c.l.b16 %v4377
      %v5156 = vunpack.c.h.b16 %v4377
      %v5157 = vunpack.c.l.b16 %v4378
      %v5158 = vunpack.c.h.b16 %v4378
      %v5159 = vunpack.c.l.b16 %v4379
      %v5160 = vunpack.c.h.b16 %v4379
      %v5161 = vunpack.c.l.b16 %v4380
      %v5162 = vunpack.c.h.b16 %v4380
      %v5163 = vunpack.c.l.b16 %v4381
      %v5164 = vunpack.c.h.b16 %v4381
      %v5165 = vunpack.c.l.b16 %v4382
      %v5166 = vunpack.c.h.b16 %v4382
      %v5167 = vunpack.c.l.b16 %v4383
      %v5168 = vunpack.c.h.b16 %v4383
      %v5169 = vunpack.c.l.b16 %v4384
      %v5170 = vunpack.c.h.b16 %v4384
      %v5171 = vunpack.c.l.b16 %v4385
      %v5172 = vunpack.c.h.b16 %v4385
      %v5173 = vunpack.c.l.b16 %v4386
      %v5174 = vunpack.c.h.b16 %v4386
      %v5175 = vunpack.c.l.b16 %v4387
      %v5176 = vunpack.c.h.b16 %v4387
      %v5177 = vunpack.c.l.b16 %v4388
      %v5178 = vunpack.c.h.b16 %v4388
      %v5179 = vpack.c.b16 %v4671, %v4667
      %v5180 = vpack.c.b16 %v4672, %v4668
      %v5181 = vpack.c.b16 %v4673, %v4669
      %v5182 = vpack.c.b16 %v4674, %v4670
      %v5183 = vpack.c.b16 %v4679, %v4675
      %v5184 = vpack.c.b16 %v4680, %v4676
      %v5185 = vpack.c.b16 %v4681, %v4677
      %v5186 = vpack.c.b16 %v4682, %v4678
      %v5187 = vpack.c.b16 %v4687, %v4683
      %v5188 = vpack.c.b16 %v4688, %v4684
      %v5189 = vpack.c.b16 %v4689, %v4685
      %v5190 = vpack.c.b16 %v4690, %v4686
      %v5191 = vpack.c.b16 %v4695, %v4691
      %v5192 = vpack.c.b16 %v4696, %v4692
      %v5193 = vpack.c.b16 %v4697, %v4693
      %v5194 = vpack.c.b16 %v4698, %v4694
      %v5195 = vpack.c.b16 %v4703, %v4699
      %v5196 = vpack.c.b16 %v4704, %v4700
      %v5197 = vpack.c.b16 %v4705, %v4701
      %v5198 = vpack.c.b16 %v4706, %v4702
      %v5199 = vpack.c.b16 %v4711, %v4707
      %v5200 = vpack.c.b16 %v4712, %v4708
      %v5201 = vpack.c.b16 %v4713, %v4709
      %v5202 = vpack.c.b16 %v4714, %v4710
      %v5203 = vpack.c.b16 %v4719, %v4715
      %v5204 = vpack.c.b16 %v4720, %v4716
      %v5205 = vpack.c.b16 %v4721, %v4717
      %v5206 = vpack.c.b16 %v4722, %v4718
      %v5207 = vpack.c.b16 %v4727, %v4723
      %v5208 = vpack.c.b16 %v4728, %v4724
      %v5209 = vpack.c.b16 %v4729, %v4725
      %v5210 = vpack.c.b16 %v4730, %v4726
      %v5211 = vpack.c.b16 %v4735, %v4731
      %v5212 = vpack.c.b16 %v4736, %v4732
      %v5213 = vpack.c.b16 %v4737, %v4733
      %v5214 = vpack.c.b16 %v4738, %v4734
      %v5215 = vpack.c.b16 %v4743, %v4739
      %v5216 = vpack.c.b16 %v4744, %v4740
      %v5217 = vpack.c.b16 %v4745, %v4741
      %v5218 = vpack.c.b16 %v4746, %v4742
      %v5219 = vpack.c.b16 %v4751, %v4747
      %v5220 = vpack.c.b16 %v4752, %v4748
      %v5221 = vpack.c.b16 %v4753, %v4749
      %v5222 = vpack.c.b16 %v4754, %v4750
      %v5223 = vpack.c.b16 %v4759, %v4755
      %v5224 = vpack.c.b16 %v4760, %v4756
      %v5225 = vpack.c.b16 %v4761, %v4757
      %v5226 = vpack.c.b16 %v4762, %v4758
      %v5227 = vpack.c.b16 %v4767, %v4763
      %v5228 = vpack.c.b16 %v4768, %v4764
      %v5229 = vpack.c.b16 %v4769, %v4765
      %v5230 = vpack.c.b16 %v4770, %v4766
      %v5231 = vpack.c.b16 %v4775, %v4771
      %v5232 = vpack.c.b16 %v4776, %v4772
      %v5233 = vpack.c.b16 %v4777, %v4773
      %v5234 = vpack.c.b16 %v4778, %v4774
      %v5235 = vpack.c.b16 %v4783, %v4779
      %v5236 = vpack.c.b16 %v4784, %v4780
      %v5237 = vpack.c.b16 %v4785, %v4781
      %v5238 = vpack.c.b16 %v4786, %v4782
      %v5239 = vpack.c.b16 %v4791, %v4787
      %v5240 = vpack.c.b16 %v4792, %v4788
      %v5241 = vpack.c.b16 %v4793, %v4789
      %v5242 = vpack.c.b16 %v4794, %v4790
      %v5243 = vpack.c.b16 %v4799, %v4795
      %v5244 = vpack.c.b16 %v4800, %v4796
      %v5245 = vpack.c.b16 %v4801, %v4797
      %v5246 = vpack.c.b16 %v4802, %v4798
      %v5247 = vpack.c.b16 %v4807, %v4803
      %v5248 = vpack.c.b16 %v4808, %v4804
      %v5249 = vpack.c.b16 %v4809, %v4805
      %v5250 = vpack.c.b16 %v4810, %v4806
      %v5251 = vpack.c.b16 %v4815, %v4811
      %v5252 = vpack.c.b16 %v4816, %v4812
      %v5253 = vpack.c.b16 %v4817, %v4813
      %v5254 = vpack.c.b16 %v4818, %v4814
      %v5255 = vpack.c.b16 %v4823, %v4819
      %v5256 = vpack.c.b16 %v4824, %v4820
      %v5257 = vpack.c.b16 %v4825, %v4821
      %v5258 = vpack.c.b16 %v4826, %v4822
      %v5259 = vpack.c.b16 %v4831, %v4827
      %v5260 = vpack.c.b16 %v4832, %v4828
      %v5261 = vpack.c.b16 %v4833, %v4829
      %v5262 = vpack.c.b16 %v4834, %v4830
      %v5263 = vpack.c.b16 %v4839, %v4835
      %v5264 = vpack.c.b16 %v4840, %v4836
      %v5265 = vpack.c.b16 %v4841, %v4837
      %v5266 = vpack.c.b16 %v4842, %v4838
      %v5267 = vpack.c.b16 %v4847, %v4843
      %v5268 = vpack.c.b16 %v4848, %v4844
      %v5269 = vpack.c.b16 %v4849, %v4845
      %v5270 = vpack.c.b16 %v4850, %v4846
      %v5271 = vpack.c.b16 %v4855, %v4851
      %v5272 = vpack.c.b16 %v4856, %v4852
      %v5273 = vpack.c.b16 %v4857, %v4853
      %v5274 = vpack.c.b16 %v4858, %v4854
      %v5275 = vpack.c.b16 %v4863, %v4859
      %v5276 = vpack.c.b16 %v4864, %v4860
      %v5277 = vpack.c.b16 %v4865, %v4861
      %v5278 = vpack.c.b16 %v4866, %v4862
      %v5279 = vpack.c.b16 %v4871, %v4867
      %v5280 = vpack.c.b16 %v4872, %v4868
      %v5281 = vpack.c.b16 %v4873, %v4869
      %v5282 = vpack.c.b16 %v4874, %v4870
      %v5283 = vpack.c.b16 %v4879, %v4875
      %v5284 = vpack.c.b16 %v4880, %v4876
      %v5285 = vpack.c.b16 %v4881, %v4877
      %v5286 = vpack.c.b16 %v4882, %v4878
      %v5287 = vpack.c.b16 %v4887, %v4883
      %v5288 = vpack.c.b16 %v4888, %v4884
      %v5289 = vpack.c.b16 %v4889, %v4885
      %v5290 = vpack.c.b16 %v4890, %v4886
      %v5291 = vpack.c.b16 %v4895, %v4891
      %v5292 = vpack.c.b16 %v4896, %v4892
      %v5293 = vpack.c.b16 %v4897, %v4893
      %v5294 = vpack.c.b16 %v4898, %v4894
      %v5295 = vpack.c.b16 %v4903, %v4899
      %v5296 = vpack.c.b16 %v4904, %v4900
      %v5297 = vpack.c.b16 %v4905, %v4901
      %v5298 = vpack.c.b16 %v4906, %v4902
      %v5299 = vpack.c.b16 %v4911, %v4907
      %v5300 = vpack.c.b16 %v4912, %v4908
      %v5301 = vpack.c.b16 %v4913, %v4909
      %v5302 = vpack.c.b16 %v4914, %v4910
      %v5303 = vpack.c.b16 %v4919, %v4915
      %v5304 = vpack.c.b16 %v4920, %v4916
      %v5305 = vpack.c.b16 %v4921, %v4917
      %v5306 = vpack.c.b16 %v4922, %v4918
      %v5307 = vpack.c.b16 %v4927, %v4923
      %v5308 = vpack.c.b16 %v4928, %v4924
      %v5309 = vpack.c.b16 %v4929, %v4925
      %v5310 = vpack.c.b16 %v4930, %v4926
      %v5311 = vpack.c.b16 %v4935, %v4931
      %v5312 = vpack.c.b16 %v4936, %v4932
      %v5313 = vpack.c.b16 %v4937, %v4933
      %v5314 = vpack.c.b16 %v4938, %v4934
      %v5315 = vpack.c.b16 %v4943, %v4939
      %v5316 = vpack.c.b16 %v4944, %v4940
      %v5317 = vpack.c.b16 %v4945, %v4941
      %v5318 = vpack.c.b16 %v4946, %v4942
      %v5319 = vpack.c.b16 %v4951, %v4947
      %v5320 = vpack.c.b16 %v4952, %v4948
      %v5321 = vpack.c.b16 %v4953, %v4949
      %v5322 = vpack.c.b16 %v4954, %v4950
      %v5323 = vpack.c.b16 %v4959, %v4955
      %v5324 = vpack.c.b16 %v4960, %v4956
      %v5325 = vpack.c.b16 %v4961, %v4957
      %v5326 = vpack.c.b16 %v4962, %v4958
      %v5327 = vpack.c.b16 %v4967, %v4963
      %v5328 = vpack.c.b16 %v4968, %v4964
      %v5329 = vpack.c.b16 %v4969, %v4965
      %v5330 = vpack.c.b16 %v4970, %v4966
      %v5331 = vpack.c.b16 %v4975, %v4971
      %v5332 = vpack.c.b16 %v4976, %v4972
      %v5333 = vpack.c.b16 %v4977, %v4973
      %v5334 = vpack.c.b16 %v4978, %v4974
      %v5335 = vpack.c.b16 %v4983, %v4979
      %v5336 = vpack.c.b16 %v4984, %v4980
      %v5337 = vpack.c.b16 %v4985, %v4981
      %v5338 = vpack.c.b16 %v4986, %v4982
      %v5339 = vpack.c.b16 %v4991, %v4987
      %v5340 = vpack.c.b16 %v4992, %v4988
      %v5341 = vpack.c.b16 %v4993, %v4989
      %v5342 = vpack.c.b16 %v4994, %v4990
      %v5343 = vpack.c.b16 %v4999, %v4995
      %v5344 = vpack.c.b16 %v5000, %v4996
      %v5345 = vpack.c.b16 %v5001, %v4997
      %v5346 = vpack.c.b16 %v5002, %v4998
      %v5347 = vpack.c.b16 %v5007, %v5003
      %v5348 = vpack.c.b16 %v5008, %v5004
      %v5349 = vpack.c.b16 %v5009, %v5005
      %v5350 = vpack.c.b16 %v5010, %v5006
      %v5351 = vpack.c.b16 %v5015, %v5011
      %v5352 = vpack.c.b16 %v5016, %v5012
      %v5353 = vpack.c.b16 %v5017, %v5013
      %v5354 = vpack.c.b16 %v5018, %v5014
      %v5355 = vpack.c.b16 %v5023, %v5019
      %v5356 = vpack.c.b16 %v5024, %v5020
      %v5357 = vpack.c.b16 %v5025, %v5021
      %v5358 = vpack.c.b16 %v5026, %v5022
      %v5359 = vpack.c.b16 %v5031, %v5027
      %v5360 = vpack.c.b16 %v5032, %v5028
      %v5361 = vpack.c.b16 %v5033, %v5029
      %v5362 = vpack.c.b16 %v5034, %v5030
      %v5363 = vpack.c.b16 %v5039, %v5035
      %v5364 = vpack.c.b16 %v5040, %v5036
      %v5365 = vpack.c.b16 %v5041, %v5037
      %v5366 = vpack.c.b16 %v5042, %v5038
      %v5367 = vpack.c.b16 %v5047, %v5043
      %v5368 = vpack.c.b16 %v5048, %v5044
      %v5369 = vpack.c.b16 %v5049, %v5045
      %v5370 = vpack.c.b16 %v5050, %v5046
      %v5371 = vpack.c.b16 %v5055, %v5051
      %v5372 = vpack.c.b16 %v5056, %v5052
      %v5373 = vpack.c.b16 %v5057, %v5053
      %v5374 = vpack.c.b16 %v5058, %v5054
      %v5375 = vpack.c.b16 %v5063, %v5059
      %v5376 = vpack.c.b16 %v5064, %v5060
      %v5377 = vpack.c.b16 %v5065, %v5061
      %v5378 = vpack.c.b16 %v5066, %v5062
      %v5379 = vpack.c.b16 %v5071, %v5067
      %v5380 = vpack.c.b16 %v5072, %v5068
      %v5381 = vpack.c.b16 %v5073, %v5069
      %v5382 = vpack.c.b16 %v5074, %v5070
      %v5383 = vpack.c.b16 %v5079, %v5075
      %v5384 = vpack.c.b16 %v5080, %v5076
      %v5385 = vpack.c.b16 %v5081, %v5077
      %v5386 = vpack.c.b16 %v5082, %v5078
      %v5387 = vpack.c.b16 %v5087, %v5083
      %v5388 = vpack.c.b16 %v5088, %v5084
      %v5389 = vpack.c.b16 %v5089, %v5085
      %v5390 = vpack.c.b16 %v5090, %v5086
      %v5391 = vpack.c.b16 %v5095, %v5091
      %v5392 = vpack.c.b16 %v5096, %v5092
      %v5393 = vpack.c.b16 %v5097, %v5093
      %v5394 = vpack.c.b16 %v5098, %v5094
      %v5395 = vpack.c.b16 %v5103, %v5099
      %v5396 = vpack.c.b16 %v5104, %v5100
      %v5397 = vpack.c.b16 %v5105, %v5101
      %v5398 = vpack.c.b16 %v5106, %v5102
      %v5399 = vpack.c.b16 %v5111, %v5107
      %v5400 = vpack.c.b16 %v5112, %v5108
      %v5401 = vpack.c.b16 %v5113, %v5109
      %v5402 = vpack.c.b16 %v5114, %v5110
      %v5403 = vpack.c.b16 %v5119, %v5115
      %v5404 = vpack.c.b16 %v5120, %v5116
      %v5405 = vpack.c.b16 %v5121, %v5117
      %v5406 = vpack.c.b16 %v5122, %v5118
      %v5407 = vpack.c.b16 %v5127, %v5123
      %v5408 = vpack.c.b16 %v5128, %v5124
      %v5409 = vpack.c.b16 %v5129, %v5125
      %v5410 = vpack.c.b16 %v5130, %v5126
      %v5411 = vpack.c.b16 %v5135, %v5131
      %v5412 = vpack.c.b16 %v5136, %v5132
      %v5413 = vpack.c.b16 %v5137, %v5133
      %v5414 = vpack.c.b16 %v5138, %v5134
      %v5415 = vpack.c.b16 %v5143, %v5139
      %v5416 = vpack.c.b16 %v5144, %v5140
      %v5417 = vpack.c.b16 %v5145, %v5141
      %v5418 = vpack.c.b16 %v5146, %v5142
      %v5419 = vpack.c.b16 %v5151, %v5147
      %v5420 = vpack.c.b16 %v5152, %v5148
      %v5421 = vpack.c.b16 %v5153, %v5149
      %v5422 = vpack.c.b16 %v5154, %v5150
      %v5423 = vpack.c.b16 %v5159, %v5155
      %v5424 = vpack.c.b16 %v5160, %v5156
      %v5425 = vpack.c.b16 %v5161, %v5157
      %v5426 = vpack.c.b16 %v5162, %v5158
      %v5427 = vpack.c.b16 %v5167, %v5163
      %v5428 = vpack.c.b16 %v5168, %v5164
      %v5429 = vpack.c.b16 %v5169, %v5165
      %v5430 = vpack.c.b16 %v5170, %v5166
      %v5431 = vpack.c.b16 %v5175, %v5171
      %v5432 = vpack.c.b16 %v5176, %v5172
      %v5433 = vpack.c.b16 %v5177, %v5173
      %v5434 = vpack.c.b16 %v5178, %v5174
      %5691 = vmatprep.subr.bf16.mxu0 %v5180
      %5692 = vmatpush1.bf16.msra.mxu0 %v5179
      %5693 = vmatprep.subr.bf16.mxu0 %v5184
      %5694 = vmatpush1.bf16.msra.mxu0 %v5183
      %5695 = vmatprep.subr.bf16.mxu0 %v5188
      %5696 = vmatpush1.bf16.msra.mxu0 %v5187
      %5697 = vmatprep.subr.bf16.mxu0 %v5192
      %5698 = vmatpush1.bf16.msra.mxu0 %v5191
      %5699 = vmatprep.subr.bf16.mxu0 %v5196
      %5700 = vmatpush1.bf16.msra.mxu0 %v5195
      %5701 = vmatprep.subr.bf16.mxu0 %v5200
      %5702 = vmatpush1.bf16.msra.mxu0 %v5199
      %5703 = vmatprep.subr.bf16.mxu0 %v5204
      %5704 = vmatpush1.bf16.msra.mxu0 %v5203
      %5705 = vmatprep.subr.bf16.mxu0 %v5208
      %5706 = vmatpush1.bf16.msra.mxu0 %v5207
      %5707 = vmatprep.subr.bf16.mxu0 %v5212
      %5708 = vmatpush1.bf16.msra.mxu0 %v5211
      %5709 = vmatprep.subr.bf16.mxu0 %v5216
      %5710 = vmatpush1.bf16.msra.mxu0 %v5215
      %5711 = vmatprep.subr.bf16.mxu0 %v5220
      %5712 = vmatpush1.bf16.msra.mxu0 %v5219
      %5713 = vmatprep.subr.bf16.mxu0 %v5224
      %5714 = vmatpush1.bf16.msra.mxu0 %v5223
      %5715 = vmatprep.subr.bf16.mxu0 %v5228
      %5716 = vmatpush1.bf16.msra.mxu0 %v5227
      %5717 = vmatprep.subr.bf16.mxu0 %v5232
      %5718 = vmatpush1.bf16.msra.mxu0 %v5231
      %5719 = vmatprep.subr.bf16.mxu0 %v5236
      %5720 = vmatpush1.bf16.msra.mxu0 %v5235
      %5721 = vmatprep.subr.bf16.mxu0 %v5240
      %5722 = vmatpush1.bf16.msra.mxu0 %v5239
      %5723 = vmatprep.mubr.bf16.mxu0 %v4126
      %5724 = vmatmul.mubr.bf16.gmra.mrb[0].mxu0 %v4125
      %v5725 = vpop.f32.mrb[0].mxu0
      %v5726 = vadd.f32 %v4394, %v5725
      %v5727 = vpop.f32.mrb[0].mxu0
      %v5728 = vadd.f32 %v4398, %v5727
      %v5729 = vpop.f32.mrb[0].mxu0
      %v5730 = vadd.f32 %v4394, %v5729
      %v5731 = vpop.f32.mrb[0].mxu0
      %v5732 = vadd.f32 %v4398, %v5731
      %5733 = vdwg.mxu0
      %5734 = vmatprep.subr.bf16.mxu0 %v5244
      %5735 = vmatpush1.bf16.msra.mxu0 %v5243
      %5736 = vmatprep.subr.bf16.mxu0 %v5248
      %5737 = vmatpush1.bf16.msra.mxu0 %v5247
      %5738 = vmatprep.subr.bf16.mxu0 %v5252
      %5739 = vmatpush1.bf16.msra.mxu0 %v5251
      %5740 = vmatprep.subr.bf16.mxu0 %v5256
      %5741 = vmatpush1.bf16.msra.mxu0 %v5255
      %5742 = vmatprep.subr.bf16.mxu0 %v5260
      %5743 = vmatpush1.bf16.msra.mxu0 %v5259
      %5744 = vmatprep.subr.bf16.mxu0 %v5264
      %5745 = vmatpush1.bf16.msra.mxu0 %v5263
      %5746 = vmatprep.subr.bf16.mxu0 %v5268
      %5747 = vmatpush1.bf16.msra.mxu0 %v5267
      %5748 = vmatprep.subr.bf16.mxu0 %v5272
      %5749 = vmatpush1.bf16.msra.mxu0 %v5271
      %5750 = vmatprep.subr.bf16.mxu0 %v5276
      %5751 = vmatpush1.bf16.msra.mxu0 %v5275
      %5752 = vmatprep.subr.bf16.mxu0 %v5280
      %5753 = vmatpush1.bf16.msra.mxu0 %v5279
      %5754 = vmatprep.subr.bf16.mxu0 %v5284
      %5755 = vmatpush1.bf16.msra.mxu0 %v5283
      %5756 = vmatprep.subr.bf16.mxu0 %v5288
      %5757 = vmatpush1.bf16.msra.mxu0 %v5287
      %5758 = vmatprep.subr.bf16.mxu0 %v5292
      %5759 = vmatpush1.bf16.msra.mxu0 %v5291
      %5760 = vmatprep.subr.bf16.mxu0 %v5296
      %5761 = vmatpush1.bf16.msra.mxu0 %v5295
      %5762 = vmatprep.subr.bf16.mxu0 %v5300
      %5763 = vmatpush1.bf16.msra.mxu0 %v5299
      %5764 = vmatprep.subr.bf16.mxu0 %v5304
      %5765 = vmatpush1.bf16.msra.mxu0 %v5303
      %5766 = vmatprep.mubr.bf16.mxu0 %v4128
      %5767 = vmatmul.mubr.bf16.gmra.mrb[0].mxu0 %v4127
      %v5768 = vpop.f32.mrb[0].mxu0
      %v5769 = vadd.f32 %v5726, %v5768
      %v5770 = vpop.f32.mrb[0].mxu0
      %v5771 = vadd.f32 %v5728, %v5770
      %v5772 = vpop.f32.mrb[0].mxu0
      %v5773 = vadd.f32 %v5730, %v5772
      %v5774 = vpop.f32.mrb[0].mxu0
      %v5775 = vadd.f32 %v5732, %v5774
      %5776 = vdwg.mxu0
      %5777 = vmatprep.subr.bf16.mxu0 %v5308
      %5778 = vmatpush1.bf16.msra.mxu0 %v5307
      %5779 = vmatprep.subr.bf16.mxu0 %v5312
      %5780 = vmatpush1.bf16.msra.mxu0 %v5311
      %5781 = vmatprep.subr.bf16.mxu0 %v5316
      %5782 = vmatpush1.bf16.msra.mxu0 %v5315
      %5783 = vmatprep.subr.bf16.mxu0 %v5320
      %5784 = vmatpush1.bf16.msra.mxu0 %v5319
      %5785 = vmatprep.subr.bf16.mxu0 %v5324
      %5786 = vmatpush1.bf16.msra.mxu0 %v5323
      %5787 = vmatprep.subr.bf16.mxu0 %v5328
      %5788 = vmatpush1.bf16.msra.mxu0 %v5327
      %5789 = vmatprep.subr.bf16.mxu0 %v5332
      %5790 = vmatpush1.bf16.msra.mxu0 %v5331
      %5791 = vmatprep.subr.bf16.mxu0 %v5336
      %5792 = vmatpush1.bf16.msra.mxu0 %v5335
      %5793 = vmatprep.subr.bf16.mxu0 %v5340
      %5794 = vmatpush1.bf16.msra.mxu0 %v5339
      %5795 = vmatprep.subr.bf16.mxu0 %v5344
      %5796 = vmatpush1.bf16.msra.mxu0 %v5343
      %5797 = vmatprep.subr.bf16.mxu0 %v5348
      %5798 = vmatpush1.bf16.msra.mxu0 %v5347
      %5799 = vmatprep.subr.bf16.mxu0 %v5352
      %5800 = vmatpush1.bf16.msra.mxu0 %v5351
      %5801 = vmatprep.subr.bf16.mxu0 %v5356
      %5802 = vmatpush1.bf16.msra.mxu0 %v5355
      %5803 = vmatprep.subr.bf16.mxu0 %v5360
      %5804 = vmatpush1.bf16.msra.mxu0 %v5359
      %5805 = vmatprep.subr.bf16.mxu0 %v5364
      %5806 = vmatpush1.bf16.msra.mxu0 %v5363
      %5807 = vmatprep.subr.bf16.mxu0 %v5368
      %5808 = vmatpush1.bf16.msra.mxu0 %v5367
      %5809 = vmatprep.mubr.bf16.mxu0 %v4130
      %5810 = vmatmul.mubr.bf16.gmra.mrb[0].mxu0 %v4129
      %v5811 = vpop.f32.mrb[0].mxu0
      %v5812 = vadd.f32 %v5769, %v5811
      %v5813 = vpop.f32.mrb[0].mxu0
      %v5814 = vadd.f32 %v5771, %v5813
      %v5815 = vpop.f32.mrb[0].mxu0
      %v5816 = vadd.f32 %v5773, %v5815
      %v5817 = vpop.f32.mrb[0].mxu0
      %v5818 = vadd.f32 %v5775, %v5817
      %5819 = vdwg.mxu0
      %5820 = vmatprep.subr.bf16.mxu0 %v5372
      %5821 = vmatpush1.bf16.msra.mxu0 %v5371
      %5822 = vmatprep.subr.bf16.mxu0 %v5376
      %5823 = vmatpush1.bf16.msra.mxu0 %v5375
      %5824 = vmatprep.subr.bf16.mxu0 %v5380
      %5825 = vmatpush1.bf16.msra.mxu0 %v5379
      %5826 = vmatprep.subr.bf16.mxu0 %v5384
      %5827 = vmatpush1.bf16.msra.mxu0 %v5383
      %5828 = vmatprep.subr.bf16.mxu0 %v5388
      %5829 = vmatpush1.bf16.msra.mxu0 %v5387
      %5830 = vmatprep.subr.bf16.mxu0 %v5392
      %5831 = vmatpush1.bf16.msra.mxu0 %v5391
      %5832 = vmatprep.subr.bf16.mxu0 %v5396
      %5833 = vmatpush1.bf16.msra.mxu0 %v5395
      %5834 = vmatprep.subr.bf16.mxu0 %v5400
      %5835 = vmatpush1.bf16.msra.mxu0 %v5399
      %5836 = vmatprep.subr.bf16.mxu0 %v5404
      %5837 = vmatpush1.bf16.msra.mxu0 %v5403
      %5838 = vmatprep.subr.bf16.mxu0 %v5408
      %5839 = vmatpush1.bf16.msra.mxu0 %v5407
      %5840 = vmatprep.subr.bf16.mxu0 %v5412
      %5841 = vmatpush1.bf16.msra.mxu0 %v5411
      %5842 = vmatprep.subr.bf16.mxu0 %v5416
      %5843 = vmatpush1.bf16.msra.mxu0 %v5415
      %5844 = vmatprep.subr.bf16.mxu0 %v5420
      %5845 = vmatpush1.bf16.msra.mxu0 %v5419
      %5846 = vmatprep.subr.bf16.mxu0 %v5424
      %5847 = vmatpush1.bf16.msra.mxu0 %v5423
      %5848 = vmatprep.subr.bf16.mxu0 %v5428
      %5849 = vmatpush1.bf16.msra.mxu0 %v5427
      %5850 = vmatprep.subr.bf16.mxu0 %v5432
      %5851 = vmatpush1.bf16.msra.mxu0 %v5431
      %5852 = vmatprep.mubr.bf16.mxu0 %v4132
      %5853 = vmatmul.mubr.bf16.gmra.mrb[0].mxu0 %v4131
      %v5854 = vpop.f32.mrb[0].mxu0
      %v5855 = vadd.f32 %v5812, %v5854
      %v5856 = vpop.f32.mrb[0].mxu0
      %v5857 = vadd.f32 %v5814, %v5856
      %v5858 = vpop.f32.mrb[0].mxu0
      %v5859 = vadd.f32 %v5816, %v5858
      %v5860 = vpop.f32.mrb[0].mxu0
      %v5861 = vadd.f32 %v5818, %v5860
      %5862 = vdwg.mxu0
      %5863 = vmatprep.subr.bf16.mxu0 %v5182
      %5864 = vmatpush1.bf16.msra.mxu0 %v5181
      %5865 = vmatprep.subr.bf16.mxu0 %v5186
      %5866 = vmatpush1.bf16.msra.mxu0 %v5185
      %5867 = vmatprep.subr.bf16.mxu0 %v5190
      %5868 = vmatpush1.bf16.msra.mxu0 %v5189
      %5869 = vmatprep.subr.bf16.mxu0 %v5194
      %5870 = vmatpush1.bf16.msra.mxu0 %v5193
      %5871 = vmatprep.subr.bf16.mxu0 %v5198
      %5872 = vmatpush1.bf16.msra.mxu0 %v5197
      %5873 = vmatprep.subr.bf16.mxu0 %v5202
      %5874 = vmatpush1.bf16.msra.mxu0 %v5201
      %5875 = vmatprep.subr.bf16.mxu0 %v5206
      %5876 = vmatpush1.bf16.msra.mxu0 %v5205
      %5877 = vmatprep.subr.bf16.mxu0 %v5210
      %5878 = vmatpush1.bf16.msra.mxu0 %v5209
      %5879 = vmatprep.subr.bf16.mxu0 %v5214
      %5880 = vmatpush1.bf16.msra.mxu0 %v5213
      %5881 = vmatprep.subr.bf16.mxu0 %v5218
      %5882 = vmatpush1.bf16.msra.mxu0 %v5217
      %5883 = vmatprep.subr.bf16.mxu0 %v5222
      %5884 = vmatpush1.bf16.msra.mxu0 %v5221
      %5885 = vmatprep.subr.bf16.mxu0 %v5226
      %5886 = vmatpush1.bf16.msra.mxu0 %v5225
      %5887 = vmatprep.subr.bf16.mxu0 %v5230
      %5888 = vmatpush1.bf16.msra.mxu0 %v5229
      %5889 = vmatprep.subr.bf16.mxu0 %v5234
      %5890 = vmatpush1.bf16.msra.mxu0 %v5233
      %5891 = vmatprep.subr.bf16.mxu0 %v5238
      %5892 = vmatpush1.bf16.msra.mxu0 %v5237
      %5893 = vmatprep.subr.bf16.mxu0 %v5242
      %5894 = vmatpush1.bf16.msra.mxu0 %v5241
      %5895 = vmatprep.mubr.bf16.mxu0 %v4126
      %5896 = vmatmul.mubr.bf16.gmra.mrb[0].mxu0 %v4125
      %v5897 = vpop.f32.mrb[0].mxu0
      %v5898 = vadd.f32 %v4402, %v5897
      %v5899 = vpop.f32.mrb[0].mxu0
      %v5900 = vadd.f32 %v4406, %v5899
      %v5901 = vpop.f32.mrb[0].mxu0
      %v5902 = vadd.f32 %v4402, %v5901
      %v5903 = vpop.f32.mrb[0].mxu0
      %v5904 = vadd.f32 %v4406, %v5903
      %5905 = vdwg.mxu0
      %5906 = vmatprep.subr.bf16.mxu0 %v5246
      %5907 = vmatpush1.bf16.msra.mxu0 %v5245
      %5908 = vmatprep.subr.bf16.mxu0 %v5250
      %5909 = vmatpush1.bf16.msra.mxu0 %v5249
      %5910 = vmatprep.subr.bf16.mxu0 %v5254
      %5911 = vmatpush1.bf16.msra.mxu0 %v5253
      %5912 = vmatprep.subr.bf16.mxu0 %v5258
      %5913 = vmatpush1.bf16.msra.mxu0 %v5257
      %5914 = vmatprep.subr.bf16.mxu0 %v5262
      %5915 = vmatpush1.bf16.msra.mxu0 %v5261
      %5916 = vmatprep.subr.bf16.mxu0 %v5266
      %5917 = vmatpush1.bf16.msra.mxu0 %v5265
      %5918 = vmatprep.subr.bf16.mxu0 %v5270
      %5919 = vmatpush1.bf16.msra.mxu0 %v5269
      %5920 = vmatprep.subr.bf16.mxu0 %v5274
      %5921 = vmatpush1.bf16.msra.mxu0 %v5273
      %5922 = vmatprep.subr.bf16.mxu0 %v5278
      %5923 = vmatpush1.bf16.msra.mxu0 %v5277
      %5924 = vmatprep.subr.bf16.mxu0 %v5282
      %5925 = vmatpush1.bf16.msra.mxu0 %v5281
      %5926 = vmatprep.subr.bf16.mxu0 %v5286
      %5927 = vmatpush1.bf16.msra.mxu0 %v5285
      %5928 = vmatprep.subr.bf16.mxu0 %v5290
      %5929 = vmatpush1.bf16.msra.mxu0 %v5289
      %5930 = vmatprep.subr.bf16.mxu0 %v5294
      %5931 = vmatpush1.bf16.msra.mxu0 %v5293
      %5932 = vmatprep.subr.bf16.mxu0 %v5298
      %5933 = vmatpush1.bf16.msra.mxu0 %v5297
      %5934 = vmatprep.subr.bf16.mxu0 %v5302
      %5935 = vmatpush1.bf16.msra.mxu0 %v5301
      %5936 = vmatprep.subr.bf16.mxu0 %v5306
      %5937 = vmatpush1.bf16.msra.mxu0 %v5305
      %5938 = vmatprep.mubr.bf16.mxu0 %v4128
      %5939 = vmatmul.mubr.bf16.gmra.mrb[0].mxu0 %v4127
      %v5940 = vpop.f32.mrb[0].mxu0
      %v5941 = vadd.f32 %v5898, %v5940
      %v5942 = vpop.f32.mrb[0].mxu0
      %v5943 = vadd.f32 %v5900, %v5942
      %v5944 = vpop.f32.mrb[0].mxu0
      %v5945 = vadd.f32 %v5902, %v5944
      %v5946 = vpop.f32.mrb[0].mxu0
      %v5947 = vadd.f32 %v5904, %v5946
      %5948 = vdwg.mxu0
      %5949 = vmatprep.subr.bf16.mxu0 %v5310
      %5950 = vmatpush1.bf16.msra.mxu0 %v5309
      %5951 = vmatprep.subr.bf16.mxu0 %v5314
      %5952 = vmatpush1.bf16.msra.mxu0 %v5313
      %5953 = vmatprep.subr.bf16.mxu0 %v5318
      %5954 = vmatpush1.bf16.msra.mxu0 %v5317
      %5955 = vmatprep.subr.bf16.mxu0 %v5322
      %5956 = vmatpush1.bf16.msra.mxu0 %v5321
      %5957 = vmatprep.subr.bf16.mxu0 %v5326
      %5958 = vmatpush1.bf16.msra.mxu0 %v5325
      %5959 = vmatprep.subr.bf16.mxu0 %v5330
      %5960 = vmatpush1.bf16.msra.mxu0 %v5329
      %5961 = vmatprep.subr.bf16.mxu0 %v5334
      %5962 = vmatpush1.bf16.msra.mxu0 %v5333
      %5963 = vmatprep.subr.bf16.mxu0 %v5338
      %5964 = vmatpush1.bf16.msra.mxu0 %v5337
      %5965 = vmatprep.subr.bf16.mxu0 %v5342
      %5966 = vmatpush1.bf16.msra.mxu0 %v5341
      %5967 = vmatprep.subr.bf16.mxu0 %v5346
      %5968 = vmatpush1.bf16.msra.mxu0 %v5345
      %5969 = vmatprep.subr.bf16.mxu0 %v5350
      %5970 = vmatpush1.bf16.msra.mxu0 %v5349
      %5971 = vmatprep.subr.bf16.mxu0 %v5354
      %5972 = vmatpush1.bf16.msra.mxu0 %v5353
      %5973 = vmatprep.subr.bf16.mxu0 %v5358
      %5974 = vmatpush1.bf16.msra.mxu0 %v5357
      %5975 = vmatprep.subr.bf16.mxu0 %v5362
      %5976 = vmatpush1.bf16.msra.mxu0 %v5361
      %5977 = vmatprep.subr.bf16.mxu0 %v5366
      %5978 = vmatpush1.bf16.msra.mxu0 %v5365
      %5979 = vmatprep.subr.bf16.mxu0 %v5370
      %5980 = vmatpush1.bf16.msra.mxu0 %v5369
      %5981 = vmatprep.mubr.bf16.mxu0 %v4130
      %5982 = vmatmul.mubr.bf16.gmra.mrb[0].mxu0 %v4129
      %v5983 = vpop.f32.mrb[0].mxu0
      %v5984 = vadd.f32 %v5941, %v5983
      %v5985 = vpop.f32.mrb[0].mxu0
      %v5986 = vadd.f32 %v5943, %v5985
      %v5987 = vpop.f32.mrb[0].mxu0
      %v5988 = vadd.f32 %v5945, %v5987
      %v5989 = vpop.f32.mrb[0].mxu0
      %v5990 = vadd.f32 %v5947, %v5989
      %5991 = vdwg.mxu0
      %5992 = vmatprep.subr.bf16.mxu0 %v5374
      %5993 = vmatpush1.bf16.msra.mxu0 %v5373
      %5994 = vmatprep.subr.bf16.mxu0 %v5378
      %5995 = vmatpush1.bf16.msra.mxu0 %v5377
      %5996 = vmatprep.subr.bf16.mxu0 %v5382
      %5997 = vmatpush1.bf16.msra.mxu0 %v5381
      %5998 = vmatprep.subr.bf16.mxu0 %v5386
      %5999 = vmatpush1.bf16.msra.mxu0 %v5385
      %6000 = vmatprep.subr.bf16.mxu0 %v5390
      %6001 = vmatpush1.bf16.msra.mxu0 %v5389
      %6002 = vmatprep.subr.bf16.mxu0 %v5394
      %6003 = vmatpush1.bf16.msra.mxu0 %v5393
      %6004 = vmatprep.subr.bf16.mxu0 %v5398
      %6005 = vmatpush1.bf16.msra.mxu0 %v5397
      %6006 = vmatprep.subr.bf16.mxu0 %v5402
      %6007 = vmatpush1.bf16.msra.mxu0 %v5401
      %6008 = vmatprep.subr.bf16.mxu0 %v5406
      %6009 = vmatpush1.bf16.msra.mxu0 %v5405
      %6010 = vmatprep.subr.bf16.mxu0 %v5410
      %6011 = vmatpush1.bf16.msra.mxu0 %v5409
      %6012 = vmatprep.subr.bf16.mxu0 %v5414
      %6013 = vmatpush1.bf16.msra.mxu0 %v5413
      %6014 = vmatprep.subr.bf16.mxu0 %v5418
      %6015 = vmatpush1.bf16.msra.mxu0 %v5417
      %6016 = vmatprep.subr.bf16.mxu0 %v5422
      %6017 = vmatpush1.bf16.msra.mxu0 %v5421
      %6018 = vmatprep.subr.bf16.mxu0 %v5426
      %6019 = vmatpush1.bf16.msra.mxu0 %v5425
      %6020 = vmatprep.subr.bf16.mxu0 %v5430
      %6021 = vmatpush1.bf16.msra.mxu0 %v5429
      %6022 = vmatprep.subr.bf16.mxu0 %v5434
      %6023 = vmatpush1.bf16.msra.mxu0 %v5433
      %6024 = vmatprep.mubr.bf16.mxu0 %v4132
      %6025 = vmatmul.mubr.bf16.gmra.mrb[0].mxu0 %v4131
      %v6026 = vpop.f32.mrb[0].mxu0
      %v6027 = vadd.f32 %v5984, %v6026
      %v6028 = vpop.f32.mrb[0].mxu0
      %v6029 = vadd.f32 %v5986, %v6028
      %v6030 = vpop.f32.mrb[0].mxu0
      %v6031 = vadd.f32 %v5988, %v6030
      %v6032 = vpop.f32.mrb[0].mxu0
      %v6033 = vadd.f32 %v5990, %v6032
      %6034 = vdwg.mxu0
      %vm6035 = vcmp.gt.f32.partialorder %v5855, 0.0
      %vm6036 = vcmp.gt.f32.partialorder %v5857, 0.0
      %vm6037 = vcmp.gt.f32.partialorder %v6027, 0.0
      %vm6038 = vcmp.gt.f32.partialorder %v6029, 0.0
      %vm6039 = vcmp.gt.f32.partialorder %v5859, 0.0
      %vm6040 = vcmp.gt.f32.partialorder %v5861, 0.0
      %vm6041 = vcmp.gt.f32.partialorder %v6031, 0.0
      %vm6042 = vcmp.gt.f32.partialorder %v6033, 0.0
      %v6043 = vmul.f32 %v5855, 0.2
      %v6044 = vmul.f32 %v5857, 0.2
      %v6045 = vmul.f32 %v6027, 0.2
      %v6046 = vmul.f32 %v6029, 0.2
      %v6047 = vmul.f32 %v5859, 0.2
      %v6048 = vmul.f32 %v5861, 0.2
      %v6049 = vmul.f32 %v6031, 0.2
      %v6050 = vmul.f32 %v6033, 0.2
      %v6051 = vsel %vm6035, %v5855, %v6043
      %v6052 = vsel %vm6036, %v5857, %v6044
      %v6053 = vsel %vm6037, %v6027, %v6045
      %v6054 = vsel %vm6038, %v6029, %v6046
      %v6055 = vsel %vm6039, %v5859, %v6047
      %v6056 = vsel %vm6040, %v5861, %v6048
      %v6057 = vsel %vm6041, %v6031, %v6049
      %v6058 = vsel %vm6042, %v6033, %v6050
      %v6059 = vpack.c.bf16 %v6055, %v6051
      %v6060 = vpack.c.bf16 %v6056, %v6052
      %v6061 = vpack.c.bf16 %v6057, %v6053
      %v6062 = vpack.c.bf16 %v6058, %v6054
      %v6063 = vld [vmem:[#allocation12] sm:$0xff]
      %v6064 = vld [vmem:[#allocation12 + $0x8] sm:$0xff]
      %v6065 = vld [vmem:[#allocation12 + $0x10] sm:$0xff]
      %v6066 = vld [vmem:[#allocation12 + $0x18] sm:$0xff]
      %v6067 = vld [vmem:[#allocation12 + $0x20] sm:$0xff]
      %v6068 = vld [vmem:[#allocation12 + $0x28] sm:$0xff]
      %v6069 = vld [vmem:[#allocation12 + $0x30] sm:$0xff]
      %v6070 = vld [vmem:[#allocation12 + $0x38] sm:$0xff]
      %v6071 = vld [vmem:[#allocation12 + $0x40] sm:$0xff]
      %v6072 = vld [vmem:[#allocation12 + $0x48] sm:$0xff]
      %v6073 = vld [vmem:[#allocation12 + $0x50] sm:$0xff]
      %v6074 = vld [vmem:[#allocation12 + $0x58] sm:$0xff]
      %v6075 = vld [vmem:[#allocation12 + $0x60] sm:$0xff]
      %v6076 = vld [vmem:[#allocation12 + $0x68] sm:$0xff]
      %v6077 = vld [vmem:[#allocation12 + $0x70] sm:$0xff]
      %v6078 = vld [vmem:[#allocation12 + $0x78] sm:$0xff]
      %v6079 = vld [vmem:[#allocation12 + $0x80] sm:$0xff]
      %v6080 = vld [vmem:[#allocation12 + $0x88] sm:$0xff]
      %v6081 = vld [vmem:[#allocation12 + $0x90] sm:$0xff]
      %v6082 = vld [vmem:[#allocation12 + $0x98] sm:$0xff]
      %v6083 = vld [vmem:[#allocation12 + $0xa0] sm:$0xff]
      %v6084 = vld [vmem:[#allocation12 + $0xa8] sm:$0xff]
      %v6085 = vld [vmem:[#allocation12 + $0xb0] sm:$0xff]
      %v6086 = vld [vmem:[#allocation12 + $0xb8] sm:$0xff]
      %v6087 = vld [vmem:[#allocation12 + $0xc0] sm:$0xff]
      %v6088 = vld [vmem:[#allocation12 + $0xc8] sm:$0xff]
      %v6089 = vld [vmem:[#allocation12 + $0xd0] sm:$0xff]
      %v6090 = vld [vmem:[#allocation12 + $0xd8] sm:$0xff]
      %v6091 = vld [vmem:[#allocation12 + $0xe0] sm:$0xff]
      %v6092 = vld [vmem:[#allocation12 + $0xe8] sm:$0xff]
      %v6093 = vld [vmem:[#allocation12 + $0xf0] sm:$0xff]
      %v6094 = vld [vmem:[#allocation12 + $0xf8] sm:$0xff]
      %v6095 = vld [vmem:[#allocation12 + $0x100] sm:$0xff]
      %v6096 = vld [vmem:[#allocation12 + $0x108] sm:$0xff]
      %v6097 = vld [vmem:[#allocation12 + $0x110] sm:$0xff]
      %v6098 = vld [vmem:[#allocation12 + $0x118] sm:$0xff]
      %v6099 = vld [vmem:[#allocation12 + $0x120] sm:$0xff]
      %v6100 = vld [vmem:[#allocation12 + $0x128] sm:$0xff]
      %v6101 = vld [vmem:[#allocation12 + $0x130] sm:$0xff]
      %v6102 = vld [vmem:[#allocation12 + $0x138] sm:$0xff]
      %v6103 = vld [vmem:[#allocation12 + $0x140] sm:$0xff]
      %v6104 = vld [vmem:[#allocation12 + $0x148] sm:$0xff]
      %v6105 = vld [vmem:[#allocation12 + $0x150] sm:$0xff]
      %v6106 = vld [vmem:[#allocation12 + $0x158] sm:$0xff]
      %v6107 = vld [vmem:[#allocation12 + $0x160] sm:$0xff]
      %v6108 = vld [vmem:[#allocation12 + $0x168] sm:$0xff]
      %v6109 = vld [vmem:[#allocation12 + $0x170] sm:$0xff]
      %v6110 = vld [vmem:[#allocation12 + $0x178] sm:$0xff]
      %v6111 = vld [vmem:[#allocation12 + $0x180] sm:$0xff]
      %v6112 = vld [vmem:[#allocation12 + $0x188] sm:$0xff]
      %v6113 = vld [vmem:[#allocation12 + $0x190] sm:$0xff]
      %v6114 = vld [vmem:[#allocation12 + $0x198] sm:$0xff]
      %v6115 = vld [vmem:[#allocation12 + $0x1a0] sm:$0xff]
      %v6116 = vld [vmem:[#allocation12 + $0x1a8] sm:$0xff]
      %v6117 = vld [vmem:[#allocation12 + $0x1b0] sm:$0xff]
      %v6118 = vld [vmem:[#allocation12 + $0x1b8] sm:$0xff]
      %v6119 = vld [vmem:[#allocation12 + $0x1c0] sm:$0xff]
      %v6120 = vld [vmem:[#allocation12 + $0x1c8] sm:$0xff]
      %v6121 = vld [vmem:[#allocation12 + $0x1d0] sm:$0xff]
      %v6122 = vld [vmem:[#allocation12 + $0x1d8] sm:$0xff]
      %v6123 = vld [vmem:[#allocation12 + $0x1e0] sm:$0xff]
      %v6124 = vld [vmem:[#allocation12 + $0x1e8] sm:$0xff]
      %v6125 = vld [vmem:[#allocation12 + $0x1f0] sm:$0xff]
      %v6126 = vld [vmem:[#allocation12 + $0x1f8] sm:$0xff]
      %v6127 = vld [vmem:[#allocation14] sm:$0x3]
      %v6129 = vlaneseq
      %v6130 = vshrl.u32 %v6129, 7
      %v6131 = vsub.s32 0, %v6130
      %v6132 = vrot.slane %v6127, %v6131
      %v6133 = vlaneseq
      %v6134 = vshrl.u32 %v6133, 7
      %v6135 = vsub.s32 1, %v6134
      %v6136 = vrot.slane %v6127, %v6135
      %v6203 = vunpack.c.l.b16 %v6063
      %v6204 = vunpack.c.h.b16 %v6063
      %v6205 = vunpack.c.l.b16 %v6064
      %v6206 = vunpack.c.h.b16 %v6064
      %v6207 = vunpack.c.l.b16 %v6065
      %v6208 = vunpack.c.h.b16 %v6065
      %v6209 = vunpack.c.l.b16 %v6066
      %v6210 = vunpack.c.h.b16 %v6066
      %v6211 = vunpack.c.l.b16 %v6067
      %v6212 = vunpack.c.h.b16 %v6067
      %v6213 = vunpack.c.l.b16 %v6068
      %v6214 = vunpack.c.h.b16 %v6068
      %v6215 = vunpack.c.l.b16 %v6069
      %v6216 = vunpack.c.h.b16 %v6069
      %v6217 = vunpack.c.l.b16 %v6070
      %v6218 = vunpack.c.h.b16 %v6070
      %v6219 = vunpack.c.l.b16 %v6071
      %v6220 = vunpack.c.h.b16 %v6071
      %v6221 = vunpack.c.l.b16 %v6072
      %v6222 = vunpack.c.h.b16 %v6072
      %v6223 = vunpack.c.l.b16 %v6073
      %v6224 = vunpack.c.h.b16 %v6073
      %v6225 = vunpack.c.l.b16 %v6074
      %v6226 = vunpack.c.h.b16 %v6074
      %v6227 = vunpack.c.l.b16 %v6075
      %v6228 = vunpack.c.h.b16 %v6075
      %v6229 = vunpack.c.l.b16 %v6076
      %v6230 = vunpack.c.h.b16 %v6076
      %v6231 = vunpack.c.l.b16 %v6077
      %v6232 = vunpack.c.h.b16 %v6077
      %v6233 = vunpack.c.l.b16 %v6078
      %v6234 = vunpack.c.h.b16 %v6078
      %v6235 = vunpack.c.l.b16 %v6079
      %v6236 = vunpack.c.h.b16 %v6079
      %v6237 = vunpack.c.l.b16 %v6080
      %v6238 = vunpack.c.h.b16 %v6080
      %v6239 = vunpack.c.l.b16 %v6081
      %v6240 = vunpack.c.h.b16 %v6081
      %v6241 = vunpack.c.l.b16 %v6082
      %v6242 = vunpack.c.h.b16 %v6082
      %v6243 = vunpack.c.l.b16 %v6083
      %v6244 = vunpack.c.h.b16 %v6083
      %v6245 = vunpack.c.l.b16 %v6084
      %v6246 = vunpack.c.h.b16 %v6084
      %v6247 = vunpack.c.l.b16 %v6085
      %v6248 = vunpack.c.h.b16 %v6085
      %v6249 = vunpack.c.l.b16 %v6086
      %v6250 = vunpack.c.h.b16 %v6086
      %v6251 = vunpack.c.l.b16 %v6087
      %v6252 = vunpack.c.h.b16 %v6087
      %v6253 = vunpack.c.l.b16 %v6088
      %v6254 = vunpack.c.h.b16 %v6088
      %v6255 = vunpack.c.l.b16 %v6089
      %v6256 = vunpack.c.h.b16 %v6089
      %v6257 = vunpack.c.l.b16 %v6090
      %v6258 = vunpack.c.h.b16 %v6090
      %v6259 = vunpack.c.l.b16 %v6091
      %v6260 = vunpack.c.h.b16 %v6091
      %v6261 = vunpack.c.l.b16 %v6092
      %v6262 = vunpack.c.h.b16 %v6092
      %v6263 = vunpack.c.l.b16 %v6093
      %v6264 = vunpack.c.h.b16 %v6093
      %v6265 = vunpack.c.l.b16 %v6094
      %v6266 = vunpack.c.h.b16 %v6094
      %v6267 = vunpack.c.l.b16 %v6095
      %v6268 = vunpack.c.h.b16 %v6095
      %v6269 = vunpack.c.l.b16 %v6096
      %v6270 = vunpack.c.h.b16 %v6096
      %v6271 = vunpack.c.l.b16 %v6097
      %v6272 = vunpack.c.h.b16 %v6097
      %v6273 = vunpack.c.l.b16 %v6098
      %v6274 = vunpack.c.h.b16 %v6098
      %v6275 = vunpack.c.l.b16 %v6099
      %v6276 = vunpack.c.h.b16 %v6099
      %v6277 = vunpack.c.l.b16 %v6100
      %v6278 = vunpack.c.h.b16 %v6100
      %v6279 = vunpack.c.l.b16 %v6101
      %v6280 = vunpack.c.h.b16 %v6101
      %v6281 = vunpack.c.l.b16 %v6102
      %v6282 = vunpack.c.h.b16 %v6102
      %v6283 = vunpack.c.l.b16 %v6103
      %v6284 = vunpack.c.h.b16 %v6103
      %v6285 = vunpack.c.l.b16 %v6104
      %v6286 = vunpack.c.h.b16 %v6104
      %v6287 = vunpack.c.l.b16 %v6105
      %v6288 = vunpack.c.h.b16 %v6105
      %v6289 = vunpack.c.l.b16 %v6106
      %v6290 = vunpack.c.h.b16 %v6106
      %v6291 = vunpack.c.l.b16 %v6107
      %v6292 = vunpack.c.h.b16 %v6107
      %v6293 = vunpack.c.l.b16 %v6108
      %v6294 = vunpack.c.h.b16 %v6108
      %v6295 = vunpack.c.l.b16 %v6109
      %v6296 = vunpack.c.h.b16 %v6109
      %v6297 = vunpack.c.l.b16 %v6110
      %v6298 = vunpack.c.h.b16 %v6110
      %v6299 = vunpack.c.l.b16 %v6111
      %v6300 = vunpack.c.h.b16 %v6111
      %v6301 = vunpack.c.l.b16 %v6112
      %v6302 = vunpack.c.h.b16 %v6112
      %v6303 = vunpack.c.l.b16 %v6113
      %v6304 = vunpack.c.h.b16 %v6113
      %v6305 = vunpack.c.l.b16 %v6114
      %v6306 = vunpack.c.h.b16 %v6114
      %v6307 = vunpack.c.l.b16 %v6115
      %v6308 = vunpack.c.h.b16 %v6115
      %v6309 = vunpack.c.l.b16 %v6116
      %v6310 = vunpack.c.h.b16 %v6116
      %v6311 = vunpack.c.l.b16 %v6117
      %v6312 = vunpack.c.h.b16 %v6117
      %v6313 = vunpack.c.l.b16 %v6118
      %v6314 = vunpack.c.h.b16 %v6118
      %v6315 = vunpack.c.l.b16 %v6119
      %v6316 = vunpack.c.h.b16 %v6119
      %v6317 = vunpack.c.l.b16 %v6120
      %v6318 = vunpack.c.h.b16 %v6120
      %v6319 = vunpack.c.l.b16 %v6121
      %v6320 = vunpack.c.h.b16 %v6121
      %v6321 = vunpack.c.l.b16 %v6122
      %v6322 = vunpack.c.h.b16 %v6122
      %v6323 = vunpack.c.l.b16 %v6123
      %v6324 = vunpack.c.h.b16 %v6123
      %v6325 = vunpack.c.l.b16 %v6124
      %v6326 = vunpack.c.h.b16 %v6124
      %v6327 = vunpack.c.l.b16 %v6125
      %v6328 = vunpack.c.h.b16 %v6125
      %v6329 = vunpack.c.l.b16 %v6126
      %v6330 = vunpack.c.h.b16 %v6126
      %v6331 = vpack.c.b16 %v6205, %v6203
      %v6332 = vpack.c.b16 %v6206, %v6204
      %v6333 = vpack.c.b16 %v6209, %v6207
      %v6334 = vpack.c.b16 %v6210, %v6208
      %v6335 = vpack.c.b16 %v6213, %v6211
      %v6336 = vpack.c.b16 %v6214, %v6212
      %v6337 = vpack.c.b16 %v6217, %v6215
      %v6338 = vpack.c.b16 %v6218, %v6216
      %v6339 = vpack.c.b16 %v6221, %v6219
      %v6340 = vpack.c.b16 %v6222, %v6220
      %v6341 = vpack.c.b16 %v6225, %v6223
      %v6342 = vpack.c.b16 %v6226, %v6224
      %v6343 = vpack.c.b16 %v6229, %v6227
      %v6344 = vpack.c.b16 %v6230, %v6228
      %v6345 = vpack.c.b16 %v6233, %v6231
      %v6346 = vpack.c.b16 %v6234, %v6232
      %v6347 = vpack.c.b16 %v6237, %v6235
      %v6348 = vpack.c.b16 %v6238, %v6236
      %v6349 = vpack.c.b16 %v6241, %v6239
      %v6350 = vpack.c.b16 %v6242, %v6240
      %v6351 = vpack.c.b16 %v6245, %v6243
      %v6352 = vpack.c.b16 %v6246, %v6244
      %v6353 = vpack.c.b16 %v6249, %v6247
      %v6354 = vpack.c.b16 %v6250, %v6248
      %v6355 = vpack.c.b16 %v6253, %v6251
      %v6356 = vpack.c.b16 %v6254, %v6252
      %v6357 = vpack.c.b16 %v6257, %v6255
      %v6358 = vpack.c.b16 %v6258, %v6256
      %v6359 = vpack.c.b16 %v6261, %v6259
      %v6360 = vpack.c.b16 %v6262, %v6260
      %v6361 = vpack.c.b16 %v6265, %v6263
      %v6362 = vpack.c.b16 %v6266, %v6264
      %v6363 = vpack.c.b16 %v6269, %v6267
      %v6364 = vpack.c.b16 %v6270, %v6268
      %v6365 = vpack.c.b16 %v6273, %v6271
      %v6366 = vpack.c.b16 %v6274, %v6272
      %v6367 = vpack.c.b16 %v6277, %v6275
      %v6368 = vpack.c.b16 %v6278, %v6276
      %v6369 = vpack.c.b16 %v6281, %v6279
      %v6370 = vpack.c.b16 %v6282, %v6280
      %v6371 = vpack.c.b16 %v6285, %v6283
      %v6372 = vpack.c.b16 %v6286, %v6284
      %v6373 = vpack.c.b16 %v6289, %v6287
      %v6374 = vpack.c.b16 %v6290, %v6288
      %v6375 = vpack.c.b16 %v6293, %v6291
      %v6376 = vpack.c.b16 %v6294, %v6292
      %v6377 = vpack.c.b16 %v6297, %v6295
      %v6378 = vpack.c.b16 %v6298, %v6296
      %v6379 = vpack.c.b16 %v6301, %v6299
      %v6380 = vpack.c.b16 %v6302, %v6300
      %v6381 = vpack.c.b16 %v6305, %v6303
      %v6382 = vpack.c.b16 %v6306, %v6304
      %v6383 = vpack.c.b16 %v6309, %v6307
      %v6384 = vpack.c.b16 %v6310, %v6308
      %v6385 = vpack.c.b16 %v6313, %v6311
      %v6386 = vpack.c.b16 %v6314, %v6312
      %v6387 = vpack.c.b16 %v6317, %v6315
      %v6388 = vpack.c.b16 %v6318, %v6316
      %v6389 = vpack.c.b16 %v6321, %v6319
      %v6390 = vpack.c.b16 %v6322, %v6320
      %v6391 = vpack.c.b16 %v6325, %v6323
      %v6392 = vpack.c.b16 %v6326, %v6324
      %v6393 = vpack.c.b16 %v6329, %v6327
      %v6394 = vpack.c.b16 %v6330, %v6328
      %6459 = vmatprep.subr.bf16.mxu0 %v6332
      %6460 = vmatpush1.bf16.msra.mxu0 %v6331
      %6461 = vmatprep.subr.bf16.mxu0 %v6334
      %6462 = vmatpush1.bf16.msra.mxu0 %v6333
      %6463 = vmatprep.subr.bf16.mxu0 %v6336
      %6464 = vmatpush1.bf16.msra.mxu0 %v6335
      %6465 = vmatprep.subr.bf16.mxu0 %v6338
      %6466 = vmatpush1.bf16.msra.mxu0 %v6337
      %6467 = vmatprep.subr.bf16.mxu0 %v6340
      %6468 = vmatpush1.bf16.msra.mxu0 %v6339
      %6469 = vmatprep.subr.bf16.mxu0 %v6342
      %6470 = vmatpush1.bf16.msra.mxu0 %v6341
      %6471 = vmatprep.subr.bf16.mxu0 %v6344
      %6472 = vmatpush1.bf16.msra.mxu0 %v6343
      %6473 = vmatprep.subr.bf16.mxu0 %v6346
      %6474 = vmatpush1.bf16.msra.mxu0 %v6345
      %6475 = vmatprep.subr.bf16.mxu0 %v6348
      %6476 = vmatpush1.bf16.msra.mxu0 %v6347
      %6477 = vmatprep.subr.bf16.mxu0 %v6350
      %6478 = vmatpush1.bf16.msra.mxu0 %v6349
      %6479 = vmatprep.subr.bf16.mxu0 %v6352
      %6480 = vmatpush1.bf16.msra.mxu0 %v6351
      %6481 = vmatprep.subr.bf16.mxu0 %v6354
      %6482 = vmatpush1.bf16.msra.mxu0 %v6353
      %6483 = vmatprep.subr.bf16.mxu0 %v6356
      %6484 = vmatpush1.bf16.msra.mxu0 %v6355
      %6485 = vmatprep.subr.bf16.mxu0 %v6358
      %6486 = vmatpush1.bf16.msra.mxu0 %v6357
      %6487 = vmatprep.subr.bf16.mxu0 %v6360
      %6488 = vmatpush1.bf16.msra.mxu0 %v6359
      %6489 = vmatprep.subr.bf16.mxu0 %v6362
      %6490 = vmatpush1.bf16.msra.mxu0 %v6361
      %6491 = vmatprep.mubr.bf16.mxu0 %v6060
      %6492 = vmatmul.mubr.bf16.gmra.mrb[0].mxu0 %v6059
      %v6493 = vpop.f32.mrb[0].mxu0
      %v6494 = vadd.f32 %v6132, %v6493
      %v6495 = vpop.f32.mrb[0].mxu0
      %v6496 = vadd.f32 %v6136, %v6495
      %v6497 = vpop.f32.mrb[0].mxu0
      %v6498 = vadd.f32 %v6132, %v6497
      %v6499 = vpop.f32.mrb[0].mxu0
      %v6500 = vadd.f32 %v6136, %v6499
      %6501 = vdwg.mxu0
      %6502 = vmatprep.subr.bf16.mxu0 %v6364
      %6503 = vmatpush1.bf16.msra.mxu0 %v6363
      %6504 = vmatprep.subr.bf16.mxu0 %v6366
      %6505 = vmatpush1.bf16.msra.mxu0 %v6365
      %6506 = vmatprep.subr.bf16.mxu0 %v6368
      %6507 = vmatpush1.bf16.msra.mxu0 %v6367
      %6508 = vmatprep.subr.bf16.mxu0 %v6370
      %6509 = vmatpush1.bf16.msra.mxu0 %v6369
      %6510 = vmatprep.subr.bf16.mxu0 %v6372
      %6511 = vmatpush1.bf16.msra.mxu0 %v6371
      %6512 = vmatprep.subr.bf16.mxu0 %v6374
      %6513 = vmatpush1.bf16.msra.mxu0 %v6373
      %6514 = vmatprep.subr.bf16.mxu0 %v6376
      %6515 = vmatpush1.bf16.msra.mxu0 %v6375
      %6516 = vmatprep.subr.bf16.mxu0 %v6378
      %6517 = vmatpush1.bf16.msra.mxu0 %v6377
      %6518 = vmatprep.subr.bf16.mxu0 %v6380
      %6519 = vmatpush1.bf16.msra.mxu0 %v6379
      %6520 = vmatprep.subr.bf16.mxu0 %v6382
      %6521 = vmatpush1.bf16.msra.mxu0 %v6381
      %6522 = vmatprep.subr.bf16.mxu0 %v6384
      %6523 = vmatpush1.bf16.msra.mxu0 %v6383
      %6524 = vmatprep.subr.bf16.mxu0 %v6386
      %6525 = vmatpush1.bf16.msra.mxu0 %v6385
      %6526 = vmatprep.subr.bf16.mxu0 %v6388
      %6527 = vmatpush1.bf16.msra.mxu0 %v6387
      %6528 = vmatprep.subr.bf16.mxu0 %v6390
      %6529 = vmatpush1.bf16.msra.mxu0 %v6389
      %6530 = vmatprep.subr.bf16.mxu0 %v6392
      %6531 = vmatpush1.bf16.msra.mxu0 %v6391
      %6532 = vmatprep.subr.bf16.mxu0 %v6394
      %6533 = vmatpush1.bf16.msra.mxu0 %v6393
      %6534 = vmatprep.mubr.bf16.mxu0 %v6062
      %6535 = vmatmul.mubr.bf16.gmra.mrb[0].mxu0 %v6061
      %v6536 = vpop.f32.mrb[0].mxu0
      %v6537 = vadd.f32 %v6494, %v6536
      %v6538 = vpop.f32.mrb[0].mxu0
      %v6539 = vadd.f32 %v6496, %v6538
      %v6540 = vpop.f32.mrb[0].mxu0
      %v6541 = vadd.f32 %v6498, %v6540
      %v6542 = vpop.f32.mrb[0].mxu0
      %v6543 = vadd.f32 %v6500, %v6542
      %6544 = vdwg.mxu0
      %vm6545 = vcmp.gt.f32.partialorder %v6537, 0.0
      %vm6546 = vcmp.gt.f32.partialorder %v6539, 0.0
      %vm6547 = vcmp.gt.f32.partialorder %v6541, 0.0
      %vm6548 = vcmp.gt.f32.partialorder %v6543, 0.0
      %v6549 = vmul.f32 %v6537, 0.2
      %v6550 = vmul.f32 %v6539, 0.2
      %v6551 = vmul.f32 %v6541, 0.2
      %v6552 = vmul.f32 %v6543, 0.2
      %v6553 = vsel %vm6545, %v6537, %v6549
      %v6554 = vsel %vm6546, %v6539, %v6550
      %v6555 = vsel %vm6547, %v6541, %v6551
      %v6556 = vsel %vm6548, %v6543, %v6552
      %v6557 = vpack.c.bf16 %v6555, %v6553
      %v6558 = vpack.c.bf16 %v6556, %v6554
      %v6559 = vld [vmem:[#allocation15] sm:$0xf]
      %v6560 = vld [vmem:[#allocation15 + $0x4] sm:$0xf]
      %v6561 = vld [vmem:[#allocation15 + $0x8] sm:$0xf]
      %v6562 = vld [vmem:[#allocation15 + $0xc] sm:$0xf]
      %v6563 = vld [vmem:[#allocation15 + $0x10] sm:$0xf]
      %v6564 = vld [vmem:[#allocation15 + $0x14] sm:$0xf]
      %v6565 = vld [vmem:[#allocation15 + $0x18] sm:$0xf]
      %v6566 = vld [vmem:[#allocation15 + $0x1c] sm:$0xf]
      %v6567 = vld [vmem:[#allocation15 + $0x20] sm:$0xf]
      %v6568 = vld [vmem:[#allocation15 + $0x24] sm:$0xf]
      %v6569 = vld [vmem:[#allocation15 + $0x28] sm:$0xf]
      %v6570 = vld [vmem:[#allocation15 + $0x2c] sm:$0xf]
      %v6571 = vld [vmem:[#allocation15 + $0x30] sm:$0xf]
      %v6572 = vld [vmem:[#allocation15 + $0x34] sm:$0xf]
      %v6573 = vld [vmem:[#allocation15 + $0x38] sm:$0xf]
      %v6574 = vld [vmem:[#allocation15 + $0x3c] sm:$0xf]
      %v6575 = vld [vmem:[#allocation15 + $0x40] sm:$0xf]
      %v6576 = vld [vmem:[#allocation15 + $0x44] sm:$0xf]
      %v6577 = vld [vmem:[#allocation15 + $0x48] sm:$0xf]
      %v6578 = vld [vmem:[#allocation15 + $0x4c] sm:$0xf]
      %v6579 = vld [vmem:[#allocation15 + $0x50] sm:$0xf]
      %v6580 = vld [vmem:[#allocation15 + $0x54] sm:$0xf]
      %v6581 = vld [vmem:[#allocation15 + $0x58] sm:$0xf]
      %v6582 = vld [vmem:[#allocation15 + $0x5c] sm:$0xf]
      %v6583 = vld [vmem:[#allocation15 + $0x60] sm:$0xf]
      %v6584 = vld [vmem:[#allocation15 + $0x64] sm:$0xf]
      %v6585 = vld [vmem:[#allocation15 + $0x68] sm:$0xf]
      %v6586 = vld [vmem:[#allocation15 + $0x6c] sm:$0xf]
      %v6587 = vld [vmem:[#allocation15 + $0x70] sm:$0xf]
      %v6588 = vld [vmem:[#allocation15 + $0x74] sm:$0xf]
      %v6589 = vld [vmem:[#allocation15 + $0x78] sm:$0xf]
      %v6590 = vld [vmem:[#allocation15 + $0x7c] sm:$0xf]
      %v6591 = vld [vmem:[#allocation17] sm:$0x1]
      %v6593 = vlaneseq
      %v6594 = vshrl.u32 %v6593, 7
      %v6595 = vsub.s32 0, %v6594
      %v6596 = vrot.slane %v6591, %v6595
      %v6630 = vunpack.c.l.b16 %v6559
      %v6631 = vunpack.c.l.b16 %v6560
      %v6632 = vunpack.c.l.b16 %v6561
      %v6633 = vunpack.c.l.b16 %v6562
      %v6634 = vunpack.c.l.b16 %v6563
      %v6635 = vunpack.c.l.b16 %v6564
      %v6636 = vunpack.c.l.b16 %v6565
      %v6637 = vunpack.c.l.b16 %v6566
      %v6638 = vunpack.c.l.b16 %v6567
      %v6639 = vunpack.c.l.b16 %v6568
      %v6640 = vunpack.c.l.b16 %v6569
      %v6641 = vunpack.c.l.b16 %v6570
      %v6642 = vunpack.c.l.b16 %v6571
      %v6643 = vunpack.c.l.b16 %v6572
      %v6644 = vunpack.c.l.b16 %v6573
      %v6645 = vunpack.c.l.b16 %v6574
      %v6646 = vunpack.c.l.b16 %v6575
      %v6647 = vunpack.c.l.b16 %v6576
      %v6648 = vunpack.c.l.b16 %v6577
      %v6649 = vunpack.c.l.b16 %v6578
      %v6650 = vunpack.c.l.b16 %v6579
      %v6651 = vunpack.c.l.b16 %v6580
      %v6652 = vunpack.c.l.b16 %v6581
      %v6653 = vunpack.c.l.b16 %v6582
      %v6654 = vunpack.c.l.b16 %v6583
      %v6655 = vunpack.c.l.b16 %v6584
      %v6656 = vunpack.c.l.b16 %v6585
      %v6657 = vunpack.c.l.b16 %v6586
      %v6658 = vunpack.c.l.b16 %v6587
      %v6659 = vunpack.c.l.b16 %v6588
      %v6660 = vunpack.c.l.b16 %v6589
      %v6661 = vunpack.c.l.b16 %v6590
      %v6662 = vpack.c.b16 %v6631, %v6630
      %v6663 = vpack.c.b16 %v6633, %v6632
      %v6664 = vpack.c.b16 %v6635, %v6634
      %v6665 = vpack.c.b16 %v6637, %v6636
      %v6666 = vpack.c.b16 %v6639, %v6638
      %v6667 = vpack.c.b16 %v6641, %v6640
      %v6668 = vpack.c.b16 %v6643, %v6642
      %v6669 = vpack.c.b16 %v6645, %v6644
      %v6670 = vpack.c.b16 %v6647, %v6646
      %v6671 = vpack.c.b16 %v6649, %v6648
      %v6672 = vpack.c.b16 %v6651, %v6650
      %v6673 = vpack.c.b16 %v6653, %v6652
      %v6674 = vpack.c.b16 %v6655, %v6654
      %v6675 = vpack.c.b16 %v6657, %v6656
      %v6676 = vpack.c.b16 %v6659, %v6658
      %v6677 = vpack.c.b16 %v6661, %v6660
      %6694 = vmatprep.subr.bf16.mxu0 0
      %6695 = vmatpush1.bf16.msra.mxu0 %v6662
      %6696 = vmatprep.subr.bf16.mxu0 0
      %6697 = vmatpush1.bf16.msra.mxu0 %v6663
      %6698 = vmatprep.subr.bf16.mxu0 0
      %6699 = vmatpush1.bf16.msra.mxu0 %v6664
      %6700 = vmatprep.subr.bf16.mxu0 0
      %6701 = vmatpush1.bf16.msra.mxu0 %v6665
      %6702 = vmatprep.subr.bf16.mxu0 0
      %6703 = vmatpush1.bf16.msra.mxu0 %v6666
      %6704 = vmatprep.subr.bf16.mxu0 0
      %6705 = vmatpush1.bf16.msra.mxu0 %v6667
      %6706 = vmatprep.subr.bf16.mxu0 0
      %6707 = vmatpush1.bf16.msra.mxu0 %v6668
      %6708 = vmatprep.subr.bf16.mxu0 0
      %6709 = vmatpush1.bf16.msra.mxu0 %v6669
      %6710 = vmatprep.subr.bf16.mxu0 0
      %6711 = vmatpush1.bf16.msra.mxu0 %v6670
      %6712 = vmatprep.subr.bf16.mxu0 0
      %6713 = vmatpush1.bf16.msra.mxu0 %v6671
      %6714 = vmatprep.subr.bf16.mxu0 0
      %6715 = vmatpush1.bf16.msra.mxu0 %v6672
      %6716 = vmatprep.subr.bf16.mxu0 0
      %6717 = vmatpush1.bf16.msra.mxu0 %v6673
      %6718 = vmatprep.subr.bf16.mxu0 0
      %6719 = vmatpush1.bf16.msra.mxu0 %v6674
      %6720 = vmatprep.subr.bf16.mxu0 0
      %6721 = vmatpush1.bf16.msra.mxu0 %v6675
      %6722 = vmatprep.subr.bf16.mxu0 0
      %6723 = vmatpush1.bf16.msra.mxu0 %v6676
      %6724 = vmatprep.subr.bf16.mxu0 0
      %6725 = vmatpush1.bf16.msra.mxu0 %v6677
      %6726 = vmatprep.mubr.bf16.mxu0 %v6558
      %6727 = vmatmul.mubr.bf16.gmra.mrb[0].mxu0 %v6557
      %v6728 = vpop.f32.mrb[0].mxu0
      %v6729 = vadd.f32 %v6596, %v6728
      %v6730 = vpop.f32.mrb[0].mxu0
      %v6731 = vpop.f32.mrb[0].mxu0
      %v6732 = vadd.f32 %v6596, %v6731
      %v6733 = vpop.f32.mrb[0].mxu0
      %6734 = vdwg.mxu0
      %v6735 = vxor.u32 %v6729, 2147483648
      %v6736 = vxor.u32 %v6732, 2147483648
      %v6737 = vmul.f32 %v6735, 1.442695
      %v6738 = vpow.pop %v6737
      %v6739 = vmul.f32 %v6736, 1.442695
      %v6740 = vpow.pop %v6739
      %v6741 = vadd.f32 %v6738, 1.0
      %v6742 = vadd.f32 %v6740, 1.0
      %v6743 = vrcp.pop %v6741
      %v6744 = vmul.f32 1.0, %v6743
      %v6745 = vrcp.pop %v6742
      %v6746 = vmul.f32 1.0, %v6745
      %v6747 = vpack.c.bf16 %v6746, %v6744
      %v6749 = vunpack.c.l.b16 %v6747
      %v6750 = vunpack.c.h.b16 %v6747
      %v6751 = vpack.c.b16 %v6749, %v6749
      %v6752 = vpack.c.b16 %v6750, %v6750
      %6755 = vst [vmem:[#allocation18] sm:$0xf] %v6751
      %6756 = vst [vmem:[#allocation18 + $0x4] sm:$0xf] %v6752
    $region81: #{tpu_custom_call.1} parent=1 // pred_fallthru
      _
    // Predicated region
    $region82: #{tpu_custom_call.1} parent=1 // pred_check
      _
    $region83: #{tpu_custom_call.1} parent=1 // pred_check_branch
      %6758 = sbr.rel (0) target = $region85
    $region84: #{tpu_custom_call.1} parent=1 // pred_region
      %s6760 = ssub.s32 128, 128
      %6761 = vsyncadd [#allocation5], %s6760
      %s6762 = sshll.u32 [#allocation18], 4
      %s6763 = int_to_ptr.vmem [resolvable:$true] %s6762
      %6768 = dma.vmem_to_hbm [thread:$0]  %s6763, 128, %s9, [#allocation5], 64, 64, 4
    $region85: #{tpu_custom_call.1} parent=1 // pred_fallthru
      _
    // Predicated region
    $region86: #{tpu_custom_call.1} parent=1 // pred_check
      _
    $region87: #{tpu_custom_call.1} parent=1 // pred_check_branch
      %6770 = sbr.rel (0) target = $region89
    $region88: #{tpu_custom_call.1} parent=1 // pred_region
      %6771 = dma.done [#allocation5], 128
    $region89: #{tpu_custom_call.1} parent=1 // pred_fallthru
      _
    %6772 = vsyncpa [#allocation4], 1
    %6773 = vsyncpa [#allocation7], 1
    %6774 = vsyncpa [#allocation10], 1
    %6775 = vsyncpa [#allocation13], 1
    %6776 = vsyncpa [#allocation16], 1
    %6777 = vsyncpa [#allocation5], 1

</llo_original>
